<compile_context>
chip_gen: v5e
topology: v5e:2x2
jax: 0.10.0
libtpu: 0.0.40
codegen_flags: <defaults>
</compile_context>

<pallas_src>
import functools
import math

import jax
import jax.numpy as jnp
from jax.experimental import pallas as pl
from jax.experimental.pallas import tpu as pltpu

LN_EPS = 1e-5   # PyTorch nn.LayerNorm default
LANE = 128      # TPU lane width


# ------------------------------ shared math -------------------------------- #

def _layernorm(x, gamma, beta):
    mu = jnp.mean(x, axis=-1, keepdims=True)
    var = jnp.mean((x - mu) ** 2, axis=-1, keepdims=True)
    return (x - mu) * jax.lax.rsqrt(var + LN_EPS) * gamma + beta


# ------------------------------ fused kernel ------------------------------- #

def fused_encoder_kernel(layer_specs, out_spec, n_heads, x_ref, vec_ref, *rest):
    """Whole encoder forward for one batch element (one grid step).

    x_ref:   (S, D)     f32 activations (VMEM resident).
    vec_ref: (NV, VPAD) all 1-D params (biases / LN gamma,beta) in one array.
    rest = (*weight_refs, o_ref); o_ref is the lane-dense (S, OUT_PAD) tile.
    """
    w_refs = rest[:-1]
    o_ref = rest[-1]

    S, D = x_ref.shape
    dh = D // n_heads
    scale = 1.0 / math.sqrt(dh)

    V = vec_ref[...]                                   # single load; slice below

    def vec(rw):
        row, width = rw
        return V[row:row + 1, :width]                  # (1, width) static slice

    def mm(a, b):
        # Launch/DMA-latency bound at these shapes -> keep f32 dots, no
        # per-use bf16 pack/cast on the VPU.
        return jnp.dot(a, b, preferred_element_type=jnp.float32)

    x = x_ref[...]                                     # (S, D) f32

    widx = 0
    for spec in layer_specs:
        if spec[0] == 'a':
            _, (rq, rk, rv, ro, rg, rb) = spec
            wqkv = w_refs[widx][...]                   # (3, D, D), one DMA
            wo = w_refs[widx + 1][...]                 # (D, D)
            widx += 2

            # Leading-axis split of the packed QKV weight: three D x D
            # matmuls, no lane-offset extraction at D < 128.
            q = (mm(x, wqkv[0]) + vec(rq)) * scale     # fold 1/sqrt(dh) into q
            k = mm(x, wqkv[1]) + vec(rk)
            v = mm(x, wqkv[2]) + vec(rv)

            # All heads in one batched einsum pair (no per-head unroll).
            # TODO(synk): create_attn_mask() is abstract in the base class;
            # full (unmasked) self-attention is used here.
            qh = q.reshape(S, n_heads, dh)
            kh = k.reshape(S, n_heads, dh)
            vh = v.reshape(S, n_heads, dh)
            s = jnp.einsum('qhd,khd->hqk', qh, kh,
                           preferred_element_type=jnp.float32)      # (H, S, S)
            s = s - jnp.max(s, axis=-1, keepdims=True)
            p = jnp.exp(s)
            p = p / jnp.sum(p, axis=-1, keepdims=True)               # exact
            ctx = jnp.einsum('hqk,khd->qhd', p, vh,
                             preferred_element_type=jnp.float32)     # (S, H, dh)

            # Single full-width output projection (== concat-then-project).
            attn = mm(ctx.reshape(S, D), wo) + vec(ro)
            x = _layernorm(x + attn, vec(rg), vec(rb))

        else:  # 'f': MLP + residual + LayerNorm
            _, lin_specs, rg, rb = spec
            n_lin = len(lin_specs)
            y = x
            for j, rbias in enumerate(lin_specs):
                w = w_refs[widx][...]
                widx += 1
                y = mm(y, w) + vec(rbias)
                if j < n_lin - 1:
                    # TODO(synk): MLP class not shown in the spec; ReLU assumed.
                    y = jnp.maximum(y, 0.0)
            x = _layernorm(x + y, vec(rg), vec(rb))

    # Final nn.Linear into a lane-dense (128-padded) output tile.
    w_out = w_refs[widx][...]
    o_ref[...] = mm(x, w_out) + vec(out_spec)


# ----------------------------- pallas_call glue ----------------------------- #

def transformer_encoder_forward(x, layer_params, out_params, n_heads):
    """Mirrors BaseTransformerEncoder.forward (x is already embedded)."""
    B, S, D = x.shape
    out_pad = out_params['w_pad'].shape[1]

    weights = []
    vec_rows = []

    def addv(v):
        flat = jnp.asarray(v, jnp.float32).reshape(-1)
        vec_rows.append(flat)
        return (len(vec_rows) - 1, flat.shape[0])

    layer_specs = []
    for p in layer_params:
        if p['type'] == 'a':
            weights += [p['wqkv'], p['wo']]
            layer_specs.append(
                ('a', (addv(p['bq']), addv(p['bk']), addv(p['bv']),
                       addv(p['bo']), addv(p['g']), addv(p['b']))))
        else:
            lin = []
            for w, b in zip(p['ws'], p['bs']):
                weights.append(w)
                lin.append(addv(b))
            layer_specs.append(('f', tuple(lin), addv(p['g']), addv(p['b'])))
    weights.append(out_params['w_pad'])
    out_spec = addv(out_params['b_pad'])

    # Pack every small 1-D parameter into ONE (NV, VPAD) array => one DMA.
    maxw = max(v.shape[0] for v in vec_rows)
    vpad = max(LANE, -(-maxw // LANE) * LANE)
    vec_arr = jnp.stack([jnp.pad(v, (0, vpad - v.shape[0])) for v in vec_rows])

    def full_spec(shape):
        nd = len(shape)
        return pl.BlockSpec(shape, lambda b, _nd=nd: (0,) * _nd)

    kernel = functools.partial(fused_encoder_kernel, tuple(layer_specs),
                               out_spec, n_heads)

    y = pl.pallas_call(
        kernel,
        grid=(B,),                                 # shards across TCs on v7x
        in_specs=[pl.BlockSpec((None, S, D), lambda b: (b, 0, 0)),   # x
                  full_spec(vec_arr.shape)]                           # packed vecs
                 + [full_spec(w.shape) for w in weights],             # weights
        out_specs=pl.BlockSpec((None, S, out_pad), lambda b: (b, 0, 0)),
        out_shape=jax.ShapeDtypeStruct((B, S, out_pad), jnp.float32),
        compiler_params=pltpu.CompilerParams(
            dimension_semantics=("parallel",)),
    )(x, vec_arr, *weights)

    return y[:, :, :out_params['out_dim']]


# ------------------------------ parameter init ------------------------------ #

def init_params(key, architecture, embed_dim, n_heads, mlp_dim, out_dim):
    def normal(k, shape, s=0.02):
        return s * jax.random.normal(k, shape, jnp.float32)

    params = []
    for layer in architecture.split('.'):
        if layer == 'a':
            key, kq, kk, kv, ko, kb, kg = jax.random.split(key, 7)
            bq, bk, bv, bo = jnp.split(normal(kb, (4 * embed_dim,)), 4)
            p = {
                'type': 'a',
                'wqkv': jnp.stack([normal(kq, (embed_dim, embed_dim)),
                                   normal(kk, (embed_dim, embed_dim)),
                                   normal(kv, (embed_dim, embed_dim))]),
                'bq': bq, 'bk': bk, 'bv': bv,
                'wo': normal(ko, (embed_dim, embed_dim)),
                'bo': bo,
                'g': 1.0 + normal(kg, (embed_dim,), 0.1),
                'b': normal(kg, (embed_dim,), 0.1),
            }
        elif layer[0] == 'f':
            n_hidden = len(layer)          # hidden_dim = [mlp_dim] * len(layer)
            dims = [embed_dim] + [mlp_dim] * n_hidden + [embed_dim]
            ws, bs = [], []
            for i in range(len(dims) - 1):
                key, kw, kb = jax.random.split(key, 3)
                ws.append(normal(kw, (dims[i], dims[i + 1])))
                bs.append(normal(kb, (dims[i + 1],)))
            key, kg = jax.random.split(key)
            p = {'type': 'f', 'ws': ws, 'bs': bs,
                 'g': 1.0 + normal(kg, (embed_dim,), 0.1),
                 'b': normal(kg, (embed_dim,), 0.1)}
        else:
            raise NotImplementedError('unknown encoder layer indicator')
        params.append(p)

    key, ko, kb = jax.random.split(key, 3)
    w = normal(ko, (embed_dim, out_dim))
    b = normal(kb, (out_dim,))
    out_pad = max(LANE, -(-out_dim // LANE) * LANE)
    w_pad = jnp.zeros((embed_dim, out_pad), jnp.float32).at[:, :out_dim].set(w)
    b_pad = jnp.zeros((out_pad,), jnp.float32).at[:out_dim].set(b)
    return params, {'w_pad': w_pad, 'b_pad': b_pad, 'out_dim': out_dim}


# ------------------------------ f32 reference ------------------------------- #

def reference_forward(x, layer_params, out_params, n_heads):
    B, S, D = x.shape
    dh = D // n_heads
    h = x
    for p in layer_params:
        if p['type'] == 'a':
            q = h @ p['wqkv'][0] + p['bq']
            k = h @ p['wqkv'][1] + p['bk']
            v = h @ p['wqkv'][2] + p['bv']
            q = q.reshape(B, S, n_heads, dh)
            k = k.reshape(B, S, n_heads, dh)
            v = v.reshape(B, S, n_heads, dh)
            s = jnp.einsum('bqhd,bkhd->bhqk', q, k) / math.sqrt(dh)
            a = jax.nn.softmax(s, axis=-1)
            ctx = jnp.einsum('bhqk,bkhd->bqhd', a, v).reshape(B, S, D)
            h = _layernorm(h + ctx @ p['wo'] + p['bo'], p['g'], p['b'])
        else:
            y = h
            for w, b in zip(p['ws'][:-1], p['bs'][:-1]):
                y = jnp.maximum(y @ w + b, 0.0)
            y = y @ p['ws'][-1] + p['bs'][-1]
            h = _layernorm(h + y, p['g'], p['b'])
    out = h @ out_params['w_pad'] + out_params['b_pad']
    return out[:, :, :out_params['out_dim']]


# ----------------------------------- main ----------------------------------- #

if __name__ == "__main__":
    B, S = 2, 8
    EMBED_DIM, N_HEADS, MLP_DIM, OUT_DIM = 32, 4, 64, 8
    ARCHITECTURE = 'a.f.a.f'   # 2-layer transformer encoder

    key = jax.random.PRNGKey(0)
    key, kx = jax.random.split(key)
    # stand-in for the abstract input_embed(batch): (bsz, seq_len, embed_dim)
    x = jax.random.normal(kx, (B, S, EMBED_DIM), jnp.float32)

    layer_params, out_params = init_params(
        key, ARCHITECTURE, EMBED_DIM, N_HEADS, MLP_DIM, OUT_DIM)

    y = transformer_encoder_forward(x, layer_params, out_params, N_HEADS)
    y = jax.block_until_ready(y)
    assert y.shape == (B, S, OUT_DIM) and y.dtype == jnp.float32

    y_ref = reference_forward(x, layer_params, out_params, N_HEADS)
    max_err = float(jnp.max(jnp.abs(y - y_ref)))
    assert max_err < 1e-3, f"kernel/reference mismatch: max abs err {max_err}"
    print("KERNEL_OK")
</pallas_src>

<mosaic_0001>
module attributes {stable_mosaic.version = 11 : i64} {
  func.func @fused_encoder_kernel(%arg0: i32, %arg1: memref<1x8x32xf32, #tpu.memory_space<vmem>>, %arg2: memref<21x128xf32, #tpu.memory_space<vmem>>, %arg3: memref<3x32x32xf32, #tpu.memory_space<vmem>>, %arg4: memref<32x32xf32, #tpu.memory_space<vmem>>, %arg5: memref<32x64xf32, #tpu.memory_space<vmem>>, %arg6: memref<64x32xf32, #tpu.memory_space<vmem>>, %arg7: memref<3x32x32xf32, #tpu.memory_space<vmem>>, %arg8: memref<32x32xf32, #tpu.memory_space<vmem>>, %arg9: memref<32x64xf32, #tpu.memory_space<vmem>>, %arg10: memref<64x32xf32, #tpu.memory_space<vmem>>, %arg11: memref<32x128xf32, #tpu.memory_space<vmem>>, %arg12: memref<1x8x128xf32, #tpu.memory_space<vmem>>) attributes {dimension_semantics = [#tpu.dimension_semantics<parallel>], iteration_bounds = array<i64: 2>, scalar_prefetch = 0 : i64, scratch_operands = 0 : i64, tpu.core_type = #tpu.core_type<tc>, window_params = [{transform_indices = @transform_0, window_bounds = array<i64: 1, 8, 32>}, {pipeline_mode = #tpu.pipeline_mode<synchronous>, transform_indices = @transform_1, window_bounds = array<i64: 21, 128>}, {pipeline_mode = #tpu.pipeline_mode<synchronous>, transform_indices = @transform_2, window_bounds = array<i64: 3, 32, 32>}, {pipeline_mode = #tpu.pipeline_mode<synchronous>, transform_indices = @transform_3, window_bounds = array<i64: 32, 32>}, {pipeline_mode = #tpu.pipeline_mode<synchronous>, transform_indices = @transform_4, window_bounds = array<i64: 32, 64>}, {pipeline_mode = #tpu.pipeline_mode<synchronous>, transform_indices = @transform_5, window_bounds = array<i64: 64, 32>}, {pipeline_mode = #tpu.pipeline_mode<synchronous>, transform_indices = @transform_6, window_bounds = array<i64: 3, 32, 32>}, {pipeline_mode = #tpu.pipeline_mode<synchronous>, transform_indices = @transform_7, window_bounds = array<i64: 32, 32>}, {pipeline_mode = #tpu.pipeline_mode<synchronous>, transform_indices = @transform_8, window_bounds = array<i64: 32, 64>}, {pipeline_mode = #tpu.pipeline_mode<synchronous>, transform_indices = @transform_9, window_bounds = array<i64: 64, 32>}, {pipeline_mode = #tpu.pipeline_mode<synchronous>, transform_indices = @transform_10, window_bounds = array<i64: 32, 128>}, {transform_indices = @transform_11, window_bounds = array<i64: 1, 8, 128>}]} {
    %c0 = arith.constant 0 : index
    %c0_0 = arith.constant 0 : index
    %0 = vector.load %arg2[%c0, %c0_0] : memref<21x128xf32, #tpu.memory_space<vmem>>, vector<21x128xf32>
    %c0_1 = arith.constant 0 : index
    %c0_2 = arith.constant 0 : index
    %c0_3 = arith.constant 0 : index
    %1 = vector.load %arg1[%c0_1, %c0_2, %c0_3] : memref<1x8x32xf32, #tpu.memory_space<vmem>>, vector<1x8x32xf32>
    %2 = vector.shape_cast %1 : vector<1x8x32xf32> to vector<8x32xf32>
    %c0_4 = arith.constant 0 : index
    %c0_5 = arith.constant 0 : index
    %c0_6 = arith.constant 0 : index
    %3 = vector.load %arg3[%c0_4, %c0_5, %c0_6] : memref<3x32x32xf32, #tpu.memory_space<vmem>>, vector<3x32x32xf32>
    %c0_7 = arith.constant 0 : index
    %c0_8 = arith.constant 0 : index
    %4 = vector.load %arg4[%c0_7, %c0_8] : memref<32x32xf32, #tpu.memory_space<vmem>>, vector<32x32xf32>
    %5 = vector.extract_strided_slice %3 {offsets = [0, 0, 0], sizes = [1, 32, 32], strides = [1, 1, 1]} : vector<3x32x32xf32> to vector<1x32x32xf32>
    %6 = vector.shape_cast %5 : vector<1x32x32xf32> to vector<32x32xf32>
    %cst = arith.constant dense<0.000000e+00> : vector<8x32xf32>
    %7 = tpu.matmul %2, %6, %cst {dimension_numbers = #tpu.dot_dimension_numbers<[1], [0], [0], [1], [0, 0, 1, 1], [], []>} : vector<8x32xf32>, vector<32x32xf32>, vector<8x32xf32> -> vector<8x32xf32>
    %8 = vector.extract_strided_slice %0 {offsets = [0, 0], sizes = [1, 32], strides = [1, 1]} : vector<21x128xf32> to vector<1x32xf32>
    %9 = vector.broadcast %8 : vector<1x32xf32> to vector<8x32xf32>
    %10 = arith.addf %7, %9 : vector<8x32xf32>
    %cst_9 = arith.constant 0.353553385 : f32
    %11 = vector.broadcast %cst_9 : f32 to vector<8x32xf32>
    %12 = arith.mulf %10, %11 : vector<8x32xf32>
    %13 = vector.extract_strided_slice %3 {offsets = [1, 0, 0], sizes = [1, 32, 32], strides = [1, 1, 1]} : vector<3x32x32xf32> to vector<1x32x32xf32>
    %14 = vector.shape_cast %13 : vector<1x32x32xf32> to vector<32x32xf32>
    %cst_10 = arith.constant dense<0.000000e+00> : vector<8x32xf32>
    %15 = tpu.matmul %2, %14, %cst_10 {dimension_numbers = #tpu.dot_dimension_numbers<[1], [0], [0], [1], [0, 0, 1, 1], [], []>} : vector<8x32xf32>, vector<32x32xf32>, vector<8x32xf32> -> vector<8x32xf32>
    %16 = vector.extract_strided_slice %0 {offsets = [1, 0], sizes = [1, 32], strides = [1, 1]} : vector<21x128xf32> to vector<1x32xf32>
    %17 = vector.broadcast %16 : vector<1x32xf32> to vector<8x32xf32>
    %18 = arith.addf %15, %17 : vector<8x32xf32>
    %19 = vector.extract_strided_slice %3 {offsets = [2, 0, 0], sizes = [1, 32, 32], strides = [1, 1, 1]} : vector<3x32x32xf32> to vector<1x32x32xf32>
    %20 = vector.shape_cast %19 : vector<1x32x32xf32> to vector<32x32xf32>
    %cst_11 = arith.constant dense<0.000000e+00> : vector<8x32xf32>
    %21 = tpu.matmul %2, %20, %cst_11 {dimension_numbers = #tpu.dot_dimension_numbers<[1], [0], [0], [1], [0, 0, 1, 1], [], []>} : vector<8x32xf32>, vector<32x32xf32>, vector<8x32xf32> -> vector<8x32xf32>
    %22 = vector.extract_strided_slice %0 {offsets = [2, 0], sizes = [1, 32], strides = [1, 1]} : vector<21x128xf32> to vector<1x32xf32>
    %23 = vector.broadcast %22 : vector<1x32xf32> to vector<8x32xf32>
    %24 = arith.addf %21, %23 : vector<8x32xf32>
    %25 = vector.shape_cast %12 : vector<8x32xf32> to vector<8x4x8xf32>
    %26 = vector.shape_cast %18 : vector<8x32xf32> to vector<8x4x8xf32>
    %27 = vector.shape_cast %24 : vector<8x32xf32> to vector<8x4x8xf32>
    "tpu.trace_start"() <{level = 10 : i32, message = "qhd,khd->hqk"}> : () -> ()
    %cst_12 = arith.constant dense<0.000000e+00> : vector<4x8x8xf32>
    %28 = tpu.matmul %25, %26, %cst_12 {dimension_numbers = #tpu.dot_dimension_numbers<[2], [2], [0], [0], [0, 1, 0, 0, 1, 0], [1], [1]>} : vector<8x4x8xf32>, vector<8x4x8xf32>, vector<4x8x8xf32> -> vector<4x8x8xf32>
    "tpu.trace_stop"() : () -> ()
    %cst_13 = arith.constant dense<0xFF800000> : vector<4x8xf32>
    %29 = vector.multi_reduction <maximumf>, %28, %cst_13 [2] : vector<4x8x8xf32> to vector<4x8xf32>
    %30 = vector.shape_cast %29 : vector<4x8xf32> to vector<4x8x1xf32>
    %31 = vector.broadcast %30 : vector<4x8x1xf32> to vector<4x8x8xf32>
    %32 = arith.subf %28, %31 : vector<4x8x8xf32>
    %33 = math.exp %32 : vector<4x8x8xf32>
    %cst_14 = arith.constant dense<0.000000e+00> : vector<4x8xf32>
    %34 = vector.multi_reduction <add>, %33, %cst_14 [2] : vector<4x8x8xf32> to vector<4x8xf32>
    %35 = vector.shape_cast %34 : vector<4x8xf32> to vector<4x8x1xf32>
    %36 = vector.broadcast %35 : vector<4x8x1xf32> to vector<4x8x8xf32>
    %37 = arith.divf %33, %36 : vector<4x8x8xf32>
    "tpu.trace_start"() <{level = 10 : i32, message = "hqk,khd->qhd"}> : () -> ()
    %cst_15 = arith.constant dense<0.000000e+00> : vector<4x8x8xf32>
    %38 = tpu.matmul %27, %37, %cst_15 {dimension_numbers = #tpu.dot_dimension_numbers<[0], [2], [2], [1], [0, 1, 0, 2, 1, 1], [1], [0]>} : vector<8x4x8xf32>, vector<4x8x8xf32>, vector<4x8x8xf32> -> vector<4x8x8xf32>
    %39 = tpu.transpose %38, [2, 0, 1] : vector<4x8x8xf32> -> vector<8x4x8xf32>
    "tpu.trace_stop"() : () -> ()
    %40 = vector.shape_cast %39 : vector<8x4x8xf32> to vector<8x32xf32>
    %cst_16 = arith.constant dense<0.000000e+00> : vector<8x32xf32>
    %41 = tpu.matmul %40, %4, %cst_16 {dimension_numbers = #tpu.dot_dimension_numbers<[1], [0], [0], [1], [0, 0, 1, 1], [], []>} : vector<8x32xf32>, vector<32x32xf32>, vector<8x32xf32> -> vector<8x32xf32>
    %42 = vector.extract_strided_slice %0 {offsets = [3, 0], sizes = [1, 32], strides = [1, 1]} : vector<21x128xf32> to vector<1x32xf32>
    %43 = vector.broadcast %42 : vector<1x32xf32> to vector<8x32xf32>
    %44 = arith.addf %41, %43 : vector<8x32xf32>
    %45 = arith.addf %2, %44 : vector<8x32xf32>
    %46 = vector.extract_strided_slice %0 {offsets = [4, 0], sizes = [1, 32], strides = [1, 1]} : vector<21x128xf32> to vector<1x32xf32>
    %47 = vector.extract_strided_slice %0 {offsets = [5, 0], sizes = [1, 32], strides = [1, 1]} : vector<21x128xf32> to vector<1x32xf32>
    %cst_17 = arith.constant dense<0.000000e+00> : vector<8xf32>
    %48 = vector.multi_reduction <add>, %45, %cst_17 [1] : vector<8x32xf32> to vector<8xf32>
    %49 = vector.shape_cast %48 : vector<8xf32> to vector<8x1xf32>
    %cst_18 = arith.constant 3.200000e+01 : f32
    %50 = vector.broadcast %cst_18 : f32 to vector<8x1xf32>
    %51 = arith.divf %49, %50 : vector<8x1xf32>
    %52 = vector.broadcast %51 : vector<8x1xf32> to vector<8x32xf32>
    %53 = arith.subf %45, %52 : vector<8x32xf32>
    %54 = arith.mulf %53, %53 : vector<8x32xf32>
    %cst_19 = arith.constant dense<0.000000e+00> : vector<8xf32>
    %55 = vector.multi_reduction <add>, %54, %cst_19 [1] : vector<8x32xf32> to vector<8xf32>
    %56 = vector.shape_cast %55 : vector<8xf32> to vector<8x1xf32>
    %cst_20 = arith.constant 3.200000e+01 : f32
    %57 = vector.broadcast %cst_20 : f32 to vector<8x1xf32>
    %58 = arith.divf %56, %57 : vector<8x1xf32>
    %59 = vector.broadcast %51 : vector<8x1xf32> to vector<8x32xf32>
    %60 = arith.subf %45, %59 : vector<8x32xf32>
    %cst_21 = arith.constant 9.99999974E-6 : f32
    %61 = vector.broadcast %cst_21 : f32 to vector<8x1xf32>
    %62 = arith.addf %58, %61 : vector<8x1xf32>
    %63 = math.rsqrt %62 : vector<8x1xf32>
    %64 = vector.broadcast %63 : vector<8x1xf32> to vector<8x32xf32>
    %65 = arith.mulf %60, %64 : vector<8x32xf32>
    %66 = vector.broadcast %46 : vector<1x32xf32> to vector<8x32xf32>
    %67 = arith.mulf %65, %66 : vector<8x32xf32>
    %68 = vector.broadcast %47 : vector<1x32xf32> to vector<8x32xf32>
    %69 = arith.addf %67, %68 : vector<8x32xf32>
    %c0_22 = arith.constant 0 : index
    %c0_23 = arith.constant 0 : index
    %70 = vector.load %arg5[%c0_22, %c0_23] : memref<32x64xf32, #tpu.memory_space<vmem>>, vector<32x64xf32>
    %cst_24 = arith.constant dense<0.000000e+00> : vector<8x64xf32>
    %71 = tpu.matmul %69, %70, %cst_24 {dimension_numbers = #tpu.dot_dimension_numbers<[1], [0], [0], [1], [0, 0, 1, 1], [], []>} : vector<8x32xf32>, vector<32x64xf32>, vector<8x64xf32> -> vector<8x64xf32>
    %72 = vector.extract_strided_slice %0 {offsets = [6, 0], sizes = [1, 64], strides = [1, 1]} : vector<21x128xf32> to vector<1x64xf32>
    %73 = vector.broadcast %72 : vector<1x64xf32> to vector<8x64xf32>
    %74 = arith.addf %71, %73 : vector<8x64xf32>
    %cst_25 = arith.constant 0.000000e+00 : f32
    %75 = vector.broadcast %cst_25 : f32 to vector<8x64xf32>
    %76 = arith.maximumf %74, %75 : vector<8x64xf32>
    %c0_26 = arith.constant 0 : index
    %c0_27 = arith.constant 0 : index
    %77 = vector.load %arg6[%c0_26, %c0_27] : memref<64x32xf32, #tpu.memory_space<vmem>>, vector<64x32xf32>
    %cst_28 = arith.constant dense<0.000000e+00> : vector<8x32xf32>
    %78 = tpu.matmul %76, %77, %cst_28 {dimension_numbers = #tpu.dot_dimension_numbers<[1], [0], [0], [1], [0, 0, 1, 1], [], []>} : vector<8x64xf32>, vector<64x32xf32>, vector<8x32xf32> -> vector<8x32xf32>
    %79 = vector.extract_strided_slice %0 {offsets = [7, 0], sizes = [1, 32], strides = [1, 1]} : vector<21x128xf32> to vector<1x32xf32>
    %80 = vector.broadcast %79 : vector<1x32xf32> to vector<8x32xf32>
    %81 = arith.addf %78, %80 : vector<8x32xf32>
    %82 = arith.addf %69, %81 : vector<8x32xf32>
    %83 = vector.extract_strided_slice %0 {offsets = [8, 0], sizes = [1, 32], strides = [1, 1]} : vector<21x128xf32> to vector<1x32xf32>
    %84 = vector.extract_strided_slice %0 {offsets = [9, 0], sizes = [1, 32], strides = [1, 1]} : vector<21x128xf32> to vector<1x32xf32>
    %cst_29 = arith.constant dense<0.000000e+00> : vector<8xf32>
    %85 = vector.multi_reduction <add>, %82, %cst_29 [1] : vector<8x32xf32> to vector<8xf32>
    %86 = vector.shape_cast %85 : vector<8xf32> to vector<8x1xf32>
    %cst_30 = arith.constant 3.200000e+01 : f32
    %87 = vector.broadcast %cst_30 : f32 to vector<8x1xf32>
    %88 = arith.divf %86, %87 : vector<8x1xf32>
    %89 = vector.broadcast %88 : vector<8x1xf32> to vector<8x32xf32>
    %90 = arith.subf %82, %89 : vector<8x32xf32>
    %91 = arith.mulf %90, %90 : vector<8x32xf32>
    %cst_31 = arith.constant dense<0.000000e+00> : vector<8xf32>
    %92 = vector.multi_reduction <add>, %91, %cst_31 [1] : vector<8x32xf32> to vector<8xf32>
    %93 = vector.shape_cast %92 : vector<8xf32> to vector<8x1xf32>
    %cst_32 = arith.constant 3.200000e+01 : f32
    %94 = vector.broadcast %cst_32 : f32 to vector<8x1xf32>
    %95 = arith.divf %93, %94 : vector<8x1xf32>
    %96 = vector.broadcast %88 : vector<8x1xf32> to vector<8x32xf32>
    %97 = arith.subf %82, %96 : vector<8x32xf32>
    %cst_33 = arith.constant 9.99999974E-6 : f32
    %98 = vector.broadcast %cst_33 : f32 to vector<8x1xf32>
    %99 = arith.addf %95, %98 : vector<8x1xf32>
    %100 = math.rsqrt %99 : vector<8x1xf32>
    %101 = vector.broadcast %100 : vector<8x1xf32> to vector<8x32xf32>
    %102 = arith.mulf %97, %101 : vector<8x32xf32>
    %103 = vector.broadcast %83 : vector<1x32xf32> to vector<8x32xf32>
    %104 = arith.mulf %102, %103 : vector<8x32xf32>
    %105 = vector.broadcast %84 : vector<1x32xf32> to vector<8x32xf32>
    %106 = arith.addf %104, %105 : vector<8x32xf32>
    %c0_34 = arith.constant 0 : index
    %c0_35 = arith.constant 0 : index
    %c0_36 = arith.constant 0 : index
    %107 = vector.load %arg7[%c0_34, %c0_35, %c0_36] : memref<3x32x32xf32, #tpu.memory_space<vmem>>, vector<3x32x32xf32>
    %c0_37 = arith.constant 0 : index
    %c0_38 = arith.constant 0 : index
    %108 = vector.load %arg8[%c0_37, %c0_38] : memref<32x32xf32, #tpu.memory_space<vmem>>, vector<32x32xf32>
    %109 = vector.extract_strided_slice %107 {offsets = [0, 0, 0], sizes = [1, 32, 32], strides = [1, 1, 1]} : vector<3x32x32xf32> to vector<1x32x32xf32>
    %110 = vector.shape_cast %109 : vector<1x32x32xf32> to vector<32x32xf32>
    %cst_39 = arith.constant dense<0.000000e+00> : vector<8x32xf32>
    %111 = tpu.matmul %106, %110, %cst_39 {dimension_numbers = #tpu.dot_dimension_numbers<[1], [0], [0], [1], [0, 0, 1, 1], [], []>} : vector<8x32xf32>, vector<32x32xf32>, vector<8x32xf32> -> vector<8x32xf32>
    %112 = vector.extract_strided_slice %0 {offsets = [10, 0], sizes = [1, 32], strides = [1, 1]} : vector<21x128xf32> to vector<1x32xf32>
    %113 = vector.broadcast %112 : vector<1x32xf32> to vector<8x32xf32>
    %114 = arith.addf %111, %113 : vector<8x32xf32>
    %cst_40 = arith.constant 0.353553385 : f32
    %115 = vector.broadcast %cst_40 : f32 to vector<8x32xf32>
    %116 = arith.mulf %114, %115 : vector<8x32xf32>
    %117 = vector.extract_strided_slice %107 {offsets = [1, 0, 0], sizes = [1, 32, 32], strides = [1, 1, 1]} : vector<3x32x32xf32> to vector<1x32x32xf32>
    %118 = vector.shape_cast %117 : vector<1x32x32xf32> to vector<32x32xf32>
    %cst_41 = arith.constant dense<0.000000e+00> : vector<8x32xf32>
    %119 = tpu.matmul %106, %118, %cst_41 {dimension_numbers = #tpu.dot_dimension_numbers<[1], [0], [0], [1], [0, 0, 1, 1], [], []>} : vector<8x32xf32>, vector<32x32xf32>, vector<8x32xf32> -> vector<8x32xf32>
    %120 = vector.extract_strided_slice %0 {offsets = [11, 0], sizes = [1, 32], strides = [1, 1]} : vector<21x128xf32> to vector<1x32xf32>
    %121 = vector.broadcast %120 : vector<1x32xf32> to vector<8x32xf32>
    %122 = arith.addf %119, %121 : vector<8x32xf32>
    %123 = vector.extract_strided_slice %107 {offsets = [2, 0, 0], sizes = [1, 32, 32], strides = [1, 1, 1]} : vector<3x32x32xf32> to vector<1x32x32xf32>
    %124 = vector.shape_cast %123 : vector<1x32x32xf32> to vector<32x32xf32>
    %cst_42 = arith.constant dense<0.000000e+00> : vector<8x32xf32>
    %125 = tpu.matmul %106, %124, %cst_42 {dimension_numbers = #tpu.dot_dimension_numbers<[1], [0], [0], [1], [0, 0, 1, 1], [], []>} : vector<8x32xf32>, vector<32x32xf32>, vector<8x32xf32> -> vector<8x32xf32>
    %126 = vector.extract_strided_slice %0 {offsets = [12, 0], sizes = [1, 32], strides = [1, 1]} : vector<21x128xf32> to vector<1x32xf32>
    %127 = vector.broadcast %126 : vector<1x32xf32> to vector<8x32xf32>
    %128 = arith.addf %125, %127 : vector<8x32xf32>
    %129 = vector.shape_cast %116 : vector<8x32xf32> to vector<8x4x8xf32>
    %130 = vector.shape_cast %122 : vector<8x32xf32> to vector<8x4x8xf32>
    %131 = vector.shape_cast %128 : vector<8x32xf32> to vector<8x4x8xf32>
    "tpu.trace_start"() <{level = 10 : i32, message = "qhd,khd->hqk"}> : () -> ()
    %cst_43 = arith.constant dense<0.000000e+00> : vector<4x8x8xf32>
    %132 = tpu.matmul %129, %130, %cst_43 {dimension_numbers = #tpu.dot_dimension_numbers<[2], [2], [0], [0], [0, 1, 0, 0, 1, 0], [1], [1]>} : vector<8x4x8xf32>, vector<8x4x8xf32>, vector<4x8x8xf32> -> vector<4x8x8xf32>
    "tpu.trace_stop"() : () -> ()
    %cst_44 = arith.constant dense<0xFF800000> : vector<4x8xf32>
    %133 = vector.multi_reduction <maximumf>, %132, %cst_44 [2] : vector<4x8x8xf32> to vector<4x8xf32>
    %134 = vector.shape_cast %133 : vector<4x8xf32> to vector<4x8x1xf32>
    %135 = vector.broadcast %134 : vector<4x8x1xf32> to vector<4x8x8xf32>
    %136 = arith.subf %132, %135 : vector<4x8x8xf32>
    %137 = math.exp %136 : vector<4x8x8xf32>
    %cst_45 = arith.constant dense<0.000000e+00> : vector<4x8xf32>
    %138 = vector.multi_reduction <add>, %137, %cst_45 [2] : vector<4x8x8xf32> to vector<4x8xf32>
    %139 = vector.shape_cast %138 : vector<4x8xf32> to vector<4x8x1xf32>
    %140 = vector.broadcast %139 : vector<4x8x1xf32> to vector<4x8x8xf32>
    %141 = arith.divf %137, %140 : vector<4x8x8xf32>
    "tpu.trace_start"() <{level = 10 : i32, message = "hqk,khd->qhd"}> : () -> ()
    %cst_46 = arith.constant dense<0.000000e+00> : vector<4x8x8xf32>
    %142 = tpu.matmul %131, %141, %cst_46 {dimension_numbers = #tpu.dot_dimension_numbers<[0], [2], [2], [1], [0, 1, 0, 2, 1, 1], [1], [0]>} : vector<8x4x8xf32>, vector<4x8x8xf32>, vector<4x8x8xf32> -> vector<4x8x8xf32>
    %143 = tpu.transpose %142, [2, 0, 1] : vector<4x8x8xf32> -> vector<8x4x8xf32>
    "tpu.trace_stop"() : () -> ()
    %144 = vector.shape_cast %143 : vector<8x4x8xf32> to vector<8x32xf32>
    %cst_47 = arith.constant dense<0.000000e+00> : vector<8x32xf32>
    %145 = tpu.matmul %144, %108, %cst_47 {dimension_numbers = #tpu.dot_dimension_numbers<[1], [0], [0], [1], [0, 0, 1, 1], [], []>} : vector<8x32xf32>, vector<32x32xf32>, vector<8x32xf32> -> vector<8x32xf32>
    %146 = vector.extract_strided_slice %0 {offsets = [13, 0], sizes = [1, 32], strides = [1, 1]} : vector<21x128xf32> to vector<1x32xf32>
    %147 = vector.broadcast %146 : vector<1x32xf32> to vector<8x32xf32>
    %148 = arith.addf %145, %147 : vector<8x32xf32>
    %149 = arith.addf %106, %148 : vector<8x32xf32>
    %150 = vector.extract_strided_slice %0 {offsets = [14, 0], sizes = [1, 32], strides = [1, 1]} : vector<21x128xf32> to vector<1x32xf32>
    %151 = vector.extract_strided_slice %0 {offsets = [15, 0], sizes = [1, 32], strides = [1, 1]} : vector<21x128xf32> to vector<1x32xf32>
    %cst_48 = arith.constant dense<0.000000e+00> : vector<8xf32>
    %152 = vector.multi_reduction <add>, %149, %cst_48 [1] : vector<8x32xf32> to vector<8xf32>
    %153 = vector.shape_cast %152 : vector<8xf32> to vector<8x1xf32>
    %cst_49 = arith.constant 3.200000e+01 : f32
    %154 = vector.broadcast %cst_49 : f32 to vector<8x1xf32>
    %155 = arith.divf %153, %154 : vector<8x1xf32>
    %156 = vector.broadcast %155 : vector<8x1xf32> to vector<8x32xf32>
    %157 = arith.subf %149, %156 : vector<8x32xf32>
    %158 = arith.mulf %157, %157 : vector<8x32xf32>
    %cst_50 = arith.constant dense<0.000000e+00> : vector<8xf32>
    %159 = vector.multi_reduction <add>, %158, %cst_50 [1] : vector<8x32xf32> to vector<8xf32>
    %160 = vector.shape_cast %159 : vector<8xf32> to vector<8x1xf32>
    %cst_51 = arith.constant 3.200000e+01 : f32
    %161 = vector.broadcast %cst_51 : f32 to vector<8x1xf32>
    %162 = arith.divf %160, %161 : vector<8x1xf32>
    %163 = vector.broadcast %155 : vector<8x1xf32> to vector<8x32xf32>
    %164 = arith.subf %149, %163 : vector<8x32xf32>
    %cst_52 = arith.constant 9.99999974E-6 : f32
    %165 = vector.broadcast %cst_52 : f32 to vector<8x1xf32>
    %166 = arith.addf %162, %165 : vector<8x1xf32>
    %167 = math.rsqrt %166 : vector<8x1xf32>
    %168 = vector.broadcast %167 : vector<8x1xf32> to vector<8x32xf32>
    %169 = arith.mulf %164, %168 : vector<8x32xf32>
    %170 = vector.broadcast %150 : vector<1x32xf32> to vector<8x32xf32>
    %171 = arith.mulf %169, %170 : vector<8x32xf32>
    %172 = vector.broadcast %151 : vector<1x32xf32> to vector<8x32xf32>
    %173 = arith.addf %171, %172 : vector<8x32xf32>
    %c0_53 = arith.constant 0 : index
    %c0_54 = arith.constant 0 : index
    %174 = vector.load %arg9[%c0_53, %c0_54] : memref<32x64xf32, #tpu.memory_space<vmem>>, vector<32x64xf32>
    %cst_55 = arith.constant dense<0.000000e+00> : vector<8x64xf32>
    %175 = tpu.matmul %173, %174, %cst_55 {dimension_numbers = #tpu.dot_dimension_numbers<[1], [0], [0], [1], [0, 0, 1, 1], [], []>} : vector<8x32xf32>, vector<32x64xf32>, vector<8x64xf32> -> vector<8x64xf32>
    %176 = vector.extract_strided_slice %0 {offsets = [16, 0], sizes = [1, 64], strides = [1, 1]} : vector<21x128xf32> to vector<1x64xf32>
    %177 = vector.broadcast %176 : vector<1x64xf32> to vector<8x64xf32>
    %178 = arith.addf %175, %177 : vector<8x64xf32>
    %cst_56 = arith.constant 0.000000e+00 : f32
    %179 = vector.broadcast %cst_56 : f32 to vector<8x64xf32>
    %180 = arith.maximumf %178, %179 : vector<8x64xf32>
    %c0_57 = arith.constant 0 : index
    %c0_58 = arith.constant 0 : index
    %181 = vector.load %arg10[%c0_57, %c0_58] : memref<64x32xf32, #tpu.memory_space<vmem>>, vector<64x32xf32>
    %cst_59 = arith.constant dense<0.000000e+00> : vector<8x32xf32>
    %182 = tpu.matmul %180, %181, %cst_59 {dimension_numbers = #tpu.dot_dimension_numbers<[1], [0], [0], [1], [0, 0, 1, 1], [], []>} : vector<8x64xf32>, vector<64x32xf32>, vector<8x32xf32> -> vector<8x32xf32>
    %183 = vector.extract_strided_slice %0 {offsets = [17, 0], sizes = [1, 32], strides = [1, 1]} : vector<21x128xf32> to vector<1x32xf32>
    %184 = vector.broadcast %183 : vector<1x32xf32> to vector<8x32xf32>
    %185 = arith.addf %182, %184 : vector<8x32xf32>
    %186 = arith.addf %173, %185 : vector<8x32xf32>
    %187 = vector.extract_strided_slice %0 {offsets = [18, 0], sizes = [1, 32], strides = [1, 1]} : vector<21x128xf32> to vector<1x32xf32>
    %188 = vector.extract_strided_slice %0 {offsets = [19, 0], sizes = [1, 32], strides = [1, 1]} : vector<21x128xf32> to vector<1x32xf32>
    %cst_60 = arith.constant dense<0.000000e+00> : vector<8xf32>
    %189 = vector.multi_reduction <add>, %186, %cst_60 [1] : vector<8x32xf32> to vector<8xf32>
    %190 = vector.shape_cast %189 : vector<8xf32> to vector<8x1xf32>
    %cst_61 = arith.constant 3.200000e+01 : f32
    %191 = vector.broadcast %cst_61 : f32 to vector<8x1xf32>
    %192 = arith.divf %190, %191 : vector<8x1xf32>
    %193 = vector.broadcast %192 : vector<8x1xf32> to vector<8x32xf32>
    %194 = arith.subf %186, %193 : vector<8x32xf32>
    %195 = arith.mulf %194, %194 : vector<8x32xf32>
    %cst_62 = arith.constant dense<0.000000e+00> : vector<8xf32>
    %196 = vector.multi_reduction <add>, %195, %cst_62 [1] : vector<8x32xf32> to vector<8xf32>
    %197 = vector.shape_cast %196 : vector<8xf32> to vector<8x1xf32>
    %cst_63 = arith.constant 3.200000e+01 : f32
    %198 = vector.broadcast %cst_63 : f32 to vector<8x1xf32>
    %199 = arith.divf %197, %198 : vector<8x1xf32>
    %200 = vector.broadcast %192 : vector<8x1xf32> to vector<8x32xf32>
    %201 = arith.subf %186, %200 : vector<8x32xf32>
    %cst_64 = arith.constant 9.99999974E-6 : f32
    %202 = vector.broadcast %cst_64 : f32 to vector<8x1xf32>
    %203 = arith.addf %199, %202 : vector<8x1xf32>
    %204 = math.rsqrt %203 : vector<8x1xf32>
    %205 = vector.broadcast %204 : vector<8x1xf32> to vector<8x32xf32>
    %206 = arith.mulf %201, %205 : vector<8x32xf32>
    %207 = vector.broadcast %187 : vector<1x32xf32> to vector<8x32xf32>
    %208 = arith.mulf %206, %207 : vector<8x32xf32>
    %209 = vector.broadcast %188 : vector<1x32xf32> to vector<8x32xf32>
    %210 = arith.addf %208, %209 : vector<8x32xf32>
    %c0_65 = arith.constant 0 : index
    %c0_66 = arith.constant 0 : index
    %211 = vector.load %arg11[%c0_65, %c0_66] : memref<32x128xf32, #tpu.memory_space<vmem>>, vector<32x128xf32>
    %cst_67 = arith.constant dense<0.000000e+00> : vector<8x128xf32>
    %212 = tpu.matmul %210, %211, %cst_67 {dimension_numbers = #tpu.dot_dimension_numbers<[1], [0], [0], [1], [0, 0, 1, 1], [], []>} : vector<8x32xf32>, vector<32x128xf32>, vector<8x128xf32> -> vector<8x128xf32>
    %213 = vector.extract_strided_slice %0 {offsets = [20, 0], sizes = [1, 128], strides = [1, 1]} : vector<21x128xf32> to vector<1x128xf32>
    %214 = vector.broadcast %213 : vector<1x128xf32> to vector<8x128xf32>
    %215 = arith.addf %212, %214 : vector<8x128xf32>
    %c0_68 = arith.constant 0 : index
    %c0_69 = arith.constant 0 : index
    %c0_70 = arith.constant 0 : index
    %216 = vector.load %arg12[%c0_68, %c0_69, %c0_70] : memref<1x8x128xf32, #tpu.memory_space<vmem>>, vector<1x8x128xf32>
    %217 = vector.shape_cast %216 : vector<1x8x128xf32> to vector<8x128xf32>
    %218 = vector.shape_cast %215 : vector<8x128xf32> to vector<1x8x128xf32>
    tpu.vector_store %arg12[%c0_68, %c0_69, %c0_70], %218 {strides = array<i32>} : memref<1x8x128xf32, #tpu.memory_space<vmem>>, vector<1x8x128xf32>,
    return
  }
  func.func @transform_0(%arg0: i32) -> (i32, i32, i32) {
    %c0_i32 = arith.constant 0 : i32
    %c0_i32_0 = arith.constant 0 : i32
    %c0_i32_1 = arith.constant 0 : i32
    return %arg0, %c0_i32, %c0_i32_0 : i32, i32, i32
  }
  func.func @transform_1(%arg0: i32) -> (i32, i32) {
    %c0_i32 = arith.constant 0 : i32
    %c0_i32_0 = arith.constant 0 : i32
    %c0_i32_1 = arith.constant 0 : i32
    return %c0_i32, %c0_i32_0 : i32, i32
  }
  func.func @transform_2(%arg0: i32) -> (i32, i32, i32) {
    %c0_i32 = arith.constant 0 : i32
    %c0_i32_0 = arith.constant 0 : i32
    %c0_i32_1 = arith.constant 0 : i32
    %c0_i32_2 = arith.constant 0 : i32
    return %c0_i32, %c0_i32_0, %c0_i32_1 : i32, i32, i32
  }
  func.func @transform_3(%arg0: i32) -> (i32, i32) {
    %c0_i32 = arith.constant 0 : i32
    %c0_i32_0 = arith.constant 0 : i32
    %c0_i32_1 = arith.constant 0 : i32
    return %c0_i32, %c0_i32_0 : i32, i32
  }
  func.func @transform_4(%arg0: i32) -> (i32, i32) {
    %c0_i32 = arith.constant 0 : i32
    %c0_i32_0 = arith.constant 0 : i32
    %c0_i32_1 = arith.constant 0 : i32
    return %c0_i32, %c0_i32_0 : i32, i32
  }
  func.func @transform_5(%arg0: i32) -> (i32, i32) {
    %c0_i32 = arith.constant 0 : i32
    %c0_i32_0 = arith.constant 0 : i32
    %c0_i32_1 = arith.constant 0 : i32
    return %c0_i32, %c0_i32_0 : i32, i32
  }
  func.func @transform_6(%arg0: i32) -> (i32, i32, i32) {
    %c0_i32 = arith.constant 0 : i32
    %c0_i32_0 = arith.constant 0 : i32
    %c0_i32_1 = arith.constant 0 : i32
    %c0_i32_2 = arith.constant 0 : i32
    return %c0_i32, %c0_i32_0, %c0_i32_1 : i32, i32, i32
  }
  func.func @transform_7(%arg0: i32) -> (i32, i32) {
    %c0_i32 = arith.constant 0 : i32
    %c0_i32_0 = arith.constant 0 : i32
    %c0_i32_1 = arith.constant 0 : i32
    return %c0_i32, %c0_i32_0 : i32, i32
  }
  func.func @transform_8(%arg0: i32) -> (i32, i32) {
    %c0_i32 = arith.constant 0 : i32
    %c0_i32_0 = arith.constant 0 : i32
    %c0_i32_1 = arith.constant 0 : i32
    return %c0_i32, %c0_i32_0 : i32, i32
  }
  func.func @transform_9(%arg0: i32) -> (i32, i32) {
    %c0_i32 = arith.constant 0 : i32
    %c0_i32_0 = arith.constant 0 : i32
    %c0_i32_1 = arith.constant 0 : i32
    return %c0_i32, %c0_i32_0 : i32, i32
  }
  func.func @transform_10(%arg0: i32) -> (i32, i32) {
    %c0_i32 = arith.constant 0 : i32
    %c0_i32_0 = arith.constant 0 : i32
    %c0_i32_1 = arith.constant 0 : i32
    return %c0_i32, %c0_i32_0 : i32, i32
  }
  func.func @transform_11(%arg0: i32) -> (i32, i32, i32) {
    %c0_i32 = arith.constant 0 : i32
    %c0_i32_0 = arith.constant 0 : i32
    %c0_i32_1 = arith.constant 0 : i32
    return %arg0, %c0_i32, %c0_i32_0 : i32, i32, i32
  }
}

</mosaic_0001>

<llo_original>
// kernel: tpu_custom_call.1
$region0: #{tpu_custom_call.1}
  #allocation0 [shape = 'u32[]', space=smem, size = 0x4, offset = 0x4, fixed_abs, tag = 'smem constant byte address 0x4 - core index']
  #allocation1 [shape = 'u32[72,128]{1,0:T(1,128)}', space=vmem, size = 0x9000, scoped, tag = 'internal scratch']
  %s0 = inlined_call_operand.hbm [shape: f32[2,8,32], index: 0, kind: input, shape index: {}]
  %s1 = inlined_call_operand.hbm [shape: f32[21,128], index: 1, kind: input, shape index: {}]
  %s2 = inlined_call_operand.vmem [shape: f32[3,32,32], index: 2, kind: input, shape index: {}]
  %s3 = inlined_call_operand.vmem [shape: f32[32,32], index: 3, kind: input, shape index: {}]
  %s4 = inlined_call_operand.vmem [shape: f32[32,64], index: 4, kind: input, shape index: {}]
  %s5 = inlined_call_operand.vmem [shape: f32[64,32], index: 5, kind: input, shape index: {}]
  %s6 = inlined_call_operand.hbm [shape: f32[3,32,32], index: 6, kind: input, shape index: {}]
  %s7 = inlined_call_operand.hbm [shape: f32[32,32], index: 7, kind: input, shape index: {}]
  %s8 = inlined_call_operand.hbm [shape: f32[32,64], index: 8, kind: input, shape index: {}]
  %s9 = inlined_call_operand.vmem [shape: f32[64,32], index: 9, kind: input, shape index: {}]
  %s10 = inlined_call_operand.hbm [shape: f32[32,128], index: 10, kind: input, shape index: {}]
  %s11 = inlined_call_operand.hbm [shape: f32[2,8,128], index: 11, kind: output, shape index: {}]
  %s12 = sld [smem:[#allocation0]]
  $region101: #{tpu_custom_call.1} parent=0
    _
  %s14 = ssub.s32 1, %s12
  %s15 = scalar_select 0, %s14, %s12
  $region1: #{tpu_custom_call.1} parent=0
    #allocation2 [shape = 'u8[8192]{0}', space=vmem, size = 0x2000, scoped, tag = 'input window, operand 0']
    #allocation3 [shape = 's32[2]{0}', space=sflag, size = 0x8, scoped, tag = 'scoped memory for tpu_custom_call.1']
    #allocation4 [shape = 's32[2]{0}', space=sflag, size = 0x8, scoped, tag = 'scoped memory for tpu_custom_call.1']
    #allocation5 [shape = 'u8[12288]{0}', space=vmem, size = 0x3000, scoped, tag = 'input window, operand 1, single buffered']
    #allocation6 [shape = 's32[1]{0}', space=sflag, size = 0x4, scoped, tag = 'scoped memory for tpu_custom_call.1']
    #allocation7 [shape = 'u8[49152]{0}', space=vmem, size = 0xc000, scoped, tag = 'input window, operand 6, single buffered']
    #allocation8 [shape = 'u8[16384]{0}', space=vmem, size = 0x4000, scoped, tag = 'input window, operand 7, single buffered']
    #allocation9 [shape = 's32[1]{0}', space=sflag, size = 0x4, scoped, tag = 'scoped memory for tpu_custom_call.1']
    #allocation10 [shape = 'u8[16384]{0}', space=vmem, size = 0x4000, scoped, tag = 'input window, operand 8, single buffered']
    #allocation11 [shape = 'u8[16384]{0}', space=vmem, size = 0x4000, scoped, tag = 'input window, operand 10, single buffered']
    #allocation12 [shape = 's32[1]{0}', space=sflag, size = 0x4, scoped, tag = 'scoped memory for tpu_custom_call.1']
    #allocation13 [shape = 'u8[8192]{0}', space=vmem, size = 0x2000, scoped, tag = 'output window, operand 0']
    %16 = vsyncpa [#allocation3], 0
    %s17 = scalar_lea.sflag [#allocation3], 1
    %18 = vsyncpa %s17, 0
    %19 = vsyncpa [#allocation6], 0
    %20 = vsyncpa [#allocation9], 0
    %21 = vsyncpa [#allocation12], 0
    %22 = vsyncpa [#allocation4], 0
    %s23 = scalar_lea.sflag [#allocation4], 1
    %24 = vsyncpa %s23, 0
    loop: start=0, step=1, limit=4
    $region2: #{tpu_custom_call.1} parent=1 // loop_pre_header
      _
    $region3: #{tpu_custom_call.1} parent=1 // loop_header
      %s26 = sphi 0, %s30
      %p27 = scmp.ge.s32.totalorder %s26, 4
      %s36 = sphi 0, %s38
      %s39 = sphi 0, %s36
      %s40 = sphi 0, %s39
      %s56 = sphi 0, %s40
      %s60 = sphi 0, %s60
      %s62 = sphi 0, %s60
      %s63 = sphi 0, %s62
      %s77 = sphi 0, %s63
      %s81 = sphi 0, %s81
      %s83 = sphi 0, %s81
      %s84 = sphi 0, %s83
      %s98 = sphi 0, %s84
      %s102 = sphi 0, %s102
      %s104 = sphi 0, %s102
      %s105 = sphi 0, %s104
      %s119 = sphi 0, %s105
      %s123 = sphi 0, %s123
      %s125 = sphi 0, %s123
      %s126 = sphi 0, %s125
      %s140 = sphi 0, %s126
      %s144 = sphi 0, %s144
      %s146 = sphi 0, %s144
      %s147 = sphi 0, %s146
      %s161 = sphi 0, %s147
      %s165 = sphi 0, %s165
      %s167 = sphi 0, %s165
      %s168 = sphi 0, %s167
      %s182 = sphi 0, %s168
      %s186 = sphi 0, %s186
      %s188 = sphi 0, %s186
      %s189 = sphi 0, %s188
      %s203 = sphi 0, %s189
      %s207 = sphi 0, %s207
      %s209 = sphi 0, %s207
      %s210 = sphi 0, %s209
      %s224 = sphi 0, %s210
      %s228 = sphi 0, %s228
      %s230 = sphi 0, %s228
      %s231 = sphi 0, %s230
      %s245 = sphi 0, %s231
      %s249 = sphi 0, %s249
      %s251 = sphi 0, %s249
      %s252 = sphi 0, %s251
      %s266 = sphi 0, %s252
      %s272 = sphi 0, %s274
      %s275 = sphi 0, %s272
      %s276 = sphi 0, %s275
      %s292 = sphi 0, %s276
    $region4: #{tpu_custom_call.1} parent=1 // loop_header_branch
      %29 = sbr.rel (%p27) target = $region8
    $region5: #{tpu_custom_call.1} parent=1 // loop_body
      %s31 = ssub.s32 %s26, 1
      %s32 = ssub.s32 %s26, 2
      %s33 = sadd.s32 %s26, 1
      %s34 = ssub.s32 %s26, %s33
      %p35 = scmp.eq.s32.totalorder %s34, 0
      %s37 = sadd.s32 %s36, 1
      %s38 = scalar_select %p35, %s36, %s37
      %p41 = pneg %p35
      %p42 = scmp.eq.s32.totalorder %s26, 1
      %p43 = por %p41, %p42
      %p44 = scmp.ne.s32.totalorder %s36, %s39
      %p45 = scmp.eq.s32.totalorder %s26, 0
      %p46 = por %p44, %p45
      %p47 = scmp.ne.s32.totalorder %s36, %s39
      %p48 = scmp.eq.s32.totalorder %s31, 1
      %p49 = por %p47, %p48
      %p50 = scmp.ne.s32.totalorder %s39, %s40
      %p51 = scmp.eq.s32.totalorder %s31, 0
      %p52 = por %p50, %p51
      %p53 = scmp.ne.s32.totalorder %s39, %s40
      %p54 = scmp.eq.s32.totalorder %s32, 1
      %p55 = por %p53, %p54
      %p57 = scmp.ne.s32.totalorder %s40, %s56
      %p58 = scmp.eq.s32.totalorder %s32, 0
      %p59 = por %p57, %p58
      %s61 = sadd.s32 %s60, 1
      %p64 = scmp.eq.s32.totalorder %s26, 1
      %p65 = scmp.ne.s32.totalorder %s60, %s62
      %p66 = scmp.eq.s32.totalorder %s26, 0
      %p67 = por %p65, %p66
      %p68 = scmp.ne.s32.totalorder %s60, %s62
      %p69 = scmp.eq.s32.totalorder %s31, 1
      %p70 = por %p68, %p69
      %p71 = scmp.ne.s32.totalorder %s62, %s63
      %p72 = scmp.eq.s32.totalorder %s31, 0
      %p73 = por %p71, %p72
      %p74 = scmp.ne.s32.totalorder %s62, %s63
      %p75 = scmp.eq.s32.totalorder %s32, 1
      %p76 = por %p74, %p75
      %p78 = scmp.ne.s32.totalorder %s63, %s77
      %p79 = scmp.eq.s32.totalorder %s32, 0
      %p80 = por %p78, %p79
      %s82 = sadd.s32 %s81, 1
      %p85 = scmp.eq.s32.totalorder %s26, 1
      %p86 = scmp.ne.s32.totalorder %s81, %s83
      %p87 = scmp.eq.s32.totalorder %s26, 0
      %p88 = por %p86, %p87
      %p89 = scmp.ne.s32.totalorder %s81, %s83
      %p90 = scmp.eq.s32.totalorder %s31, 1
      %p91 = por %p89, %p90
      %p92 = scmp.ne.s32.totalorder %s83, %s84
      %p93 = scmp.eq.s32.totalorder %s31, 0
      %p94 = por %p92, %p93
      %p95 = scmp.ne.s32.totalorder %s83, %s84
      %p96 = scmp.eq.s32.totalorder %s32, 1
      %p97 = por %p95, %p96
      %p99 = scmp.ne.s32.totalorder %s84, %s98
      %p100 = scmp.eq.s32.totalorder %s32, 0
      %p101 = por %p99, %p100
      %s103 = sadd.s32 %s102, 1
      %p106 = scmp.eq.s32.totalorder %s26, 1
      %p107 = scmp.ne.s32.totalorder %s102, %s104
      %p108 = scmp.eq.s32.totalorder %s26, 0
      %p109 = por %p107, %p108
      %p110 = scmp.ne.s32.totalorder %s102, %s104
      %p111 = scmp.eq.s32.totalorder %s31, 1
      %p112 = por %p110, %p111
      %p113 = scmp.ne.s32.totalorder %s104, %s105
      %p114 = scmp.eq.s32.totalorder %s31, 0
      %p115 = por %p113, %p114
      %p116 = scmp.ne.s32.totalorder %s104, %s105
      %p117 = scmp.eq.s32.totalorder %s32, 1
      %p118 = por %p116, %p117
      %p120 = scmp.ne.s32.totalorder %s105, %s119
      %p121 = scmp.eq.s32.totalorder %s32, 0
      %p122 = por %p120, %p121
      %s124 = sadd.s32 %s123, 1
      %p127 = scmp.eq.s32.totalorder %s26, 1
      %p128 = scmp.ne.s32.totalorder %s123, %s125
      %p129 = scmp.eq.s32.totalorder %s26, 0
      %p130 = por %p128, %p129
      %p131 = scmp.ne.s32.totalorder %s123, %s125
      %p132 = scmp.eq.s32.totalorder %s31, 1
      %p133 = por %p131, %p132
      %p134 = scmp.ne.s32.totalorder %s125, %s126
      %p135 = scmp.eq.s32.totalorder %s31, 0
      %p136 = por %p134, %p135
      %p137 = scmp.ne.s32.totalorder %s125, %s126
      %p138 = scmp.eq.s32.totalorder %s32, 1
      %p139 = por %p137, %p138
      %p141 = scmp.ne.s32.totalorder %s126, %s140
      %p142 = scmp.eq.s32.totalorder %s32, 0
      %p143 = por %p141, %p142
      %s145 = sadd.s32 %s144, 1
      %p148 = scmp.eq.s32.totalorder %s26, 1
      %p149 = scmp.ne.s32.totalorder %s144, %s146
      %p150 = scmp.eq.s32.totalorder %s26, 0
      %p151 = por %p149, %p150
      %p152 = scmp.ne.s32.totalorder %s144, %s146
      %p153 = scmp.eq.s32.totalorder %s31, 1
      %p154 = por %p152, %p153
      %p155 = scmp.ne.s32.totalorder %s146, %s147
      %p156 = scmp.eq.s32.totalorder %s31, 0
      %p157 = por %p155, %p156
      %p158 = scmp.ne.s32.totalorder %s146, %s147
      %p159 = scmp.eq.s32.totalorder %s32, 1
      %p160 = por %p158, %p159
      %p162 = scmp.ne.s32.totalorder %s147, %s161
      %p163 = scmp.eq.s32.totalorder %s32, 0
      %p164 = por %p162, %p163
      %s166 = sadd.s32 %s165, 1
      %p169 = scmp.eq.s32.totalorder %s26, 1
      %p170 = scmp.ne.s32.totalorder %s165, %s167
      %p171 = scmp.eq.s32.totalorder %s26, 0
      %p172 = por %p170, %p171
      %p173 = scmp.ne.s32.totalorder %s165, %s167
      %p174 = scmp.eq.s32.totalorder %s31, 1
      %p175 = por %p173, %p174
      %p176 = scmp.ne.s32.totalorder %s167, %s168
      %p177 = scmp.eq.s32.totalorder %s31, 0
      %p178 = por %p176, %p177
      %p179 = scmp.ne.s32.totalorder %s167, %s168
      %p180 = scmp.eq.s32.totalorder %s32, 1
      %p181 = por %p179, %p180
      %p183 = scmp.ne.s32.totalorder %s168, %s182
      %p184 = scmp.eq.s32.totalorder %s32, 0
      %p185 = por %p183, %p184
      %s187 = sadd.s32 %s186, 1
      %p190 = scmp.eq.s32.totalorder %s26, 1
      %p191 = scmp.ne.s32.totalorder %s186, %s188
      %p192 = scmp.eq.s32.totalorder %s26, 0
      %p193 = por %p191, %p192
      %p194 = scmp.ne.s32.totalorder %s186, %s188
      %p195 = scmp.eq.s32.totalorder %s31, 1
      %p196 = por %p194, %p195
      %p197 = scmp.ne.s32.totalorder %s188, %s189
      %p198 = scmp.eq.s32.totalorder %s31, 0
      %p199 = por %p197, %p198
      %p200 = scmp.ne.s32.totalorder %s188, %s189
      %p201 = scmp.eq.s32.totalorder %s32, 1
      %p202 = por %p200, %p201
      %p204 = scmp.ne.s32.totalorder %s189, %s203
      %p205 = scmp.eq.s32.totalorder %s32, 0
      %p206 = por %p204, %p205
      %s208 = sadd.s32 %s207, 1
      %p211 = scmp.eq.s32.totalorder %s26, 1
      %p212 = scmp.ne.s32.totalorder %s207, %s209
      %p213 = scmp.eq.s32.totalorder %s26, 0
      %p214 = por %p212, %p213
      %p215 = scmp.ne.s32.totalorder %s207, %s209
      %p216 = scmp.eq.s32.totalorder %s31, 1
      %p217 = por %p215, %p216
      %p218 = scmp.ne.s32.totalorder %s209, %s210
      %p219 = scmp.eq.s32.totalorder %s31, 0
      %p220 = por %p218, %p219
      %p221 = scmp.ne.s32.totalorder %s209, %s210
      %p222 = scmp.eq.s32.totalorder %s32, 1
      %p223 = por %p221, %p222
      %p225 = scmp.ne.s32.totalorder %s210, %s224
      %p226 = scmp.eq.s32.totalorder %s32, 0
      %p227 = por %p225, %p226
      %s229 = sadd.s32 %s228, 1
      %p232 = scmp.eq.s32.totalorder %s26, 1
      %p233 = scmp.ne.s32.totalorder %s228, %s230
      %p234 = scmp.eq.s32.totalorder %s26, 0
      %p235 = por %p233, %p234
      %p236 = scmp.ne.s32.totalorder %s228, %s230
      %p237 = scmp.eq.s32.totalorder %s31, 1
      %p238 = por %p236, %p237
      %p239 = scmp.ne.s32.totalorder %s230, %s231
      %p240 = scmp.eq.s32.totalorder %s31, 0
      %p241 = por %p239, %p240
      %p242 = scmp.ne.s32.totalorder %s230, %s231
      %p243 = scmp.eq.s32.totalorder %s32, 1
      %p244 = por %p242, %p243
      %p246 = scmp.ne.s32.totalorder %s231, %s245
      %p247 = scmp.eq.s32.totalorder %s32, 0
      %p248 = por %p246, %p247
      %s250 = sadd.s32 %s249, 1
      %p253 = scmp.eq.s32.totalorder %s26, 1
      %p254 = scmp.ne.s32.totalorder %s249, %s251
      %p255 = scmp.eq.s32.totalorder %s26, 0
      %p256 = por %p254, %p255
      %p257 = scmp.ne.s32.totalorder %s249, %s251
      %p258 = scmp.eq.s32.totalorder %s31, 1
      %p259 = por %p257, %p258
      %p260 = scmp.ne.s32.totalorder %s251, %s252
      %p261 = scmp.eq.s32.totalorder %s31, 0
      %p262 = por %p260, %p261
      %p263 = scmp.ne.s32.totalorder %s251, %s252
      %p264 = scmp.eq.s32.totalorder %s32, 1
      %p265 = por %p263, %p264
      %p267 = scmp.ne.s32.totalorder %s252, %s266
      %p268 = scmp.eq.s32.totalorder %s32, 0
      %p269 = por %p267, %p268
      %s270 = ssub.s32 %s26, %s33
      %p271 = scmp.eq.s32.totalorder %s270, 0
      %s273 = sadd.s32 %s272, 1
      %s274 = scalar_select %p271, %s272, %s273
      %p277 = pneg %p271
      %p278 = scmp.eq.s32.totalorder %s26, 1
      %p279 = por %p277, %p278
      %p280 = scmp.ne.s32.totalorder %s272, %s275
      %p281 = scmp.eq.s32.totalorder %s26, 0
      %p282 = por %p280, %p281
      %p283 = scmp.ne.s32.totalorder %s272, %s275
      %p284 = scmp.eq.s32.totalorder %s31, 1
      %p285 = por %p283, %p284
      %p286 = scmp.ne.s32.totalorder %s275, %s276
      %p287 = scmp.eq.s32.totalorder %s31, 0
      %p288 = por %p286, %p287
      %p289 = scmp.ne.s32.totalorder %s275, %s276
      %p290 = scmp.eq.s32.totalorder %s32, 1
      %p291 = por %p289, %p290
      %p293 = scmp.ne.s32.totalorder %s276, %s292
      %p294 = scmp.eq.s32.totalorder %s32, 0
      %p295 = por %p293, %p294
      %p296 = scmp.le.s32.totalorder 1, %s26
      %p297 = scmp.lt.s32.totalorder %s26, 3
      %p298 = pnand %p296, %p297
      %p299 = pneg %p298
      // Predicated region
      $region9: #{tpu_custom_call.1} parent=5 // pred_check
        _
      $region10: #{tpu_custom_call.1} parent=5 // pred_check_branch
        %301 = sbr.rel (%p298) target = $region12
      $region11: #{tpu_custom_call.1} parent=5 // pred_region
        %s302 = ssub.s32 %s26, 1
        // Predicated region
        $region13: #{tpu_custom_call.1} parent=11 // pred_check
          %p303 = pneg %p73
        $region14: #{tpu_custom_call.1} parent=11 // pred_check_branch
          %305 = sbr.rel (%p303) target = $region16
        $region15: #{tpu_custom_call.1} parent=11 // pred_region
          %307 = vsyncadd [#allocation6], 0
          %s308 = sshll.u32 %s1, 4
          %s309 = int_to_ptr.hbm [resolvable:$true] %s308
          %s310 = sshll.u32 [#allocation5], 4
          %s311 = int_to_ptr.vmem [resolvable:$true] %s310
          %316 = dma.hbm_to_vmem [thread:$0]  %s309, 384, %s311, [#allocation6], 128, 128, 8
        $region16: #{tpu_custom_call.1} parent=11 // pred_fallthru
          _
        // Predicated region
        $region17: #{tpu_custom_call.1} parent=11 // pred_check
          %p317 = pneg %p94
        $region18: #{tpu_custom_call.1} parent=11 // pred_check_branch
          %319 = sbr.rel (%p317) target = $region20
        $region19: #{tpu_custom_call.1} parent=11 // pred_region
          _
        $region20: #{tpu_custom_call.1} parent=11 // pred_fallthru
          _
        // Predicated region
        $region21: #{tpu_custom_call.1} parent=11 // pred_check
          %p320 = pneg %p115
        $region22: #{tpu_custom_call.1} parent=11 // pred_check_branch
          %322 = sbr.rel (%p320) target = $region24
        $region23: #{tpu_custom_call.1} parent=11 // pred_region
          _
        $region24: #{tpu_custom_call.1} parent=11 // pred_fallthru
          _
        // Predicated region
        $region25: #{tpu_custom_call.1} parent=11 // pred_check
          %p323 = pneg %p136
        $region26: #{tpu_custom_call.1} parent=11 // pred_check_branch
          %325 = sbr.rel (%p323) target = $region28
        $region27: #{tpu_custom_call.1} parent=11 // pred_region
          _
        $region28: #{tpu_custom_call.1} parent=11 // pred_fallthru
          _
        // Predicated region
        $region29: #{tpu_custom_call.1} parent=11 // pred_check
          %p326 = pneg %p157
        $region30: #{tpu_custom_call.1} parent=11 // pred_check_branch
          %328 = sbr.rel (%p326) target = $region32
        $region31: #{tpu_custom_call.1} parent=11 // pred_region
          _
        $region32: #{tpu_custom_call.1} parent=11 // pred_fallthru
          _
        // Predicated region
        $region33: #{tpu_custom_call.1} parent=11 // pred_check
          %p329 = pneg %p178
        $region34: #{tpu_custom_call.1} parent=11 // pred_check_branch
          %331 = sbr.rel (%p329) target = $region36
        $region35: #{tpu_custom_call.1} parent=11 // pred_region
          %333 = vsyncadd [#allocation6], 0
          %s334 = sshll.u32 %s6, 4
          %s335 = int_to_ptr.hbm [resolvable:$true] %s334
          %s336 = sshll.u32 [#allocation7], 4
          %s337 = int_to_ptr.vmem [resolvable:$true] %s336
          %342 = dma.hbm_to_vmem [thread:$0]  %s335, 1536, %s337, [#allocation6], 128, 128, 8
        $region36: #{tpu_custom_call.1} parent=11 // pred_fallthru
          _
        // Predicated region
        $region37: #{tpu_custom_call.1} parent=11 // pred_check
          %p343 = pneg %p199
        $region38: #{tpu_custom_call.1} parent=11 // pred_check_branch
          %345 = sbr.rel (%p343) target = $region40
        $region39: #{tpu_custom_call.1} parent=11 // pred_region
          %347 = vsyncadd [#allocation9], 0
          %s348 = sshll.u32 %s7, 4
          %s349 = int_to_ptr.hbm [resolvable:$true] %s348
          %s350 = sshll.u32 [#allocation8], 4
          %s351 = int_to_ptr.vmem [resolvable:$true] %s350
          %356 = dma.hbm_to_vmem [thread:$0]  %s349, 512, %s351, [#allocation9], 128, 128, 8
        $region40: #{tpu_custom_call.1} parent=11 // pred_fallthru
          _
        // Predicated region
        $region41: #{tpu_custom_call.1} parent=11 // pred_check
          %p357 = pneg %p220
        $region42: #{tpu_custom_call.1} parent=11 // pred_check_branch
          %359 = sbr.rel (%p357) target = $region44
        $region43: #{tpu_custom_call.1} parent=11 // pred_region
          %361 = vsyncadd [#allocation9], 0
          %s362 = sshll.u32 %s8, 4
          %s363 = int_to_ptr.hbm [resolvable:$true] %s362
          %s364 = sshll.u32 [#allocation10], 4
          %s365 = int_to_ptr.vmem [resolvable:$true] %s364
          %370 = dma.hbm_to_vmem [thread:$0]  %s363, 512, %s365, [#allocation9], 128, 128, 8
        $region44: #{tpu_custom_call.1} parent=11 // pred_fallthru
          _
        // Predicated region
        $region45: #{tpu_custom_call.1} parent=11 // pred_check
          %p371 = pneg %p241
        $region46: #{tpu_custom_call.1} parent=11 // pred_check_branch
          %373 = sbr.rel (%p371) target = $region48
        $region47: #{tpu_custom_call.1} parent=11 // pred_region
          _
        $region48: #{tpu_custom_call.1} parent=11 // pred_fallthru
          _
        // Predicated region
        $region49: #{tpu_custom_call.1} parent=11 // pred_check
          %p374 = pneg %p262
        $region50: #{tpu_custom_call.1} parent=11 // pred_check_branch
          %376 = sbr.rel (%p374) target = $region52
        $region51: #{tpu_custom_call.1} parent=11 // pred_region
          %378 = vsyncadd [#allocation12], 0
          %s379 = sshll.u32 %s10, 4
          %s380 = int_to_ptr.hbm [resolvable:$true] %s379
          %s381 = sshll.u32 [#allocation11], 4
          %s382 = int_to_ptr.vmem [resolvable:$true] %s381
          %387 = dma.hbm_to_vmem [thread:$0]  %s380, 512, %s382, [#allocation12], 128, 128, 8
        $region52: #{tpu_custom_call.1} parent=11 // pred_fallthru
          _
      $region12: #{tpu_custom_call.1} parent=5 // pred_fallthru
        _
      %p388 = scmp.lt.s32.totalorder %s26, 2
      // Predicated region
      $region53: #{tpu_custom_call.1} parent=5 // pred_check
        %p389 = pneg %p388
      $region54: #{tpu_custom_call.1} parent=5 // pred_check_branch
        %391 = sbr.rel (%p389) target = $region56
      $region55: #{tpu_custom_call.1} parent=5 // pred_region
        // Predicated region
        $region57: #{tpu_custom_call.1} parent=55 // pred_check
          %p392 = pneg %p46
        $region58: #{tpu_custom_call.1} parent=55 // pred_check_branch
          %394 = sbr.rel (%p392) target = $region60
        $region59: #{tpu_custom_call.1} parent=55 // pred_region
          %s395 = sand.u32 %s36, 1
          %s396 = scalar_lea.sflag [#allocation3], %s395
          %s397 = sand.u32 %s36, 1
          %s398 = smul.addr %s397, 8
          %s399 = scalar_lea.vmem [#allocation2], %s398
          %401 = vsyncadd %s396, 0
          %s402 = smul.addr %s26, 8
          %s403 = scalar_lea.hbm %s0, %s402
          %s405 = sshll.u32 %s403, 4
          %s406 = int_to_ptr.hbm [resolvable:$true] %s405
          %s407 = sshll.u32 %s399, 4
          %s408 = int_to_ptr.vmem [resolvable:$true] %s407
          %410 = dma.hbm_to_vmem [thread:$0]  %s406, 128, %s408, %s396
        $region60: #{tpu_custom_call.1} parent=55 // pred_fallthru
          _
      $region56: #{tpu_custom_call.1} parent=5 // pred_fallthru
        _
      %p411 = scmp.le.s32.totalorder 1, %s26
      %p412 = scmp.lt.s32.totalorder %s26, 3
      %p413 = pnand %p411, %p412
      %p414 = pneg %p413
      // Predicated region
      $region61: #{tpu_custom_call.1} parent=5 // pred_check
        _
      $region62: #{tpu_custom_call.1} parent=5 // pred_check_branch
        %416 = sbr.rel (%p413) target = $region64
      $region63: #{tpu_custom_call.1} parent=5 // pred_region
        %s417 = ssub.s32 %s26, 1
        %s418 = sand.u32 %s39, 1
        %s419 = scalar_lea.sflag [#allocation3], %s418
        %s420 = sand.u32 %s39, 1
        %s421 = smul.addr %s420, 8
        %s422 = scalar_lea.vmem [#allocation2], %s421
        // Predicated region
        $region65: #{tpu_custom_call.1} parent=63 // pred_check
          %p423 = pneg %p52
        $region66: #{tpu_custom_call.1} parent=63 // pred_check_branch
          %425 = sbr.rel (%p423) target = $region68
        $region67: #{tpu_custom_call.1} parent=63 // pred_region
          %427 = dma.done %s419, 128
        $region68: #{tpu_custom_call.1} parent=63 // pred_fallthru
          _
        // Predicated region
        $region69: #{tpu_custom_call.1} parent=63 // pred_check
          %p428 = pneg %p73
        $region70: #{tpu_custom_call.1} parent=63 // pred_check_branch
          %430 = sbr.rel (%p428) target = $region72
        $region71: #{tpu_custom_call.1} parent=63 // pred_region
          %432 = dma.done [#allocation6], 384
        $region72: #{tpu_custom_call.1} parent=63 // pred_fallthru
          _
        // Predicated region
        $region73: #{tpu_custom_call.1} parent=63 // pred_check
          %p433 = pneg %p178
        $region74: #{tpu_custom_call.1} parent=63 // pred_check_branch
          %435 = sbr.rel (%p433) target = $region76
        $region75: #{tpu_custom_call.1} parent=63 // pred_region
          %437 = dma.done [#allocation6], 1536
        $region76: #{tpu_custom_call.1} parent=63 // pred_fallthru
          _
        // Predicated region
        $region77: #{tpu_custom_call.1} parent=63 // pred_check
          %p438 = pneg %p199
        $region78: #{tpu_custom_call.1} parent=63 // pred_check_branch
          %440 = sbr.rel (%p438) target = $region80
        $region79: #{tpu_custom_call.1} parent=63 // pred_region
          %442 = dma.done [#allocation9], 512
        $region80: #{tpu_custom_call.1} parent=63 // pred_fallthru
          _
        // Predicated region
        $region81: #{tpu_custom_call.1} parent=63 // pred_check
          %p443 = pneg %p220
        $region82: #{tpu_custom_call.1} parent=63 // pred_check_branch
          %445 = sbr.rel (%p443) target = $region84
        $region83: #{tpu_custom_call.1} parent=63 // pred_region
          %447 = dma.done [#allocation9], 512
        $region84: #{tpu_custom_call.1} parent=63 // pred_fallthru
          _
        // Predicated region
        $region85: #{tpu_custom_call.1} parent=63 // pred_check
          %p448 = pneg %p262
        $region86: #{tpu_custom_call.1} parent=63 // pred_check_branch
          %450 = sbr.rel (%p448) target = $region88
        $region87: #{tpu_custom_call.1} parent=63 // pred_region
          %452 = dma.done [#allocation12], 512
        $region88: #{tpu_custom_call.1} parent=63 // pred_fallthru
          _
        %s453 = sand.u32 %s39, 1
        %s454 = scalar_lea.sflag [#allocation3], %s453
        %s455 = sand.u32 %s39, 1
        %s456 = smul.addr %s455, 8
        %s457 = scalar_lea.vmem [#allocation2], %s456
        %p458 = pneg %p52
        %p459 = pneg %p49
        %p460 = pneg %p73
        %p461 = pneg %p70
        %p462 = pneg %p94
        %p463 = pneg %p91
        %p464 = pneg %p115
        %p465 = pneg %p112
        %p466 = pneg %p136
        %p467 = pneg %p133
        %p468 = pneg %p157
        %p469 = pneg %p154
        %p470 = pneg %p178
        %p471 = pneg %p175
        %p472 = pneg %p199
        %p473 = pneg %p196
        %p474 = pneg %p220
        %p475 = pneg %p217
        %p476 = pneg %p241
        %p477 = pneg %p238
        %p478 = pneg %p262
        %p479 = pneg %p259
        %p480 = pneg %p288
        %p481 = pneg %p285
        %s482 = sand.u32 %s275, 1
        %s483 = scalar_lea.sflag [#allocation4], %s482
        %s484 = sand.u32 %s275, 1
        %s485 = smul.addr %s484, 8
        %s486 = scalar_lea.vmem [#allocation13], %s485
        %v487 = vld [vmem:[#allocation5] sm:$0xff]
        %v488 = vld [vmem:[#allocation5 + $0x8] sm:$0xff]
        %v489 = vld [vmem:[#allocation5 + $0x10] sm:$0x1f]
        %v490 = vld [vmem:[%s422] sm:$0xff]
        %v491 = vld [vmem:[%s2] sm:$0xff]
        %v492 = vld [vmem:[%s2 + $0x8] sm:$0xff]
        %v493 = vld [vmem:[%s2 + $0x10] sm:$0xff]
        %v494 = vld [vmem:[%s2 + $0x18] sm:$0xff]
        %v495 = vld [vmem:[%s2 + $0x20] sm:$0xff]
        %v496 = vld [vmem:[%s2 + $0x28] sm:$0xff]
        %v497 = vld [vmem:[%s2 + $0x30] sm:$0xff]
        %v498 = vld [vmem:[%s2 + $0x38] sm:$0xff]
        %v499 = vld [vmem:[%s2 + $0x40] sm:$0xff]
        %v500 = vld [vmem:[%s2 + $0x48] sm:$0xff]
        %v501 = vld [vmem:[%s2 + $0x50] sm:$0xff]
        %v502 = vld [vmem:[%s2 + $0x58] sm:$0xff]
        %v503 = vld [vmem:[%s3] sm:$0xff]
        %v504 = vld [vmem:[%s3 + $0x8] sm:$0xff]
        %v505 = vld [vmem:[%s3 + $0x10] sm:$0xff]
        %v506 = vld [vmem:[%s3 + $0x18] sm:$0xff]
        %v507 = vperm.slane %v487, 0
        %vm508 = vcmask 261120
        %v510 = vsel %vm508, %v490, 0
        %512 = vmatpush.msra.mxu0 0.0
        %513 = vmatpush.msra.mxu0 0.0
        %514 = vmatpush.msra.mxu0 0.0
        %515 = vmatpush.msra.mxu0 0.0
        %516 = vmatpush.msra.mxu0 0.0
        %517 = vmatpush.msra.mxu0 0.0
        %518 = vmatpush.msra.mxu0 0.0
        %519 = vmatpush.msra.mxu0 0.0
        %520 = vmatpush.msra.mxu0 0.0
        %521 = vmatpush.msra.mxu0 0.0
        %522 = vmatpush.msra.mxu0 0.0
        %523 = vmatpush.msra.mxu0 0.0
        %524 = vmatpush.msra.mxu0 %v494
        %525 = vmatpush.msra.mxu0 %v493
        %526 = vmatpush.msra.mxu0 %v492
        %527 = vmatpush.msra.mxu0 %v491
        %528 = vmatmul.f32.gmra.mxu0 %v510
        %v529 = vpop.f32.mrf.mxu0
        %v530 = vadd.f32 %v507, %v529
        %531 = vdwg.mxu0
        %v532 = vmul.f32 %v530, 0.35355338
        %v533 = vperm.slane %v487, 1
        %534 = vmatpush.msra.mxu0 0.0
        %535 = vmatpush.msra.mxu0 0.0
        %536 = vmatpush.msra.mxu0 0.0
        %537 = vmatpush.msra.mxu0 0.0
        %538 = vmatpush.msra.mxu0 0.0
        %539 = vmatpush.msra.mxu0 0.0
        %540 = vmatpush.msra.mxu0 0.0
        %541 = vmatpush.msra.mxu0 0.0
        %542 = vmatpush.msra.mxu0 0.0
        %543 = vmatpush.msra.mxu0 0.0
        %544 = vmatpush.msra.mxu0 0.0
        %545 = vmatpush.msra.mxu0 0.0
        %546 = vmatpush.msra.mxu0 %v498
        %547 = vmatpush.msra.mxu0 %v497
        %548 = vmatpush.msra.mxu0 %v496
        %549 = vmatpush.msra.mxu0 %v495
        %550 = vmatmul.f32.gmra.mxu0 %v510
        %v551 = vpop.f32.mrf.mxu0
        %v552 = vadd.f32 %v533, %v551
        %553 = vdwg.mxu0
        %v554 = vperm.slane %v487, 2
        %555 = vmatpush.msra.mxu0 0.0
        %556 = vmatpush.msra.mxu0 0.0
        %557 = vmatpush.msra.mxu0 0.0
        %558 = vmatpush.msra.mxu0 0.0
        %559 = vmatpush.msra.mxu0 0.0
        %560 = vmatpush.msra.mxu0 0.0
        %561 = vmatpush.msra.mxu0 0.0
        %562 = vmatpush.msra.mxu0 0.0
        %563 = vmatpush.msra.mxu0 0.0
        %564 = vmatpush.msra.mxu0 0.0
        %565 = vmatpush.msra.mxu0 0.0
        %566 = vmatpush.msra.mxu0 0.0
        %567 = vmatpush.msra.mxu0 %v502
        %568 = vmatpush.msra.mxu0 %v501
        %569 = vmatpush.msra.mxu0 %v500
        %570 = vmatpush.msra.mxu0 %v499
        %571 = vmatmul.f32.gmra.mxu0 %v510
        %v572 = vpop.f32.mrf.mxu0
        %v573 = vadd.f32 %v554, %v572
        %574 = vdwg.mxu0
        %576 = vrot.lane.b32.xlu0 %v532, 120
        %v577 = vpop.permute.xlu0 %576
        %578 = vrot.lane.b32.xlu0 %v532, 112
        %v579 = vpop.permute.xlu0 %578
        %580 = vrot.lane.b32.xlu0 %v532, 104
        %v581 = vpop.permute.xlu0 %580
        %583 = vrot.lane.b32.xlu0 %v552, 120
        %v584 = vpop.permute.xlu0 %583
        %586 = vrot.lane.b32.xlu0 %v552, 112
        %v587 = vpop.permute.xlu0 %586
        %589 = vrot.lane.b32.xlu0 %v552, 104
        %v590 = vpop.permute.xlu0 %589
        %593 = vrot.lane.b32.xlu0 %v573, 120
        %v594 = vpop.permute.xlu0 %593
        %596 = vrot.lane.b32.xlu0 %v573, 112
        %v597 = vpop.permute.xlu0 %596
        %599 = vrot.lane.b32.xlu0 %v573, 104
        %v600 = vpop.permute.xlu0 %599
        %602 = vxpose.xlu0.b32.start [1/16] %v552, 128
        %603 = vxpose.xlu0.b32.cont [2/16] 0.0, 128
        %604 = vxpose.xlu0.b32.cont [3/16] 0.0, 128
        %605 = vxpose.xlu0.b32.cont [4/16] 0.0, 128
        %606 = vxpose.xlu0.b32.cont [5/16] 0.0, 128
        %607 = vxpose.xlu0.b32.cont [6/16] 0.0, 128
        %608 = vxpose.xlu0.b32.cont [7/16] 0.0, 128
        %609 = vxpose.xlu0.b32.cont [8/16] 0.0, 128
        %610 = vxpose.xlu0.b32.cont [9/16] 0.0, 128
        %611 = vxpose.xlu0.b32.cont [10/16] 0.0, 128
        %612 = vxpose.xlu0.b32.cont [11/16] 0.0, 128
        %613 = vxpose.xlu0.b32.cont [12/16] 0.0, 128
        %614 = vxpose.xlu0.b32.cont [13/16] 0.0, 128
        %615 = vxpose.xlu0.b32.cont [14/16] 0.0, 128
        %616 = vxpose.xlu0.b32.cont [15/16] 0.0, 128
        %617 = vxpose.xlu0.b32.end [16/16] 0.0, 128
        %v618 = vpop.trf.xlu0
        %v619 = vpop.trf.xlu0
        %v620 = vpop.trf.xlu0
        %v621 = vpop.trf.xlu0
        %v622 = vpop.trf.xlu0
        %v623 = vpop.trf.xlu0
        %v624 = vpop.trf.xlu0
        %v625 = vpop.trf.xlu0
        %v626 = vpop.trf.xlu0
        %v627 = vpop.trf.xlu0
        %v628 = vpop.trf.xlu0
        %v629 = vpop.trf.xlu0
        %v630 = vpop.trf.xlu0
        %v631 = vpop.trf.xlu0
        %v632 = vpop.trf.xlu0
        %v633 = vpop.trf.xlu0
        %634 = vxpose.xlu0.b32.start [1/16] %v584, 128
        %635 = vxpose.xlu0.b32.cont [2/16] 0.0, 128
        %636 = vxpose.xlu0.b32.cont [3/16] 0.0, 128
        %637 = vxpose.xlu0.b32.cont [4/16] 0.0, 128
        %638 = vxpose.xlu0.b32.cont [5/16] 0.0, 128
        %639 = vxpose.xlu0.b32.cont [6/16] 0.0, 128
        %640 = vxpose.xlu0.b32.cont [7/16] 0.0, 128
        %641 = vxpose.xlu0.b32.cont [8/16] 0.0, 128
        %642 = vxpose.xlu0.b32.cont [9/16] 0.0, 128
        %643 = vxpose.xlu0.b32.cont [10/16] 0.0, 128
        %644 = vxpose.xlu0.b32.cont [11/16] 0.0, 128
        %645 = vxpose.xlu0.b32.cont [12/16] 0.0, 128
        %646 = vxpose.xlu0.b32.cont [13/16] 0.0, 128
        %647 = vxpose.xlu0.b32.cont [14/16] 0.0, 128
        %648 = vxpose.xlu0.b32.cont [15/16] 0.0, 128
        %649 = vxpose.xlu0.b32.end [16/16] 0.0, 128
        %v650 = vpop.trf.xlu0
        %v651 = vpop.trf.xlu0
        %v652 = vpop.trf.xlu0
        %v653 = vpop.trf.xlu0
        %v654 = vpop.trf.xlu0
        %v655 = vpop.trf.xlu0
        %v656 = vpop.trf.xlu0
        %v657 = vpop.trf.xlu0
        %v658 = vpop.trf.xlu0
        %v659 = vpop.trf.xlu0
        %v660 = vpop.trf.xlu0
        %v661 = vpop.trf.xlu0
        %v662 = vpop.trf.xlu0
        %v663 = vpop.trf.xlu0
        %v664 = vpop.trf.xlu0
        %v665 = vpop.trf.xlu0
        %666 = vxpose.xlu0.b32.start [1/16] %v587, 128
        %667 = vxpose.xlu0.b32.cont [2/16] 0.0, 128
        %668 = vxpose.xlu0.b32.cont [3/16] 0.0, 128
        %669 = vxpose.xlu0.b32.cont [4/16] 0.0, 128
        %670 = vxpose.xlu0.b32.cont [5/16] 0.0, 128
        %671 = vxpose.xlu0.b32.cont [6/16] 0.0, 128
        %672 = vxpose.xlu0.b32.cont [7/16] 0.0, 128
        %673 = vxpose.xlu0.b32.cont [8/16] 0.0, 128
        %674 = vxpose.xlu0.b32.cont [9/16] 0.0, 128
        %675 = vxpose.xlu0.b32.cont [10/16] 0.0, 128
        %676 = vxpose.xlu0.b32.cont [11/16] 0.0, 128
        %677 = vxpose.xlu0.b32.cont [12/16] 0.0, 128
        %678 = vxpose.xlu0.b32.cont [13/16] 0.0, 128
        %679 = vxpose.xlu0.b32.cont [14/16] 0.0, 128
        %680 = vxpose.xlu0.b32.cont [15/16] 0.0, 128
        %681 = vxpose.xlu0.b32.end [16/16] 0.0, 128
        %v682 = vpop.trf.xlu0
        %v683 = vpop.trf.xlu0
        %v684 = vpop.trf.xlu0
        %v685 = vpop.trf.xlu0
        %v686 = vpop.trf.xlu0
        %v687 = vpop.trf.xlu0
        %v688 = vpop.trf.xlu0
        %v689 = vpop.trf.xlu0
        %v690 = vpop.trf.xlu0
        %v691 = vpop.trf.xlu0
        %v692 = vpop.trf.xlu0
        %v693 = vpop.trf.xlu0
        %v694 = vpop.trf.xlu0
        %v695 = vpop.trf.xlu0
        %v696 = vpop.trf.xlu0
        %v697 = vpop.trf.xlu0
        %698 = vxpose.xlu0.b32.start [1/16] %v590, 128
        %699 = vxpose.xlu0.b32.cont [2/16] 0.0, 128
        %700 = vxpose.xlu0.b32.cont [3/16] 0.0, 128
        %701 = vxpose.xlu0.b32.cont [4/16] 0.0, 128
        %702 = vxpose.xlu0.b32.cont [5/16] 0.0, 128
        %703 = vxpose.xlu0.b32.cont [6/16] 0.0, 128
        %704 = vxpose.xlu0.b32.cont [7/16] 0.0, 128
        %705 = vxpose.xlu0.b32.cont [8/16] 0.0, 128
        %706 = vxpose.xlu0.b32.cont [9/16] 0.0, 128
        %707 = vxpose.xlu0.b32.cont [10/16] 0.0, 128
        %708 = vxpose.xlu0.b32.cont [11/16] 0.0, 128
        %709 = vxpose.xlu0.b32.cont [12/16] 0.0, 128
        %710 = vxpose.xlu0.b32.cont [13/16] 0.0, 128
        %711 = vxpose.xlu0.b32.cont [14/16] 0.0, 128
        %712 = vxpose.xlu0.b32.cont [15/16] 0.0, 128
        %713 = vxpose.xlu0.b32.end [16/16] 0.0, 128
        %v714 = vpop.trf.xlu0
        %v715 = vpop.trf.xlu0
        %v716 = vpop.trf.xlu0
        %v717 = vpop.trf.xlu0
        %v718 = vpop.trf.xlu0
        %v719 = vpop.trf.xlu0
        %v720 = vpop.trf.xlu0
        %v721 = vpop.trf.xlu0
        %v722 = vpop.trf.xlu0
        %v723 = vpop.trf.xlu0
        %v724 = vpop.trf.xlu0
        %v725 = vpop.trf.xlu0
        %v726 = vpop.trf.xlu0
        %v727 = vpop.trf.xlu0
        %v728 = vpop.trf.xlu0
        %v729 = vpop.trf.xlu0
        %vm730 = vcmask 64512
        %v731 = vsel %vm730, %v532, 0
        %733 = vmatpush.msra.mxu0 0.0
        %734 = vmatpush.msra.mxu0 0.0
        %735 = vmatpush.msra.mxu0 0.0
        %736 = vmatpush.msra.mxu0 0.0
        %737 = vmatpush.msra.mxu0 0.0
        %738 = vmatpush.msra.mxu0 0.0
        %739 = vmatpush.msra.mxu0 0.0
        %740 = vmatpush.msra.mxu0 0.0
        %741 = vmatpush.msra.mxu0 0.0
        %742 = vmatpush.msra.mxu0 0.0
        %743 = vmatpush.msra.mxu0 0.0
        %744 = vmatpush.msra.mxu0 0.0
        %745 = vmatpush.msra.mxu0 0.0
        %746 = vmatpush.msra.mxu0 0.0
        %747 = vmatpush.msra.mxu0 0.0
        %748 = vmatpush.msra.mxu0 %v618
        %749 = vmatmul.f32.gmra.mxu0 %v731
        %v750 = vpop.f32.mrf.mxu0
        %v751 = vadd.f32 0.0, %v750
        %752 = vdwg.mxu0
        %v753 = vsel %vm730, %v577, 0
        %755 = vmatpush.msra.mxu0 0.0
        %756 = vmatpush.msra.mxu0 0.0
        %757 = vmatpush.msra.mxu0 0.0
        %758 = vmatpush.msra.mxu0 0.0
        %759 = vmatpush.msra.mxu0 0.0
        %760 = vmatpush.msra.mxu0 0.0
        %761 = vmatpush.msra.mxu0 0.0
        %762 = vmatpush.msra.mxu0 0.0
        %763 = vmatpush.msra.mxu0 0.0
        %764 = vmatpush.msra.mxu0 0.0
        %765 = vmatpush.msra.mxu0 0.0
        %766 = vmatpush.msra.mxu0 0.0
        %767 = vmatpush.msra.mxu0 0.0
        %768 = vmatpush.msra.mxu0 0.0
        %769 = vmatpush.msra.mxu0 0.0
        %770 = vmatpush.msra.mxu0 %v650
        %771 = vmatmul.f32.gmra.mxu0 %v753
        %v772 = vpop.f32.mrf.mxu0
        %v773 = vadd.f32 0.0, %v772
        %774 = vdwg.mxu0
        %v775 = vsel %vm730, %v579, 0
        %777 = vmatpush.msra.mxu0 0.0
        %778 = vmatpush.msra.mxu0 0.0
        %779 = vmatpush.msra.mxu0 0.0
        %780 = vmatpush.msra.mxu0 0.0
        %781 = vmatpush.msra.mxu0 0.0
        %782 = vmatpush.msra.mxu0 0.0
        %783 = vmatpush.msra.mxu0 0.0
        %784 = vmatpush.msra.mxu0 0.0
        %785 = vmatpush.msra.mxu0 0.0
        %786 = vmatpush.msra.mxu0 0.0
        %787 = vmatpush.msra.mxu0 0.0
        %788 = vmatpush.msra.mxu0 0.0
        %789 = vmatpush.msra.mxu0 0.0
        %790 = vmatpush.msra.mxu0 0.0
        %791 = vmatpush.msra.mxu0 0.0
        %792 = vmatpush.msra.mxu0 %v682
        %793 = vmatmul.f32.gmra.mxu0 %v775
        %v794 = vpop.f32.mrf.mxu0
        %v795 = vadd.f32 0.0, %v794
        %796 = vdwg.mxu0
        %v797 = vsel %vm730, %v581, 0
        %799 = vmatpush.msra.mxu0 0.0
        %800 = vmatpush.msra.mxu0 0.0
        %801 = vmatpush.msra.mxu0 0.0
        %802 = vmatpush.msra.mxu0 0.0
        %803 = vmatpush.msra.mxu0 0.0
        %804 = vmatpush.msra.mxu0 0.0
        %805 = vmatpush.msra.mxu0 0.0
        %806 = vmatpush.msra.mxu0 0.0
        %807 = vmatpush.msra.mxu0 0.0
        %808 = vmatpush.msra.mxu0 0.0
        %809 = vmatpush.msra.mxu0 0.0
        %810 = vmatpush.msra.mxu0 0.0
        %811 = vmatpush.msra.mxu0 0.0
        %812 = vmatpush.msra.mxu0 0.0
        %813 = vmatpush.msra.mxu0 0.0
        %814 = vmatpush.msra.mxu0 %v714
        %815 = vmatmul.f32.gmra.mxu0 %v797
        %v816 = vpop.f32.mrf.mxu0
        %v817 = vadd.f32 0.0, %v816
        %818 = vdwg.mxu0
        %v819 = vsel %vm730, %v751, -inf
        %820 = vmax.xlane.f32.xlu0 %v819
        %v821 = vpop.xlane.xlu0 %820
        %v822 = vsel %vm730, %v773, -inf
        %823 = vmax.xlane.f32.xlu0 %v822
        %v824 = vpop.xlane.xlu0 %823
        %v825 = vsel %vm730, %v795, -inf
        %826 = vmax.xlane.f32.xlu0 %v825
        %v827 = vpop.xlane.xlu0 %826
        %v828 = vsel %vm730, %v817, -inf
        %829 = vmax.xlane.f32.xlu0 %v828
        %v830 = vpop.xlane.xlu0 %829
        %v831 = vsub.f32 %v751, %v821
        %v832 = vsub.f32 %v773, %v824
        %v833 = vsub.f32 %v795, %v827
        %v834 = vsub.f32 %v817, %v830
        %v835 = vmul.f32 %v831, 1.442695
        %v836 = vpow.pop %v835
        %v837 = vmul.f32 %v832, 1.442695
        %v838 = vpow.pop %v837
        %v839 = vmul.f32 %v833, 1.442695
        %v840 = vpow.pop %v839
        %v841 = vmul.f32 %v834, 1.442695
        %v842 = vpow.pop %v841
        %v843 = vsel %vm730, %v836, 0.0
        %844 = vadd.xlane.f32.xlu0 %v843
        %v845 = vpop.xlane.xlu0 %844
        %v846 = vsel %vm730, %v838, 0.0
        %847 = vadd.xlane.f32.xlu0 %v846
        %v848 = vpop.xlane.xlu0 %847
        %v849 = vsel %vm730, %v840, 0.0
        %850 = vadd.xlane.f32.xlu0 %v849
        %v851 = vpop.xlane.xlu0 %850
        %v852 = vsel %vm730, %v842, 0.0
        %853 = vadd.xlane.f32.xlu0 %v852
        %v854 = vpop.xlane.xlu0 %853
        %v855 = vrcp.pop %v845
        %v856 = vmul.f32 %v845, %v855
        %v857 = vsub.f32 1.0, %v856
        %v858 = vmul.f32 %v855, %v857
        %v859 = vadd.f32 %v855, %v858
        %vm860 = vweird.f32 %v845
        %vm861 = vweird.f32 %v855
        %vm862 = vmor %vm860, %vm861
        %v863 = vsel %vm862, %v855, %v859
        %v864 = vand.u32 2147483647, %v845
        %vm865 = vcmp.eq.f32.partialorder %v864, 8.507059e+37
        %v866 = vand.u32 %v845, 2147483648
        %v867 = vor.u32 1.1754944e-38, %v866
        %v868 = vsel %vm865, %v867, %v863
        %v869 = vmul.f32 %v836, %v868
        %v870 = vrcp.pop %v848
        %v871 = vmul.f32 %v848, %v870
        %v872 = vsub.f32 1.0, %v871
        %v873 = vmul.f32 %v870, %v872
        %v874 = vadd.f32 %v870, %v873
        %vm875 = vweird.f32 %v848
        %vm876 = vweird.f32 %v870
        %vm877 = vmor %vm875, %vm876
        %v878 = vsel %vm877, %v870, %v874
        %v879 = vand.u32 2147483647, %v848
        %vm880 = vcmp.eq.f32.partialorder %v879, 8.507059e+37
        %v881 = vand.u32 %v848, 2147483648
        %v882 = vor.u32 1.1754944e-38, %v881
        %v883 = vsel %vm880, %v882, %v878
        %v884 = vmul.f32 %v838, %v883
        %v885 = vrcp.pop %v851
        %v886 = vmul.f32 %v851, %v885
        %v887 = vsub.f32 1.0, %v886
        %v888 = vmul.f32 %v885, %v887
        %v889 = vadd.f32 %v885, %v888
        %vm890 = vweird.f32 %v851
        %vm891 = vweird.f32 %v885
        %vm892 = vmor %vm890, %vm891
        %v893 = vsel %vm892, %v885, %v889
        %v894 = vand.u32 2147483647, %v851
        %vm895 = vcmp.eq.f32.partialorder %v894, 8.507059e+37
        %v896 = vand.u32 %v851, 2147483648
        %v897 = vor.u32 1.1754944e-38, %v896
        %v898 = vsel %vm895, %v897, %v893
        %v899 = vmul.f32 %v840, %v898
        %v900 = vrcp.pop %v854
        %v901 = vmul.f32 %v854, %v900
        %v902 = vsub.f32 1.0, %v901
        %v903 = vmul.f32 %v900, %v902
        %v904 = vadd.f32 %v900, %v903
        %vm905 = vweird.f32 %v854
        %vm906 = vweird.f32 %v900
        %vm907 = vmor %vm905, %vm906
        %v908 = vsel %vm907, %v900, %v904
        %v909 = vand.u32 2147483647, %v854
        %vm910 = vcmp.eq.f32.partialorder %v909, 8.507059e+37
        %v911 = vand.u32 %v854, 2147483648
        %v912 = vor.u32 1.1754944e-38, %v911
        %v913 = vsel %vm910, %v912, %v908
        %v914 = vmul.f32 %v842, %v913
        %915 = vxpose.xlu0.b32.start [1/16] %v573, 128
        %916 = vxpose.xlu0.b32.cont [2/16] 0.0, 128
        %917 = vxpose.xlu0.b32.cont [3/16] 0.0, 128
        %918 = vxpose.xlu0.b32.cont [4/16] 0.0, 128
        %919 = vxpose.xlu0.b32.cont [5/16] 0.0, 128
        %920 = vxpose.xlu0.b32.cont [6/16] 0.0, 128
        %921 = vxpose.xlu0.b32.cont [7/16] 0.0, 128
        %922 = vxpose.xlu0.b32.cont [8/16] 0.0, 128
        %923 = vxpose.xlu0.b32.cont [9/16] 0.0, 128
        %924 = vxpose.xlu0.b32.cont [10/16] 0.0, 128
        %925 = vxpose.xlu0.b32.cont [11/16] 0.0, 128
        %926 = vxpose.xlu0.b32.cont [12/16] 0.0, 128
        %927 = vxpose.xlu0.b32.cont [13/16] 0.0, 128
        %928 = vxpose.xlu0.b32.cont [14/16] 0.0, 128
        %929 = vxpose.xlu0.b32.cont [15/16] 0.0, 128
        %930 = vxpose.xlu0.b32.end [16/16] 0.0, 128
        %v931 = vpop.trf.xlu0
        %v932 = vpop.trf.xlu0
        %v933 = vpop.trf.xlu0
        %v934 = vpop.trf.xlu0
        %v935 = vpop.trf.xlu0
        %v936 = vpop.trf.xlu0
        %v937 = vpop.trf.xlu0
        %v938 = vpop.trf.xlu0
        %v939 = vpop.trf.xlu0
        %v940 = vpop.trf.xlu0
        %v941 = vpop.trf.xlu0
        %v942 = vpop.trf.xlu0
        %v943 = vpop.trf.xlu0
        %v944 = vpop.trf.xlu0
        %v945 = vpop.trf.xlu0
        %v946 = vpop.trf.xlu0
        %947 = vxpose.xlu0.b32.start [1/16] %v594, 128
        %948 = vxpose.xlu0.b32.cont [2/16] 0.0, 128
        %949 = vxpose.xlu0.b32.cont [3/16] 0.0, 128
        %950 = vxpose.xlu0.b32.cont [4/16] 0.0, 128
        %951 = vxpose.xlu0.b32.cont [5/16] 0.0, 128
        %952 = vxpose.xlu0.b32.cont [6/16] 0.0, 128
        %953 = vxpose.xlu0.b32.cont [7/16] 0.0, 128
        %954 = vxpose.xlu0.b32.cont [8/16] 0.0, 128
        %955 = vxpose.xlu0.b32.cont [9/16] 0.0, 128
        %956 = vxpose.xlu0.b32.cont [10/16] 0.0, 128
        %957 = vxpose.xlu0.b32.cont [11/16] 0.0, 128
        %958 = vxpose.xlu0.b32.cont [12/16] 0.0, 128
        %959 = vxpose.xlu0.b32.cont [13/16] 0.0, 128
        %960 = vxpose.xlu0.b32.cont [14/16] 0.0, 128
        %961 = vxpose.xlu0.b32.cont [15/16] 0.0, 128
        %962 = vxpose.xlu0.b32.end [16/16] 0.0, 128
        %v963 = vpop.trf.xlu0
        %v964 = vpop.trf.xlu0
        %v965 = vpop.trf.xlu0
        %v966 = vpop.trf.xlu0
        %v967 = vpop.trf.xlu0
        %v968 = vpop.trf.xlu0
        %v969 = vpop.trf.xlu0
        %v970 = vpop.trf.xlu0
        %v971 = vpop.trf.xlu0
        %v972 = vpop.trf.xlu0
        %v973 = vpop.trf.xlu0
        %v974 = vpop.trf.xlu0
        %v975 = vpop.trf.xlu0
        %v976 = vpop.trf.xlu0
        %v977 = vpop.trf.xlu0
        %v978 = vpop.trf.xlu0
        %979 = vxpose.xlu0.b32.start [1/16] %v597, 128
        %980 = vxpose.xlu0.b32.cont [2/16] 0.0, 128
        %981 = vxpose.xlu0.b32.cont [3/16] 0.0, 128
        %982 = vxpose.xlu0.b32.cont [4/16] 0.0, 128
        %983 = vxpose.xlu0.b32.cont [5/16] 0.0, 128
        %984 = vxpose.xlu0.b32.cont [6/16] 0.0, 128
        %985 = vxpose.xlu0.b32.cont [7/16] 0.0, 128
        %986 = vxpose.xlu0.b32.cont [8/16] 0.0, 128
        %987 = vxpose.xlu0.b32.cont [9/16] 0.0, 128
        %988 = vxpose.xlu0.b32.cont [10/16] 0.0, 128
        %989 = vxpose.xlu0.b32.cont [11/16] 0.0, 128
        %990 = vxpose.xlu0.b32.cont [12/16] 0.0, 128
        %991 = vxpose.xlu0.b32.cont [13/16] 0.0, 128
        %992 = vxpose.xlu0.b32.cont [14/16] 0.0, 128
        %993 = vxpose.xlu0.b32.cont [15/16] 0.0, 128
        %994 = vxpose.xlu0.b32.end [16/16] 0.0, 128
        %v995 = vpop.trf.xlu0
        %v996 = vpop.trf.xlu0
        %v997 = vpop.trf.xlu0
        %v998 = vpop.trf.xlu0
        %v999 = vpop.trf.xlu0
        %v1000 = vpop.trf.xlu0
        %v1001 = vpop.trf.xlu0
        %v1002 = vpop.trf.xlu0
        %v1003 = vpop.trf.xlu0
        %v1004 = vpop.trf.xlu0
        %v1005 = vpop.trf.xlu0
        %v1006 = vpop.trf.xlu0
        %v1007 = vpop.trf.xlu0
        %v1008 = vpop.trf.xlu0
        %v1009 = vpop.trf.xlu0
        %v1010 = vpop.trf.xlu0
        %1011 = vxpose.xlu0.b32.start [1/16] %v600, 128
        %1012 = vxpose.xlu0.b32.cont [2/16] 0.0, 128
        %1013 = vxpose.xlu0.b32.cont [3/16] 0.0, 128
        %1014 = vxpose.xlu0.b32.cont [4/16] 0.0, 128
        %1015 = vxpose.xlu0.b32.cont [5/16] 0.0, 128
        %1016 = vxpose.xlu0.b32.cont [6/16] 0.0, 128
        %1017 = vxpose.xlu0.b32.cont [7/16] 0.0, 128
        %1018 = vxpose.xlu0.b32.cont [8/16] 0.0, 128
        %1019 = vxpose.xlu0.b32.cont [9/16] 0.0, 128
        %1020 = vxpose.xlu0.b32.cont [10/16] 0.0, 128
        %1021 = vxpose.xlu0.b32.cont [11/16] 0.0, 128
        %1022 = vxpose.xlu0.b32.cont [12/16] 0.0, 128
        %1023 = vxpose.xlu0.b32.cont [13/16] 0.0, 128
        %1024 = vxpose.xlu0.b32.cont [14/16] 0.0, 128
        %1025 = vxpose.xlu0.b32.cont [15/16] 0.0, 128
        %1026 = vxpose.xlu0.b32.end [16/16] 0.0, 128
        %v1027 = vpop.trf.xlu0
        %v1028 = vpop.trf.xlu0
        %v1029 = vpop.trf.xlu0
        %v1030 = vpop.trf.xlu0
        %v1031 = vpop.trf.xlu0
        %v1032 = vpop.trf.xlu0
        %v1033 = vpop.trf.xlu0
        %v1034 = vpop.trf.xlu0
        %v1035 = vpop.trf.xlu0
        %v1036 = vpop.trf.xlu0
        %v1037 = vpop.trf.xlu0
        %v1038 = vpop.trf.xlu0
        %v1039 = vpop.trf.xlu0
        %v1040 = vpop.trf.xlu0
        %v1041 = vpop.trf.xlu0
        %v1042 = vpop.trf.xlu0
        %v1044 = vsel %vm730, %v931, 0
        %v1047 = vsel %vm730, %v869, 0
        %1049 = vmatpush.xpose.msra.mxu0 0.0
        %1050 = vmatpush.xpose.msra.mxu0 0.0
        %1051 = vmatpush.xpose.msra.mxu0 0.0
        %1052 = vmatpush.xpose.msra.mxu0 0.0
        %1053 = vmatpush.xpose.msra.mxu0 0.0
        %1054 = vmatpush.xpose.msra.mxu0 0.0
        %1055 = vmatpush.xpose.msra.mxu0 0.0
        %1056 = vmatpush.xpose.msra.mxu0 0.0
        %1057 = vmatpush.xpose.msra.mxu0 0.0
        %1058 = vmatpush.xpose.msra.mxu0 0.0
        %1059 = vmatpush.xpose.msra.mxu0 0.0
        %1060 = vmatpush.xpose.msra.mxu0 0.0
        %1061 = vmatpush.xpose.msra.mxu0 0.0
        %1062 = vmatpush.xpose.msra.mxu0 0.0
        %1063 = vmatpush.xpose.msra.mxu0 0.0
        %1064 = vmatpush.xpose.msra.mxu0 %v1047
        %1065 = vmatmul.f32.gmra.mxu0 %v1044
        %v1066 = vpop.f32.mrf.mxu0
        %v1067 = vadd.f32 0.0, %v1066
        %1068 = vdwg.mxu0
        %v1070 = vsel %vm730, %v963, 0
        %v1073 = vsel %vm730, %v884, 0
        %1075 = vmatpush.xpose.msra.mxu0 0.0
        %1076 = vmatpush.xpose.msra.mxu0 0.0
        %1077 = vmatpush.xpose.msra.mxu0 0.0
        %1078 = vmatpush.xpose.msra.mxu0 0.0
        %1079 = vmatpush.xpose.msra.mxu0 0.0
        %1080 = vmatpush.xpose.msra.mxu0 0.0
        %1081 = vmatpush.xpose.msra.mxu0 0.0
        %1082 = vmatpush.xpose.msra.mxu0 0.0
        %1083 = vmatpush.xpose.msra.mxu0 0.0
        %1084 = vmatpush.xpose.msra.mxu0 0.0
        %1085 = vmatpush.xpose.msra.mxu0 0.0
        %1086 = vmatpush.xpose.msra.mxu0 0.0
        %1087 = vmatpush.xpose.msra.mxu0 0.0
        %1088 = vmatpush.xpose.msra.mxu0 0.0
        %1089 = vmatpush.xpose.msra.mxu0 0.0
        %1090 = vmatpush.xpose.msra.mxu0 %v1073
        %1091 = vmatmul.f32.gmra.mxu0 %v1070
        %v1092 = vpop.f32.mrf.mxu0
        %v1093 = vadd.f32 0.0, %v1092
        %1094 = vdwg.mxu0
        %v1096 = vsel %vm730, %v995, 0
        %v1099 = vsel %vm730, %v899, 0
        %1101 = vmatpush.xpose.msra.mxu0 0.0
        %1102 = vmatpush.xpose.msra.mxu0 0.0
        %1103 = vmatpush.xpose.msra.mxu0 0.0
        %1104 = vmatpush.xpose.msra.mxu0 0.0
        %1105 = vmatpush.xpose.msra.mxu0 0.0
        %1106 = vmatpush.xpose.msra.mxu0 0.0
        %1107 = vmatpush.xpose.msra.mxu0 0.0
        %1108 = vmatpush.xpose.msra.mxu0 0.0
        %1109 = vmatpush.xpose.msra.mxu0 0.0
        %1110 = vmatpush.xpose.msra.mxu0 0.0
        %1111 = vmatpush.xpose.msra.mxu0 0.0
        %1112 = vmatpush.xpose.msra.mxu0 0.0
        %1113 = vmatpush.xpose.msra.mxu0 0.0
        %1114 = vmatpush.xpose.msra.mxu0 0.0
        %1115 = vmatpush.xpose.msra.mxu0 0.0
        %1116 = vmatpush.xpose.msra.mxu0 %v1099
        %1117 = vmatmul.f32.gmra.mxu0 %v1096
        %v1118 = vpop.f32.mrf.mxu0
        %v1119 = vadd.f32 0.0, %v1118
        %1120 = vdwg.mxu0
        %v1122 = vsel %vm730, %v1027, 0
        %v1125 = vsel %vm730, %v914, 0
        %1127 = vmatpush.xpose.msra.mxu0 0.0
        %1128 = vmatpush.xpose.msra.mxu0 0.0
        %1129 = vmatpush.xpose.msra.mxu0 0.0
        %1130 = vmatpush.xpose.msra.mxu0 0.0
        %1131 = vmatpush.xpose.msra.mxu0 0.0
        %1132 = vmatpush.xpose.msra.mxu0 0.0
        %1133 = vmatpush.xpose.msra.mxu0 0.0
        %1134 = vmatpush.xpose.msra.mxu0 0.0
        %1135 = vmatpush.xpose.msra.mxu0 0.0
        %1136 = vmatpush.xpose.msra.mxu0 0.0
        %1137 = vmatpush.xpose.msra.mxu0 0.0
        %1138 = vmatpush.xpose.msra.mxu0 0.0
        %1139 = vmatpush.xpose.msra.mxu0 0.0
        %1140 = vmatpush.xpose.msra.mxu0 0.0
        %1141 = vmatpush.xpose.msra.mxu0 0.0
        %1142 = vmatpush.xpose.msra.mxu0 %v1125
        %1143 = vmatmul.f32.gmra.mxu0 %v1122
        %v1144 = vpop.f32.mrf.mxu0
        %v1145 = vadd.f32 0.0, %v1144
        %1146 = vdwg.mxu0
        %1147 = vxpose.xlu0.b32.start [1/16] %v1067, 128
        %1148 = vxpose.xlu0.b32.cont [2/16] 0.0, 128
        %1149 = vxpose.xlu0.b32.cont [3/16] 0.0, 128
        %1150 = vxpose.xlu0.b32.cont [4/16] 0.0, 128
        %1151 = vxpose.xlu0.b32.cont [5/16] 0.0, 128
        %1152 = vxpose.xlu0.b32.cont [6/16] 0.0, 128
        %1153 = vxpose.xlu0.b32.cont [7/16] 0.0, 128
        %1154 = vxpose.xlu0.b32.cont [8/16] 0.0, 128
        %1155 = vxpose.xlu0.b32.cont [9/16] 0.0, 128
        %1156 = vxpose.xlu0.b32.cont [10/16] 0.0, 128
        %1157 = vxpose.xlu0.b32.cont [11/16] 0.0, 128
        %1158 = vxpose.xlu0.b32.cont [12/16] 0.0, 128
        %1159 = vxpose.xlu0.b32.cont [13/16] 0.0, 128
        %1160 = vxpose.xlu0.b32.cont [14/16] 0.0, 128
        %1161 = vxpose.xlu0.b32.cont [15/16] 0.0, 128
        %1162 = vxpose.xlu0.b32.end [16/16] 0.0, 128
        %v1163 = vpop.trf.xlu0
        %v1164 = vpop.trf.xlu0
        %v1165 = vpop.trf.xlu0
        %v1166 = vpop.trf.xlu0
        %v1167 = vpop.trf.xlu0
        %v1168 = vpop.trf.xlu0
        %v1169 = vpop.trf.xlu0
        %v1170 = vpop.trf.xlu0
        %v1171 = vpop.trf.xlu0
        %v1172 = vpop.trf.xlu0
        %v1173 = vpop.trf.xlu0
        %v1174 = vpop.trf.xlu0
        %v1175 = vpop.trf.xlu0
        %v1176 = vpop.trf.xlu0
        %v1177 = vpop.trf.xlu0
        %v1178 = vpop.trf.xlu0
        %1179 = vxpose.xlu0.b32.start [1/16] %v1093, 128
        %1180 = vxpose.xlu0.b32.cont [2/16] 0.0, 128
        %1181 = vxpose.xlu0.b32.cont [3/16] 0.0, 128
        %1182 = vxpose.xlu0.b32.cont [4/16] 0.0, 128
        %1183 = vxpose.xlu0.b32.cont [5/16] 0.0, 128
        %1184 = vxpose.xlu0.b32.cont [6/16] 0.0, 128
        %1185 = vxpose.xlu0.b32.cont [7/16] 0.0, 128
        %1186 = vxpose.xlu0.b32.cont [8/16] 0.0, 128
        %1187 = vxpose.xlu0.b32.cont [9/16] 0.0, 128
        %1188 = vxpose.xlu0.b32.cont [10/16] 0.0, 128
        %1189 = vxpose.xlu0.b32.cont [11/16] 0.0, 128
        %1190 = vxpose.xlu0.b32.cont [12/16] 0.0, 128
        %1191 = vxpose.xlu0.b32.cont [13/16] 0.0, 128
        %1192 = vxpose.xlu0.b32.cont [14/16] 0.0, 128
        %1193 = vxpose.xlu0.b32.cont [15/16] 0.0, 128
        %1194 = vxpose.xlu0.b32.end [16/16] 0.0, 128
        %v1195 = vpop.trf.xlu0
        %v1196 = vpop.trf.xlu0
        %v1197 = vpop.trf.xlu0
        %v1198 = vpop.trf.xlu0
        %v1199 = vpop.trf.xlu0
        %v1200 = vpop.trf.xlu0
        %v1201 = vpop.trf.xlu0
        %v1202 = vpop.trf.xlu0
        %v1203 = vpop.trf.xlu0
        %v1204 = vpop.trf.xlu0
        %v1205 = vpop.trf.xlu0
        %v1206 = vpop.trf.xlu0
        %v1207 = vpop.trf.xlu0
        %v1208 = vpop.trf.xlu0
        %v1209 = vpop.trf.xlu0
        %v1210 = vpop.trf.xlu0
        %1211 = vxpose.xlu0.b32.start [1/16] %v1119, 128
        %1212 = vxpose.xlu0.b32.cont [2/16] 0.0, 128
        %1213 = vxpose.xlu0.b32.cont [3/16] 0.0, 128
        %1214 = vxpose.xlu0.b32.cont [4/16] 0.0, 128
        %1215 = vxpose.xlu0.b32.cont [5/16] 0.0, 128
        %1216 = vxpose.xlu0.b32.cont [6/16] 0.0, 128
        %1217 = vxpose.xlu0.b32.cont [7/16] 0.0, 128
        %1218 = vxpose.xlu0.b32.cont [8/16] 0.0, 128
        %1219 = vxpose.xlu0.b32.cont [9/16] 0.0, 128
        %1220 = vxpose.xlu0.b32.cont [10/16] 0.0, 128
        %1221 = vxpose.xlu0.b32.cont [11/16] 0.0, 128
        %1222 = vxpose.xlu0.b32.cont [12/16] 0.0, 128
        %1223 = vxpose.xlu0.b32.cont [13/16] 0.0, 128
        %1224 = vxpose.xlu0.b32.cont [14/16] 0.0, 128
        %1225 = vxpose.xlu0.b32.cont [15/16] 0.0, 128
        %1226 = vxpose.xlu0.b32.end [16/16] 0.0, 128
        %v1227 = vpop.trf.xlu0
        %v1228 = vpop.trf.xlu0
        %v1229 = vpop.trf.xlu0
        %v1230 = vpop.trf.xlu0
        %v1231 = vpop.trf.xlu0
        %v1232 = vpop.trf.xlu0
        %v1233 = vpop.trf.xlu0
        %v1234 = vpop.trf.xlu0
        %v1235 = vpop.trf.xlu0
        %v1236 = vpop.trf.xlu0
        %v1237 = vpop.trf.xlu0
        %v1238 = vpop.trf.xlu0
        %v1239 = vpop.trf.xlu0
        %v1240 = vpop.trf.xlu0
        %v1241 = vpop.trf.xlu0
        %v1242 = vpop.trf.xlu0
        %1243 = vxpose.xlu0.b32.start [1/16] %v1145, 128
        %1244 = vxpose.xlu0.b32.cont [2/16] 0.0, 128
        %1245 = vxpose.xlu0.b32.cont [3/16] 0.0, 128
        %1246 = vxpose.xlu0.b32.cont [4/16] 0.0, 128
        %1247 = vxpose.xlu0.b32.cont [5/16] 0.0, 128
        %1248 = vxpose.xlu0.b32.cont [6/16] 0.0, 128
        %1249 = vxpose.xlu0.b32.cont [7/16] 0.0, 128
        %1250 = vxpose.xlu0.b32.cont [8/16] 0.0, 128
        %1251 = vxpose.xlu0.b32.cont [9/16] 0.0, 128
        %1252 = vxpose.xlu0.b32.cont [10/16] 0.0, 128
        %1253 = vxpose.xlu0.b32.cont [11/16] 0.0, 128
        %1254 = vxpose.xlu0.b32.cont [12/16] 0.0, 128
        %1255 = vxpose.xlu0.b32.cont [13/16] 0.0, 128
        %1256 = vxpose.xlu0.b32.cont [14/16] 0.0, 128
        %1257 = vxpose.xlu0.b32.cont [15/16] 0.0, 128
        %1258 = vxpose.xlu0.b32.end [16/16] 0.0, 128
        %v1259 = vpop.trf.xlu0
        %v1260 = vpop.trf.xlu0
        %v1261 = vpop.trf.xlu0
        %v1262 = vpop.trf.xlu0
        %v1263 = vpop.trf.xlu0
        %v1264 = vpop.trf.xlu0
        %v1265 = vpop.trf.xlu0
        %v1266 = vpop.trf.xlu0
        %v1267 = vpop.trf.xlu0
        %v1268 = vpop.trf.xlu0
        %v1269 = vpop.trf.xlu0
        %v1270 = vpop.trf.xlu0
        %v1271 = vpop.trf.xlu0
        %v1272 = vpop.trf.xlu0
        %v1273 = vpop.trf.xlu0
        %v1274 = vpop.trf.xlu0
        %v1275 = vrot.slane %v1227, 4
        %vm1276 = vcmask 1047556
        %v1277 = vsel %vm1276, %v1275, %v1163
        %v1278 = vrot.slane %v1163, 4
        %v1279 = vsel %vm1276, %v1227, %v1278
        %v1281 = vunpack.c.l.s4 1983009808
        %v1282 = vunpack.c.0.s8 %v1281
        %v1283 = vperm.slane %v1277, %v1282
        %v1285 = vunpack.c.l.s4 1983009808
        %v1286 = vunpack.c.0.s8 %v1285
        %v1287 = vperm.slane %v1279, %v1286
        %v1288 = vrot.slane %v1259, 4
        %v1289 = vsel %vm1276, %v1288, %v1195
        %v1290 = vrot.slane %v1195, 4
        %v1291 = vsel %vm1276, %v1259, %v1290
        %v1293 = vunpack.c.l.s4 1983009808
        %v1294 = vunpack.c.0.s8 %v1293
        %v1295 = vperm.slane %v1289, %v1294
        %v1297 = vunpack.c.l.s4 1983009808
        %v1298 = vunpack.c.0.s8 %v1297
        %v1299 = vperm.slane %v1291, %v1298
        %v1300 = vrot.slane %v1295, 4
        %v1301 = vsel %vm1276, %v1300, %v1283
        %v1302 = vrot.slane %v1283, 4
        %v1303 = vsel %vm1276, %v1295, %v1302
        %v1305 = vunpack.c.l.s4 1934713408
        %v1306 = vunpack.c.0.s8 %v1305
        %v1307 = vperm.slane %v1301, %v1306
        %v1309 = vunpack.c.l.s4 1934713408
        %v1310 = vunpack.c.0.s8 %v1309
        %v1311 = vperm.slane %v1303, %v1310
        %v1312 = vrot.slane %v1299, 4
        %v1313 = vsel %vm1276, %v1312, %v1287
        %v1314 = vrot.slane %v1287, 4
        %v1315 = vsel %vm1276, %v1299, %v1314
        %v1317 = vunpack.c.l.s4 1934713408
        %v1318 = vunpack.c.0.s8 %v1317
        %v1319 = vperm.slane %v1313, %v1318
        %v1321 = vunpack.c.l.s4 1934713408
        %v1322 = vunpack.c.0.s8 %v1321
        %v1323 = vperm.slane %v1315, %v1322
        %v1324 = vrot.slane %v1307, 4
        %v1325 = vsel %vm1276, 0.0, %v1324
        %v1326 = vrot.slane %v1311, 4
        %v1327 = vsel %vm1276, 0.0, %v1326
        %v1328 = vrot.slane %v1319, 4
        %v1329 = vsel %vm1276, 0.0, %v1328
        %v1330 = vrot.slane %v1323, 4
        %v1331 = vsel %vm1276, 0.0, %v1330
        %v1332 = vsel %vm1276, %v1326, %v1307
        %v1334 = vunpack.c.l.s4 1983009808
        %v1335 = vunpack.c.0.s8 %v1334
        %v1336 = vperm.slane %v1332, %v1335
        %v1337 = vrot.slane %v1327, 4
        %v1338 = vsel %vm1276, %v1337, %v1325
        %v1340 = vunpack.c.l.s4 1983009808
        %v1341 = vunpack.c.0.s8 %v1340
        %v1342 = vperm.slane %v1338, %v1341
        %v1343 = vsel %vm1276, %v1330, %v1319
        %v1345 = vunpack.c.l.s4 1983009808
        %v1346 = vunpack.c.0.s8 %v1345
        %v1347 = vperm.slane %v1343, %v1346
        %v1348 = vrot.slane %v1331, 4
        %v1349 = vsel %vm1276, %v1348, %v1329
        %v1351 = vunpack.c.l.s4 1983009808
        %v1352 = vunpack.c.0.s8 %v1351
        %v1353 = vperm.slane %v1349, %v1352
        %v1354 = vrot.slane %v1342, 4
        %v1355 = vsel %vm1276, %v1354, %v1336
        %v1356 = vrot.slane %v1336, 4
        %v1357 = vsel %vm1276, %v1342, %v1356
        %v1359 = vunpack.c.l.s4 1934713408
        %v1360 = vunpack.c.0.s8 %v1359
        %v1361 = vperm.slane %v1355, %v1360
        %v1363 = vunpack.c.l.s4 1934713408
        %v1364 = vunpack.c.0.s8 %v1363
        %v1365 = vperm.slane %v1357, %v1364
        %v1366 = vrot.slane %v1353, 4
        %v1367 = vsel %vm1276, %v1366, %v1347
        %v1368 = vrot.slane %v1347, 4
        %v1369 = vsel %vm1276, %v1353, %v1368
        %v1371 = vunpack.c.l.s4 1934713408
        %v1372 = vunpack.c.0.s8 %v1371
        %v1373 = vperm.slane %v1367, %v1372
        %v1375 = vunpack.c.l.s4 1934713408
        %v1376 = vunpack.c.0.s8 %v1375
        %v1377 = vperm.slane %v1369, %v1376
        %v1378 = vrot.slane %v1373, 4
        %v1379 = vsel %vm1276, %v1378, %v1361
        %v1380 = vrot.slane %v1361, 4
        %v1381 = vsel %vm1276, %v1373, %v1380
        %v1382 = vrot.slane %v1377, 4
        %v1383 = vsel %vm1276, %v1382, %v1365
        %v1384 = vrot.slane %v1365, 4
        %v1385 = vsel %vm1276, %v1377, %v1384
        %1387 = vrot.lane.b32.xlu0 %v1381, 8
        %v1388 = vpop.permute.xlu0 %1387
        %1391 = vrot.lane.b32.xlu0 %v1383, 16
        %v1392 = vpop.permute.xlu0 %1391
        %1395 = vrot.lane.b32.xlu0 %v1385, 24
        %v1396 = vpop.permute.xlu0 %1395
        %v1398 = vsel %vm730, %v1379, %v1388
        %vm1399 = vcmask 130048
        %v1400 = vsel %vm1399, %v1398, %v1392
        %vm1401 = vcmask 195584
        %v1402 = vsel %vm1401, %v1400, %v1396
        %v1403 = vperm.slane %v487, 3
        %v1405 = vsel %vm508, %v1402, 0
        %1407 = vmatpush.msra.mxu0 0.0
        %1408 = vmatpush.msra.mxu0 0.0
        %1409 = vmatpush.msra.mxu0 0.0
        %1410 = vmatpush.msra.mxu0 0.0
        %1411 = vmatpush.msra.mxu0 0.0
        %1412 = vmatpush.msra.mxu0 0.0
        %1413 = vmatpush.msra.mxu0 0.0
        %1414 = vmatpush.msra.mxu0 0.0
        %1415 = vmatpush.msra.mxu0 0.0
        %1416 = vmatpush.msra.mxu0 0.0
        %1417 = vmatpush.msra.mxu0 0.0
        %1418 = vmatpush.msra.mxu0 0.0
        %1419 = vmatpush.msra.mxu0 %v506
        %1420 = vmatpush.msra.mxu0 %v505
        %1421 = vmatpush.msra.mxu0 %v504
        %1422 = vmatpush.msra.mxu0 %v503
        %1423 = vmatmul.f32.gmra.mxu0 %v1405
        %v1424 = vpop.f32.mrf.mxu0
        %v1425 = vadd.f32 %v1403, %v1424
        %1426 = vdwg.mxu0
        %v1427 = vadd.f32 %v490, %v1425
        %v1428 = vsel %vm508, %v1427, 0.0
        %1429 = vadd.xlane.f32.xlu0 %v1428
        %v1430 = vpop.xlane.xlu0 %1429
        %v1431 = vrcp.pop 32.0
        %v1432 = vmul.f32 32.0, %v1431
        %v1433 = vsub.f32 1.0, %v1432
        %v1434 = vmul.f32 %v1431, %v1433
        %v1435 = vadd.f32 %v1431, %v1434
        %vm1436 = vweird.f32 %v1431
        %v1437 = vsel %vm1436, %v1431, %v1435
        %v1438 = vmul.f32 %v1430, %v1437
        %v1439 = vsub.f32 %v1427, %v1438
        %v1440 = vmul.f32 %v1439, %v1439
        %v1441 = vsel %vm508, %v1440, 0.0
        %1442 = vadd.xlane.f32.xlu0 %v1441
        %v1443 = vpop.xlane.xlu0 %1442
        %v1444 = vmul.f32 %v1443, %v1437
        %v1445 = vadd.f32 %v1444, 1e-05
        %v1446 = vrsqrt.pop %v1445
        %v1447 = vmul.f32 %v1446, %v1445
        %v1448 = vmul.f32 %v1447, %v1446
        %v1449 = vmul.f32 0.5, %v1448
        %v1450 = vsub.f32 1.5, %v1449
        %v1451 = vmul.f32 %v1446, %v1450
        %vm1452 = vweird.f32 %v1445
        %vm1453 = vweird.f32 %v1446
        %vm1454 = vmor %vm1452, %vm1453
        %v1455 = vsel %vm1454, %v1446, %v1451
        %v1456 = vmul.f32 %v1439, %v1455
        %v1457 = vperm.slane %v487, 4
        %v1458 = vmul.f32 %v1456, %v1457
        %v1459 = vperm.slane %v487, 5
        %v1460 = vadd.f32 %v1458, %v1459
        %v1461 = vld [vmem:[%s4] sm:$0xff]
        %v1462 = vld [vmem:[%s4 + $0x8] sm:$0xff]
        %v1463 = vld [vmem:[%s4 + $0x10] sm:$0xff]
        %v1464 = vld [vmem:[%s4 + $0x18] sm:$0xff]
        %v1465 = vperm.slane %v487, 6
        %v1467 = vsel %vm508, %v1460, 0
        %1469 = vmatpush.msra.mxu0 0.0
        %1470 = vmatpush.msra.mxu0 0.0
        %1471 = vmatpush.msra.mxu0 0.0
        %1472 = vmatpush.msra.mxu0 0.0
        %1473 = vmatpush.msra.mxu0 0.0
        %1474 = vmatpush.msra.mxu0 0.0
        %1475 = vmatpush.msra.mxu0 0.0
        %1476 = vmatpush.msra.mxu0 0.0
        %1477 = vmatpush.msra.mxu0 0.0
        %1478 = vmatpush.msra.mxu0 0.0
        %1479 = vmatpush.msra.mxu0 0.0
        %1480 = vmatpush.msra.mxu0 0.0
        %1481 = vmatpush.msra.mxu0 %v1464
        %1482 = vmatpush.msra.mxu0 %v1463
        %1483 = vmatpush.msra.mxu0 %v1462
        %1484 = vmatpush.msra.mxu0 %v1461
        %1485 = vmatmul.f32.gmra.mxu0 %v1467
        %v1486 = vpop.f32.mrf.mxu0
        %v1487 = vadd.f32 %v1465, %v1486
        %1488 = vdwg.mxu0
        %v1489 = vmax.f32 %v1487, 0.0
        %v1490 = vld [vmem:[%s5] sm:$0xff]
        %v1491 = vld [vmem:[%s5 + $0x8] sm:$0xff]
        %v1492 = vld [vmem:[%s5 + $0x10] sm:$0xff]
        %v1493 = vld [vmem:[%s5 + $0x18] sm:$0xff]
        %v1494 = vld [vmem:[%s5 + $0x20] sm:$0xff]
        %v1495 = vld [vmem:[%s5 + $0x28] sm:$0xff]
        %v1496 = vld [vmem:[%s5 + $0x30] sm:$0xff]
        %v1497 = vld [vmem:[%s5 + $0x38] sm:$0xff]
        %v1498 = vperm.slane %v487, 7
        %vm1499 = vcmask 523264
        %v1501 = vsel %vm1499, %v1489, 0
        %1503 = vmatpush.msra.mxu0 0.0
        %1504 = vmatpush.msra.mxu0 0.0
        %1505 = vmatpush.msra.mxu0 0.0
        %1506 = vmatpush.msra.mxu0 0.0
        %1507 = vmatpush.msra.mxu0 0.0
        %1508 = vmatpush.msra.mxu0 0.0
        %1509 = vmatpush.msra.mxu0 0.0
        %1510 = vmatpush.msra.mxu0 0.0
        %1511 = vmatpush.msra.mxu0 %v1497
        %1512 = vmatpush.msra.mxu0 %v1496
        %1513 = vmatpush.msra.mxu0 %v1495
        %1514 = vmatpush.msra.mxu0 %v1494
        %1515 = vmatpush.msra.mxu0 %v1493
        %1516 = vmatpush.msra.mxu0 %v1492
        %1517 = vmatpush.msra.mxu0 %v1491
        %1518 = vmatpush.msra.mxu0 %v1490
        %1519 = vmatmul.f32.gmra.mxu0 %v1501
        %v1520 = vpop.f32.mrf.mxu0
        %v1521 = vadd.f32 %v1498, %v1520
        %1522 = vdwg.mxu0
        %v1523 = vadd.f32 %v1460, %v1521
        %v1524 = vsel %vm508, %v1523, 0.0
        %1525 = vadd.xlane.f32.xlu0 %v1524
        %v1526 = vpop.xlane.xlu0 %1525
        %v1527 = vmul.f32 %v1526, %v1437
        %v1528 = vsub.f32 %v1523, %v1527
        %v1529 = vmul.f32 %v1528, %v1528
        %v1530 = vsel %vm508, %v1529, 0.0
        %1531 = vadd.xlane.f32.xlu0 %v1530
        %v1532 = vpop.xlane.xlu0 %1531
        %v1533 = vmul.f32 %v1532, %v1437
        %v1534 = vadd.f32 %v1533, 1e-05
        %v1535 = vrsqrt.pop %v1534
        %v1536 = vmul.f32 %v1535, %v1534
        %v1537 = vmul.f32 %v1536, %v1535
        %v1538 = vmul.f32 0.5, %v1537
        %v1539 = vsub.f32 1.5, %v1538
        %v1540 = vmul.f32 %v1535, %v1539
        %vm1541 = vweird.f32 %v1534
        %vm1542 = vweird.f32 %v1535
        %vm1543 = vmor %vm1541, %vm1542
        %v1544 = vsel %vm1543, %v1535, %v1540
        %v1545 = vmul.f32 %v1528, %v1544
        %v1546 = vperm.slane %v488, 0
        %v1547 = vmul.f32 %v1545, %v1546
        %v1548 = vperm.slane %v488, 1
        %v1549 = vadd.f32 %v1547, %v1548
        %v1550 = vld [vmem:[#allocation7] sm:$0xff]
        %v1551 = vld [vmem:[#allocation7 + $0x8] sm:$0xff]
        %v1552 = vld [vmem:[#allocation7 + $0x10] sm:$0xff]
        %v1553 = vld [vmem:[#allocation7 + $0x18] sm:$0xff]
        %v1554 = vld [vmem:[#allocation7 + $0x20] sm:$0xff]
        %v1555 = vld [vmem:[#allocation7 + $0x28] sm:$0xff]
        %v1556 = vld [vmem:[#allocation7 + $0x30] sm:$0xff]
        %v1557 = vld [vmem:[#allocation7 + $0x38] sm:$0xff]
        %v1558 = vld [vmem:[#allocation7 + $0x40] sm:$0xff]
        %v1559 = vld [vmem:[#allocation7 + $0x48] sm:$0xff]
        %v1560 = vld [vmem:[#allocation7 + $0x50] sm:$0xff]
        %v1561 = vld [vmem:[#allocation7 + $0x58] sm:$0xff]
        %v1562 = vld [vmem:[#allocation8] sm:$0xff]
        %v1563 = vld [vmem:[#allocation8 + $0x8] sm:$0xff]
        %v1564 = vld [vmem:[#allocation8 + $0x10] sm:$0xff]
        %v1565 = vld [vmem:[#allocation8 + $0x18] sm:$0xff]
        %v1566 = vperm.slane %v488, 2
        %v1568 = vsel %vm508, %v1549, 0
        %1570 = vmatpush.msra.mxu0 0.0
        %1571 = vmatpush.msra.mxu0 0.0
        %1572 = vmatpush.msra.mxu0 0.0
        %1573 = vmatpush.msra.mxu0 0.0
        %1574 = vmatpush.msra.mxu0 0.0
        %1575 = vmatpush.msra.mxu0 0.0
        %1576 = vmatpush.msra.mxu0 0.0
        %1577 = vmatpush.msra.mxu0 0.0
        %1578 = vmatpush.msra.mxu0 0.0
        %1579 = vmatpush.msra.mxu0 0.0
        %1580 = vmatpush.msra.mxu0 0.0
        %1581 = vmatpush.msra.mxu0 0.0
        %1582 = vmatpush.msra.mxu0 %v1553
        %1583 = vmatpush.msra.mxu0 %v1552
        %1584 = vmatpush.msra.mxu0 %v1551
        %1585 = vmatpush.msra.mxu0 %v1550
        %1586 = vmatmul.f32.gmra.mxu0 %v1568
        %v1587 = vpop.f32.mrf.mxu0
        %v1588 = vadd.f32 %v1566, %v1587
        %1589 = vdwg.mxu0
        %v1590 = vmul.f32 %v1588, 0.35355338
        %v1591 = vperm.slane %v488, 3
        %1592 = vmatpush.msra.mxu0 0.0
        %1593 = vmatpush.msra.mxu0 0.0
        %1594 = vmatpush.msra.mxu0 0.0
        %1595 = vmatpush.msra.mxu0 0.0
        %1596 = vmatpush.msra.mxu0 0.0
        %1597 = vmatpush.msra.mxu0 0.0
        %1598 = vmatpush.msra.mxu0 0.0
        %1599 = vmatpush.msra.mxu0 0.0
        %1600 = vmatpush.msra.mxu0 0.0
        %1601 = vmatpush.msra.mxu0 0.0
        %1602 = vmatpush.msra.mxu0 0.0
        %1603 = vmatpush.msra.mxu0 0.0
        %1604 = vmatpush.msra.mxu0 %v1557
        %1605 = vmatpush.msra.mxu0 %v1556
        %1606 = vmatpush.msra.mxu0 %v1555
        %1607 = vmatpush.msra.mxu0 %v1554
        %1608 = vmatmul.f32.gmra.mxu0 %v1568
        %v1609 = vpop.f32.mrf.mxu0
        %v1610 = vadd.f32 %v1591, %v1609
        %1611 = vdwg.mxu0
        %v1612 = vperm.slane %v488, 4
        %1613 = vmatpush.msra.mxu0 0.0
        %1614 = vmatpush.msra.mxu0 0.0
        %1615 = vmatpush.msra.mxu0 0.0
        %1616 = vmatpush.msra.mxu0 0.0
        %1617 = vmatpush.msra.mxu0 0.0
        %1618 = vmatpush.msra.mxu0 0.0
        %1619 = vmatpush.msra.mxu0 0.0
        %1620 = vmatpush.msra.mxu0 0.0
        %1621 = vmatpush.msra.mxu0 0.0
        %1622 = vmatpush.msra.mxu0 0.0
        %1623 = vmatpush.msra.mxu0 0.0
        %1624 = vmatpush.msra.mxu0 0.0
        %1625 = vmatpush.msra.mxu0 %v1561
        %1626 = vmatpush.msra.mxu0 %v1560
        %1627 = vmatpush.msra.mxu0 %v1559
        %1628 = vmatpush.msra.mxu0 %v1558
        %1629 = vmatmul.f32.gmra.mxu0 %v1568
        %v1630 = vpop.f32.mrf.mxu0
        %v1631 = vadd.f32 %v1612, %v1630
        %1632 = vdwg.mxu0
        %1634 = vrot.lane.b32.xlu0 %v1590, 120
        %v1635 = vpop.permute.xlu0 %1634
        %1636 = vrot.lane.b32.xlu0 %v1590, 112
        %v1637 = vpop.permute.xlu0 %1636
        %1638 = vrot.lane.b32.xlu0 %v1590, 104
        %v1639 = vpop.permute.xlu0 %1638
        %1641 = vrot.lane.b32.xlu0 %v1610, 120
        %v1642 = vpop.permute.xlu0 %1641
        %1644 = vrot.lane.b32.xlu0 %v1610, 112
        %v1645 = vpop.permute.xlu0 %1644
        %1647 = vrot.lane.b32.xlu0 %v1610, 104
        %v1648 = vpop.permute.xlu0 %1647
        %1651 = vrot.lane.b32.xlu0 %v1631, 120
        %v1652 = vpop.permute.xlu0 %1651
        %1654 = vrot.lane.b32.xlu0 %v1631, 112
        %v1655 = vpop.permute.xlu0 %1654
        %1657 = vrot.lane.b32.xlu0 %v1631, 104
        %v1658 = vpop.permute.xlu0 %1657
        %1660 = vxpose.xlu0.b32.start [1/16] %v1610, 128
        %1661 = vxpose.xlu0.b32.cont [2/16] 0.0, 128
        %1662 = vxpose.xlu0.b32.cont [3/16] 0.0, 128
        %1663 = vxpose.xlu0.b32.cont [4/16] 0.0, 128
        %1664 = vxpose.xlu0.b32.cont [5/16] 0.0, 128
        %1665 = vxpose.xlu0.b32.cont [6/16] 0.0, 128
        %1666 = vxpose.xlu0.b32.cont [7/16] 0.0, 128
        %1667 = vxpose.xlu0.b32.cont [8/16] 0.0, 128
        %1668 = vxpose.xlu0.b32.cont [9/16] 0.0, 128
        %1669 = vxpose.xlu0.b32.cont [10/16] 0.0, 128
        %1670 = vxpose.xlu0.b32.cont [11/16] 0.0, 128
        %1671 = vxpose.xlu0.b32.cont [12/16] 0.0, 128
        %1672 = vxpose.xlu0.b32.cont [13/16] 0.0, 128
        %1673 = vxpose.xlu0.b32.cont [14/16] 0.0, 128
        %1674 = vxpose.xlu0.b32.cont [15/16] 0.0, 128
        %1675 = vxpose.xlu0.b32.end [16/16] 0.0, 128
        %v1676 = vpop.trf.xlu0
        %v1677 = vpop.trf.xlu0
        %v1678 = vpop.trf.xlu0
        %v1679 = vpop.trf.xlu0
        %v1680 = vpop.trf.xlu0
        %v1681 = vpop.trf.xlu0
        %v1682 = vpop.trf.xlu0
        %v1683 = vpop.trf.xlu0
        %v1684 = vpop.trf.xlu0
        %v1685 = vpop.trf.xlu0
        %v1686 = vpop.trf.xlu0
        %v1687 = vpop.trf.xlu0
        %v1688 = vpop.trf.xlu0
        %v1689 = vpop.trf.xlu0
        %v1690 = vpop.trf.xlu0
        %v1691 = vpop.trf.xlu0
        %1692 = vxpose.xlu0.b32.start [1/16] %v1642, 128
        %1693 = vxpose.xlu0.b32.cont [2/16] 0.0, 128
        %1694 = vxpose.xlu0.b32.cont [3/16] 0.0, 128
        %1695 = vxpose.xlu0.b32.cont [4/16] 0.0, 128
        %1696 = vxpose.xlu0.b32.cont [5/16] 0.0, 128
        %1697 = vxpose.xlu0.b32.cont [6/16] 0.0, 128
        %1698 = vxpose.xlu0.b32.cont [7/16] 0.0, 128
        %1699 = vxpose.xlu0.b32.cont [8/16] 0.0, 128
        %1700 = vxpose.xlu0.b32.cont [9/16] 0.0, 128
        %1701 = vxpose.xlu0.b32.cont [10/16] 0.0, 128
        %1702 = vxpose.xlu0.b32.cont [11/16] 0.0, 128
        %1703 = vxpose.xlu0.b32.cont [12/16] 0.0, 128
        %1704 = vxpose.xlu0.b32.cont [13/16] 0.0, 128
        %1705 = vxpose.xlu0.b32.cont [14/16] 0.0, 128
        %1706 = vxpose.xlu0.b32.cont [15/16] 0.0, 128
        %1707 = vxpose.xlu0.b32.end [16/16] 0.0, 128
        %v1708 = vpop.trf.xlu0
        %v1709 = vpop.trf.xlu0
        %v1710 = vpop.trf.xlu0
        %v1711 = vpop.trf.xlu0
        %v1712 = vpop.trf.xlu0
        %v1713 = vpop.trf.xlu0
        %v1714 = vpop.trf.xlu0
        %v1715 = vpop.trf.xlu0
        %v1716 = vpop.trf.xlu0
        %v1717 = vpop.trf.xlu0
        %v1718 = vpop.trf.xlu0
        %v1719 = vpop.trf.xlu0
        %v1720 = vpop.trf.xlu0
        %v1721 = vpop.trf.xlu0
        %v1722 = vpop.trf.xlu0
        %v1723 = vpop.trf.xlu0
        %1724 = vxpose.xlu0.b32.start [1/16] %v1645, 128
        %1725 = vxpose.xlu0.b32.cont [2/16] 0.0, 128
        %1726 = vxpose.xlu0.b32.cont [3/16] 0.0, 128
        %1727 = vxpose.xlu0.b32.cont [4/16] 0.0, 128
        %1728 = vxpose.xlu0.b32.cont [5/16] 0.0, 128
        %1729 = vxpose.xlu0.b32.cont [6/16] 0.0, 128
        %1730 = vxpose.xlu0.b32.cont [7/16] 0.0, 128
        %1731 = vxpose.xlu0.b32.cont [8/16] 0.0, 128
        %1732 = vxpose.xlu0.b32.cont [9/16] 0.0, 128
        %1733 = vxpose.xlu0.b32.cont [10/16] 0.0, 128
        %1734 = vxpose.xlu0.b32.cont [11/16] 0.0, 128
        %1735 = vxpose.xlu0.b32.cont [12/16] 0.0, 128
        %1736 = vxpose.xlu0.b32.cont [13/16] 0.0, 128
        %1737 = vxpose.xlu0.b32.cont [14/16] 0.0, 128
        %1738 = vxpose.xlu0.b32.cont [15/16] 0.0, 128
        %1739 = vxpose.xlu0.b32.end [16/16] 0.0, 128
        %v1740 = vpop.trf.xlu0
        %v1741 = vpop.trf.xlu0
        %v1742 = vpop.trf.xlu0
        %v1743 = vpop.trf.xlu0
        %v1744 = vpop.trf.xlu0
        %v1745 = vpop.trf.xlu0
        %v1746 = vpop.trf.xlu0
        %v1747 = vpop.trf.xlu0
        %v1748 = vpop.trf.xlu0
        %v1749 = vpop.trf.xlu0
        %v1750 = vpop.trf.xlu0
        %v1751 = vpop.trf.xlu0
        %v1752 = vpop.trf.xlu0
        %v1753 = vpop.trf.xlu0
        %v1754 = vpop.trf.xlu0
        %v1755 = vpop.trf.xlu0
        %1756 = vxpose.xlu0.b32.start [1/16] %v1648, 128
        %1757 = vxpose.xlu0.b32.cont [2/16] 0.0, 128
        %1758 = vxpose.xlu0.b32.cont [3/16] 0.0, 128
        %1759 = vxpose.xlu0.b32.cont [4/16] 0.0, 128
        %1760 = vxpose.xlu0.b32.cont [5/16] 0.0, 128
        %1761 = vxpose.xlu0.b32.cont [6/16] 0.0, 128
        %1762 = vxpose.xlu0.b32.cont [7/16] 0.0, 128
        %1763 = vxpose.xlu0.b32.cont [8/16] 0.0, 128
        %1764 = vxpose.xlu0.b32.cont [9/16] 0.0, 128
        %1765 = vxpose.xlu0.b32.cont [10/16] 0.0, 128
        %1766 = vxpose.xlu0.b32.cont [11/16] 0.0, 128
        %1767 = vxpose.xlu0.b32.cont [12/16] 0.0, 128
        %1768 = vxpose.xlu0.b32.cont [13/16] 0.0, 128
        %1769 = vxpose.xlu0.b32.cont [14/16] 0.0, 128
        %1770 = vxpose.xlu0.b32.cont [15/16] 0.0, 128
        %1771 = vxpose.xlu0.b32.end [16/16] 0.0, 128
        %v1772 = vpop.trf.xlu0
        %v1773 = vpop.trf.xlu0
        %v1774 = vpop.trf.xlu0
        %v1775 = vpop.trf.xlu0
        %v1776 = vpop.trf.xlu0
        %v1777 = vpop.trf.xlu0
        %v1778 = vpop.trf.xlu0
        %v1779 = vpop.trf.xlu0
        %v1780 = vpop.trf.xlu0
        %v1781 = vpop.trf.xlu0
        %v1782 = vpop.trf.xlu0
        %v1783 = vpop.trf.xlu0
        %v1784 = vpop.trf.xlu0
        %v1785 = vpop.trf.xlu0
        %v1786 = vpop.trf.xlu0
        %v1787 = vpop.trf.xlu0
        %v1788 = vsel %vm730, %v1590, 0
        %1790 = vmatpush.msra.mxu0 0.0
        %1791 = vmatpush.msra.mxu0 0.0
        %1792 = vmatpush.msra.mxu0 0.0
        %1793 = vmatpush.msra.mxu0 0.0
        %1794 = vmatpush.msra.mxu0 0.0
        %1795 = vmatpush.msra.mxu0 0.0
        %1796 = vmatpush.msra.mxu0 0.0
        %1797 = vmatpush.msra.mxu0 0.0
        %1798 = vmatpush.msra.mxu0 0.0
        %1799 = vmatpush.msra.mxu0 0.0
        %1800 = vmatpush.msra.mxu0 0.0
        %1801 = vmatpush.msra.mxu0 0.0
        %1802 = vmatpush.msra.mxu0 0.0
        %1803 = vmatpush.msra.mxu0 0.0
        %1804 = vmatpush.msra.mxu0 0.0
        %1805 = vmatpush.msra.mxu0 %v1676
        %1806 = vmatmul.f32.gmra.mxu0 %v1788
        %v1807 = vpop.f32.mrf.mxu0
        %v1808 = vadd.f32 0.0, %v1807
        %1809 = vdwg.mxu0
        %v1810 = vsel %vm730, %v1635, 0
        %1812 = vmatpush.msra.mxu0 0.0
        %1813 = vmatpush.msra.mxu0 0.0
        %1814 = vmatpush.msra.mxu0 0.0
        %1815 = vmatpush.msra.mxu0 0.0
        %1816 = vmatpush.msra.mxu0 0.0
        %1817 = vmatpush.msra.mxu0 0.0
        %1818 = vmatpush.msra.mxu0 0.0
        %1819 = vmatpush.msra.mxu0 0.0
        %1820 = vmatpush.msra.mxu0 0.0
        %1821 = vmatpush.msra.mxu0 0.0
        %1822 = vmatpush.msra.mxu0 0.0
        %1823 = vmatpush.msra.mxu0 0.0
        %1824 = vmatpush.msra.mxu0 0.0
        %1825 = vmatpush.msra.mxu0 0.0
        %1826 = vmatpush.msra.mxu0 0.0
        %1827 = vmatpush.msra.mxu0 %v1708
        %1828 = vmatmul.f32.gmra.mxu0 %v1810
        %v1829 = vpop.f32.mrf.mxu0
        %v1830 = vadd.f32 0.0, %v1829
        %1831 = vdwg.mxu0
        %v1832 = vsel %vm730, %v1637, 0
        %1834 = vmatpush.msra.mxu0 0.0
        %1835 = vmatpush.msra.mxu0 0.0
        %1836 = vmatpush.msra.mxu0 0.0
        %1837 = vmatpush.msra.mxu0 0.0
        %1838 = vmatpush.msra.mxu0 0.0
        %1839 = vmatpush.msra.mxu0 0.0
        %1840 = vmatpush.msra.mxu0 0.0
        %1841 = vmatpush.msra.mxu0 0.0
        %1842 = vmatpush.msra.mxu0 0.0
        %1843 = vmatpush.msra.mxu0 0.0
        %1844 = vmatpush.msra.mxu0 0.0
        %1845 = vmatpush.msra.mxu0 0.0
        %1846 = vmatpush.msra.mxu0 0.0
        %1847 = vmatpush.msra.mxu0 0.0
        %1848 = vmatpush.msra.mxu0 0.0
        %1849 = vmatpush.msra.mxu0 %v1740
        %1850 = vmatmul.f32.gmra.mxu0 %v1832
        %v1851 = vpop.f32.mrf.mxu0
        %v1852 = vadd.f32 0.0, %v1851
        %1853 = vdwg.mxu0
        %v1854 = vsel %vm730, %v1639, 0
        %1856 = vmatpush.msra.mxu0 0.0
        %1857 = vmatpush.msra.mxu0 0.0
        %1858 = vmatpush.msra.mxu0 0.0
        %1859 = vmatpush.msra.mxu0 0.0
        %1860 = vmatpush.msra.mxu0 0.0
        %1861 = vmatpush.msra.mxu0 0.0
        %1862 = vmatpush.msra.mxu0 0.0
        %1863 = vmatpush.msra.mxu0 0.0
        %1864 = vmatpush.msra.mxu0 0.0
        %1865 = vmatpush.msra.mxu0 0.0
        %1866 = vmatpush.msra.mxu0 0.0
        %1867 = vmatpush.msra.mxu0 0.0
        %1868 = vmatpush.msra.mxu0 0.0
        %1869 = vmatpush.msra.mxu0 0.0
        %1870 = vmatpush.msra.mxu0 0.0
        %1871 = vmatpush.msra.mxu0 %v1772
        %1872 = vmatmul.f32.gmra.mxu0 %v1854
        %v1873 = vpop.f32.mrf.mxu0
        %v1874 = vadd.f32 0.0, %v1873
        %1875 = vdwg.mxu0
        %v1876 = vsel %vm730, %v1808, -inf
        %1877 = vmax.xlane.f32.xlu0 %v1876
        %v1878 = vpop.xlane.xlu0 %1877
        %v1879 = vsel %vm730, %v1830, -inf
        %1880 = vmax.xlane.f32.xlu0 %v1879
        %v1881 = vpop.xlane.xlu0 %1880
        %v1882 = vsel %vm730, %v1852, -inf
        %1883 = vmax.xlane.f32.xlu0 %v1882
        %v1884 = vpop.xlane.xlu0 %1883
        %v1885 = vsel %vm730, %v1874, -inf
        %1886 = vmax.xlane.f32.xlu0 %v1885
        %v1887 = vpop.xlane.xlu0 %1886
        %v1888 = vsub.f32 %v1808, %v1878
        %v1889 = vsub.f32 %v1830, %v1881
        %v1890 = vsub.f32 %v1852, %v1884
        %v1891 = vsub.f32 %v1874, %v1887
        %v1892 = vmul.f32 %v1888, 1.442695
        %v1893 = vpow.pop %v1892
        %v1894 = vmul.f32 %v1889, 1.442695
        %v1895 = vpow.pop %v1894
        %v1896 = vmul.f32 %v1890, 1.442695
        %v1897 = vpow.pop %v1896
        %v1898 = vmul.f32 %v1891, 1.442695
        %v1899 = vpow.pop %v1898
        %v1900 = vsel %vm730, %v1893, 0.0
        %1901 = vadd.xlane.f32.xlu0 %v1900
        %v1902 = vpop.xlane.xlu0 %1901
        %v1903 = vsel %vm730, %v1895, 0.0
        %1904 = vadd.xlane.f32.xlu0 %v1903
        %v1905 = vpop.xlane.xlu0 %1904
        %v1906 = vsel %vm730, %v1897, 0.0
        %1907 = vadd.xlane.f32.xlu0 %v1906
        %v1908 = vpop.xlane.xlu0 %1907
        %v1909 = vsel %vm730, %v1899, 0.0
        %1910 = vadd.xlane.f32.xlu0 %v1909
        %v1911 = vpop.xlane.xlu0 %1910
        %v1912 = vrcp.pop %v1902
        %v1913 = vmul.f32 %v1902, %v1912
        %v1914 = vsub.f32 1.0, %v1913
        %v1915 = vmul.f32 %v1912, %v1914
        %v1916 = vadd.f32 %v1912, %v1915
        %vm1917 = vweird.f32 %v1902
        %vm1918 = vweird.f32 %v1912
        %vm1919 = vmor %vm1917, %vm1918
        %v1920 = vsel %vm1919, %v1912, %v1916
        %v1921 = vand.u32 2147483647, %v1902
        %vm1922 = vcmp.eq.f32.partialorder %v1921, 8.507059e+37
        %v1923 = vand.u32 %v1902, 2147483648
        %v1924 = vor.u32 1.1754944e-38, %v1923
        %v1925 = vsel %vm1922, %v1924, %v1920
        %v1926 = vmul.f32 %v1893, %v1925
        %v1927 = vrcp.pop %v1905
        %v1928 = vmul.f32 %v1905, %v1927
        %v1929 = vsub.f32 1.0, %v1928
        %v1930 = vmul.f32 %v1927, %v1929
        %v1931 = vadd.f32 %v1927, %v1930
        %vm1932 = vweird.f32 %v1905
        %vm1933 = vweird.f32 %v1927
        %vm1934 = vmor %vm1932, %vm1933
        %v1935 = vsel %vm1934, %v1927, %v1931
        %v1936 = vand.u32 2147483647, %v1905
        %vm1937 = vcmp.eq.f32.partialorder %v1936, 8.507059e+37
        %v1938 = vand.u32 %v1905, 2147483648
        %v1939 = vor.u32 1.1754944e-38, %v1938
        %v1940 = vsel %vm1937, %v1939, %v1935
        %v1941 = vmul.f32 %v1895, %v1940
        %v1942 = vrcp.pop %v1908
        %v1943 = vmul.f32 %v1908, %v1942
        %v1944 = vsub.f32 1.0, %v1943
        %v1945 = vmul.f32 %v1942, %v1944
        %v1946 = vadd.f32 %v1942, %v1945
        %vm1947 = vweird.f32 %v1908
        %vm1948 = vweird.f32 %v1942
        %vm1949 = vmor %vm1947, %vm1948
        %v1950 = vsel %vm1949, %v1942, %v1946
        %v1951 = vand.u32 2147483647, %v1908
        %vm1952 = vcmp.eq.f32.partialorder %v1951, 8.507059e+37
        %v1953 = vand.u32 %v1908, 2147483648
        %v1954 = vor.u32 1.1754944e-38, %v1953
        %v1955 = vsel %vm1952, %v1954, %v1950
        %v1956 = vmul.f32 %v1897, %v1955
        %v1957 = vrcp.pop %v1911
        %v1958 = vmul.f32 %v1911, %v1957
        %v1959 = vsub.f32 1.0, %v1958
        %v1960 = vmul.f32 %v1957, %v1959
        %v1961 = vadd.f32 %v1957, %v1960
        %vm1962 = vweird.f32 %v1911
        %vm1963 = vweird.f32 %v1957
        %vm1964 = vmor %vm1962, %vm1963
        %v1965 = vsel %vm1964, %v1957, %v1961
        %v1966 = vand.u32 2147483647, %v1911
        %vm1967 = vcmp.eq.f32.partialorder %v1966, 8.507059e+37
        %v1968 = vand.u32 %v1911, 2147483648
        %v1969 = vor.u32 1.1754944e-38, %v1968
        %v1970 = vsel %vm1967, %v1969, %v1965
        %v1971 = vmul.f32 %v1899, %v1970
        %1972 = vxpose.xlu0.b32.start [1/16] %v1631, 128
        %1973 = vxpose.xlu0.b32.cont [2/16] 0.0, 128
        %1974 = vxpose.xlu0.b32.cont [3/16] 0.0, 128
        %1975 = vxpose.xlu0.b32.cont [4/16] 0.0, 128
        %1976 = vxpose.xlu0.b32.cont [5/16] 0.0, 128
        %1977 = vxpose.xlu0.b32.cont [6/16] 0.0, 128
        %1978 = vxpose.xlu0.b32.cont [7/16] 0.0, 128
        %1979 = vxpose.xlu0.b32.cont [8/16] 0.0, 128
        %1980 = vxpose.xlu0.b32.cont [9/16] 0.0, 128
        %1981 = vxpose.xlu0.b32.cont [10/16] 0.0, 128
        %1982 = vxpose.xlu0.b32.cont [11/16] 0.0, 128
        %1983 = vxpose.xlu0.b32.cont [12/16] 0.0, 128
        %1984 = vxpose.xlu0.b32.cont [13/16] 0.0, 128
        %1985 = vxpose.xlu0.b32.cont [14/16] 0.0, 128
        %1986 = vxpose.xlu0.b32.cont [15/16] 0.0, 128
        %1987 = vxpose.xlu0.b32.end [16/16] 0.0, 128
        %v1988 = vpop.trf.xlu0
        %v1989 = vpop.trf.xlu0
        %v1990 = vpop.trf.xlu0
        %v1991 = vpop.trf.xlu0
        %v1992 = vpop.trf.xlu0
        %v1993 = vpop.trf.xlu0
        %v1994 = vpop.trf.xlu0
        %v1995 = vpop.trf.xlu0
        %v1996 = vpop.trf.xlu0
        %v1997 = vpop.trf.xlu0
        %v1998 = vpop.trf.xlu0
        %v1999 = vpop.trf.xlu0
        %v2000 = vpop.trf.xlu0
        %v2001 = vpop.trf.xlu0
        %v2002 = vpop.trf.xlu0
        %v2003 = vpop.trf.xlu0
        %2004 = vxpose.xlu0.b32.start [1/16] %v1652, 128
        %2005 = vxpose.xlu0.b32.cont [2/16] 0.0, 128
        %2006 = vxpose.xlu0.b32.cont [3/16] 0.0, 128
        %2007 = vxpose.xlu0.b32.cont [4/16] 0.0, 128
        %2008 = vxpose.xlu0.b32.cont [5/16] 0.0, 128
        %2009 = vxpose.xlu0.b32.cont [6/16] 0.0, 128
        %2010 = vxpose.xlu0.b32.cont [7/16] 0.0, 128
        %2011 = vxpose.xlu0.b32.cont [8/16] 0.0, 128
        %2012 = vxpose.xlu0.b32.cont [9/16] 0.0, 128
        %2013 = vxpose.xlu0.b32.cont [10/16] 0.0, 128
        %2014 = vxpose.xlu0.b32.cont [11/16] 0.0, 128
        %2015 = vxpose.xlu0.b32.cont [12/16] 0.0, 128
        %2016 = vxpose.xlu0.b32.cont [13/16] 0.0, 128
        %2017 = vxpose.xlu0.b32.cont [14/16] 0.0, 128
        %2018 = vxpose.xlu0.b32.cont [15/16] 0.0, 128
        %2019 = vxpose.xlu0.b32.end [16/16] 0.0, 128
        %v2020 = vpop.trf.xlu0
        %v2021 = vpop.trf.xlu0
        %v2022 = vpop.trf.xlu0
        %v2023 = vpop.trf.xlu0
        %v2024 = vpop.trf.xlu0
        %v2025 = vpop.trf.xlu0
        %v2026 = vpop.trf.xlu0
        %v2027 = vpop.trf.xlu0
        %v2028 = vpop.trf.xlu0
        %v2029 = vpop.trf.xlu0
        %v2030 = vpop.trf.xlu0
        %v2031 = vpop.trf.xlu0
        %v2032 = vpop.trf.xlu0
        %v2033 = vpop.trf.xlu0
        %v2034 = vpop.trf.xlu0
        %v2035 = vpop.trf.xlu0
        %2036 = vxpose.xlu0.b32.start [1/16] %v1655, 128
        %2037 = vxpose.xlu0.b32.cont [2/16] 0.0, 128
        %2038 = vxpose.xlu0.b32.cont [3/16] 0.0, 128
        %2039 = vxpose.xlu0.b32.cont [4/16] 0.0, 128
        %2040 = vxpose.xlu0.b32.cont [5/16] 0.0, 128
        %2041 = vxpose.xlu0.b32.cont [6/16] 0.0, 128
        %2042 = vxpose.xlu0.b32.cont [7/16] 0.0, 128
        %2043 = vxpose.xlu0.b32.cont [8/16] 0.0, 128
        %2044 = vxpose.xlu0.b32.cont [9/16] 0.0, 128
        %2045 = vxpose.xlu0.b32.cont [10/16] 0.0, 128
        %2046 = vxpose.xlu0.b32.cont [11/16] 0.0, 128
        %2047 = vxpose.xlu0.b32.cont [12/16] 0.0, 128
        %2048 = vxpose.xlu0.b32.cont [13/16] 0.0, 128
        %2049 = vxpose.xlu0.b32.cont [14/16] 0.0, 128
        %2050 = vxpose.xlu0.b32.cont [15/16] 0.0, 128
        %2051 = vxpose.xlu0.b32.end [16/16] 0.0, 128
        %v2052 = vpop.trf.xlu0
        %v2053 = vpop.trf.xlu0
        %v2054 = vpop.trf.xlu0
        %v2055 = vpop.trf.xlu0
        %v2056 = vpop.trf.xlu0
        %v2057 = vpop.trf.xlu0
        %v2058 = vpop.trf.xlu0
        %v2059 = vpop.trf.xlu0
        %v2060 = vpop.trf.xlu0
        %v2061 = vpop.trf.xlu0
        %v2062 = vpop.trf.xlu0
        %v2063 = vpop.trf.xlu0
        %v2064 = vpop.trf.xlu0
        %v2065 = vpop.trf.xlu0
        %v2066 = vpop.trf.xlu0
        %v2067 = vpop.trf.xlu0
        %2068 = vxpose.xlu0.b32.start [1/16] %v1658, 128
        %2069 = vxpose.xlu0.b32.cont [2/16] 0.0, 128
        %2070 = vxpose.xlu0.b32.cont [3/16] 0.0, 128
        %2071 = vxpose.xlu0.b32.cont [4/16] 0.0, 128
        %2072 = vxpose.xlu0.b32.cont [5/16] 0.0, 128
        %2073 = vxpose.xlu0.b32.cont [6/16] 0.0, 128
        %2074 = vxpose.xlu0.b32.cont [7/16] 0.0, 128
        %2075 = vxpose.xlu0.b32.cont [8/16] 0.0, 128
        %2076 = vxpose.xlu0.b32.cont [9/16] 0.0, 128
        %2077 = vxpose.xlu0.b32.cont [10/16] 0.0, 128
        %2078 = vxpose.xlu0.b32.cont [11/16] 0.0, 128
        %2079 = vxpose.xlu0.b32.cont [12/16] 0.0, 128
        %2080 = vxpose.xlu0.b32.cont [13/16] 0.0, 128
        %2081 = vxpose.xlu0.b32.cont [14/16] 0.0, 128
        %2082 = vxpose.xlu0.b32.cont [15/16] 0.0, 128
        %2083 = vxpose.xlu0.b32.end [16/16] 0.0, 128
        %v2084 = vpop.trf.xlu0
        %v2085 = vpop.trf.xlu0
        %v2086 = vpop.trf.xlu0
        %v2087 = vpop.trf.xlu0
        %v2088 = vpop.trf.xlu0
        %v2089 = vpop.trf.xlu0
        %v2090 = vpop.trf.xlu0
        %v2091 = vpop.trf.xlu0
        %v2092 = vpop.trf.xlu0
        %v2093 = vpop.trf.xlu0
        %v2094 = vpop.trf.xlu0
        %v2095 = vpop.trf.xlu0
        %v2096 = vpop.trf.xlu0
        %v2097 = vpop.trf.xlu0
        %v2098 = vpop.trf.xlu0
        %v2099 = vpop.trf.xlu0
        %v2101 = vsel %vm730, %v1988, 0
        %v2104 = vsel %vm730, %v1926, 0
        %2106 = vmatpush.xpose.msra.mxu0 0.0
        %2107 = vmatpush.xpose.msra.mxu0 0.0
        %2108 = vmatpush.xpose.msra.mxu0 0.0
        %2109 = vmatpush.xpose.msra.mxu0 0.0
        %2110 = vmatpush.xpose.msra.mxu0 0.0
        %2111 = vmatpush.xpose.msra.mxu0 0.0
        %2112 = vmatpush.xpose.msra.mxu0 0.0
        %2113 = vmatpush.xpose.msra.mxu0 0.0
        %2114 = vmatpush.xpose.msra.mxu0 0.0
        %2115 = vmatpush.xpose.msra.mxu0 0.0
        %2116 = vmatpush.xpose.msra.mxu0 0.0
        %2117 = vmatpush.xpose.msra.mxu0 0.0
        %2118 = vmatpush.xpose.msra.mxu0 0.0
        %2119 = vmatpush.xpose.msra.mxu0 0.0
        %2120 = vmatpush.xpose.msra.mxu0 0.0
        %2121 = vmatpush.xpose.msra.mxu0 %v2104
        %2122 = vmatmul.f32.gmra.mxu0 %v2101
        %v2123 = vpop.f32.mrf.mxu0
        %v2124 = vadd.f32 0.0, %v2123
        %2125 = vdwg.mxu0
        %v2127 = vsel %vm730, %v2020, 0
        %v2130 = vsel %vm730, %v1941, 0
        %2132 = vmatpush.xpose.msra.mxu0 0.0
        %2133 = vmatpush.xpose.msra.mxu0 0.0
        %2134 = vmatpush.xpose.msra.mxu0 0.0
        %2135 = vmatpush.xpose.msra.mxu0 0.0
        %2136 = vmatpush.xpose.msra.mxu0 0.0
        %2137 = vmatpush.xpose.msra.mxu0 0.0
        %2138 = vmatpush.xpose.msra.mxu0 0.0
        %2139 = vmatpush.xpose.msra.mxu0 0.0
        %2140 = vmatpush.xpose.msra.mxu0 0.0
        %2141 = vmatpush.xpose.msra.mxu0 0.0
        %2142 = vmatpush.xpose.msra.mxu0 0.0
        %2143 = vmatpush.xpose.msra.mxu0 0.0
        %2144 = vmatpush.xpose.msra.mxu0 0.0
        %2145 = vmatpush.xpose.msra.mxu0 0.0
        %2146 = vmatpush.xpose.msra.mxu0 0.0
        %2147 = vmatpush.xpose.msra.mxu0 %v2130
        %2148 = vmatmul.f32.gmra.mxu0 %v2127
        %v2149 = vpop.f32.mrf.mxu0
        %v2150 = vadd.f32 0.0, %v2149
        %2151 = vdwg.mxu0
        %v2153 = vsel %vm730, %v2052, 0
        %v2156 = vsel %vm730, %v1956, 0
        %2158 = vmatpush.xpose.msra.mxu0 0.0
        %2159 = vmatpush.xpose.msra.mxu0 0.0
        %2160 = vmatpush.xpose.msra.mxu0 0.0
        %2161 = vmatpush.xpose.msra.mxu0 0.0
        %2162 = vmatpush.xpose.msra.mxu0 0.0
        %2163 = vmatpush.xpose.msra.mxu0 0.0
        %2164 = vmatpush.xpose.msra.mxu0 0.0
        %2165 = vmatpush.xpose.msra.mxu0 0.0
        %2166 = vmatpush.xpose.msra.mxu0 0.0
        %2167 = vmatpush.xpose.msra.mxu0 0.0
        %2168 = vmatpush.xpose.msra.mxu0 0.0
        %2169 = vmatpush.xpose.msra.mxu0 0.0
        %2170 = vmatpush.xpose.msra.mxu0 0.0
        %2171 = vmatpush.xpose.msra.mxu0 0.0
        %2172 = vmatpush.xpose.msra.mxu0 0.0
        %2173 = vmatpush.xpose.msra.mxu0 %v2156
        %2174 = vmatmul.f32.gmra.mxu0 %v2153
        %v2175 = vpop.f32.mrf.mxu0
        %v2176 = vadd.f32 0.0, %v2175
        %2177 = vdwg.mxu0
        %v2179 = vsel %vm730, %v2084, 0
        %v2182 = vsel %vm730, %v1971, 0
        %2184 = vmatpush.xpose.msra.mxu0 0.0
        %2185 = vmatpush.xpose.msra.mxu0 0.0
        %2186 = vmatpush.xpose.msra.mxu0 0.0
        %2187 = vmatpush.xpose.msra.mxu0 0.0
        %2188 = vmatpush.xpose.msra.mxu0 0.0
        %2189 = vmatpush.xpose.msra.mxu0 0.0
        %2190 = vmatpush.xpose.msra.mxu0 0.0
        %2191 = vmatpush.xpose.msra.mxu0 0.0
        %2192 = vmatpush.xpose.msra.mxu0 0.0
        %2193 = vmatpush.xpose.msra.mxu0 0.0
        %2194 = vmatpush.xpose.msra.mxu0 0.0
        %2195 = vmatpush.xpose.msra.mxu0 0.0
        %2196 = vmatpush.xpose.msra.mxu0 0.0
        %2197 = vmatpush.xpose.msra.mxu0 0.0
        %2198 = vmatpush.xpose.msra.mxu0 0.0
        %2199 = vmatpush.xpose.msra.mxu0 %v2182
        %2200 = vmatmul.f32.gmra.mxu0 %v2179
        %v2201 = vpop.f32.mrf.mxu0
        %v2202 = vadd.f32 0.0, %v2201
        %2203 = vdwg.mxu0
        %2204 = vxpose.xlu0.b32.start [1/16] %v2124, 128
        %2205 = vxpose.xlu0.b32.cont [2/16] 0.0, 128
        %2206 = vxpose.xlu0.b32.cont [3/16] 0.0, 128
        %2207 = vxpose.xlu0.b32.cont [4/16] 0.0, 128
        %2208 = vxpose.xlu0.b32.cont [5/16] 0.0, 128
        %2209 = vxpose.xlu0.b32.cont [6/16] 0.0, 128
        %2210 = vxpose.xlu0.b32.cont [7/16] 0.0, 128
        %2211 = vxpose.xlu0.b32.cont [8/16] 0.0, 128
        %2212 = vxpose.xlu0.b32.cont [9/16] 0.0, 128
        %2213 = vxpose.xlu0.b32.cont [10/16] 0.0, 128
        %2214 = vxpose.xlu0.b32.cont [11/16] 0.0, 128
        %2215 = vxpose.xlu0.b32.cont [12/16] 0.0, 128
        %2216 = vxpose.xlu0.b32.cont [13/16] 0.0, 128
        %2217 = vxpose.xlu0.b32.cont [14/16] 0.0, 128
        %2218 = vxpose.xlu0.b32.cont [15/16] 0.0, 128
        %2219 = vxpose.xlu0.b32.end [16/16] 0.0, 128
        %v2220 = vpop.trf.xlu0
        %v2221 = vpop.trf.xlu0
        %v2222 = vpop.trf.xlu0
        %v2223 = vpop.trf.xlu0
        %v2224 = vpop.trf.xlu0
        %v2225 = vpop.trf.xlu0
        %v2226 = vpop.trf.xlu0
        %v2227 = vpop.trf.xlu0
        %v2228 = vpop.trf.xlu0
        %v2229 = vpop.trf.xlu0
        %v2230 = vpop.trf.xlu0
        %v2231 = vpop.trf.xlu0
        %v2232 = vpop.trf.xlu0
        %v2233 = vpop.trf.xlu0
        %v2234 = vpop.trf.xlu0
        %v2235 = vpop.trf.xlu0
        %2236 = vxpose.xlu0.b32.start [1/16] %v2150, 128
        %2237 = vxpose.xlu0.b32.cont [2/16] 0.0, 128
        %2238 = vxpose.xlu0.b32.cont [3/16] 0.0, 128
        %2239 = vxpose.xlu0.b32.cont [4/16] 0.0, 128
        %2240 = vxpose.xlu0.b32.cont [5/16] 0.0, 128
        %2241 = vxpose.xlu0.b32.cont [6/16] 0.0, 128
        %2242 = vxpose.xlu0.b32.cont [7/16] 0.0, 128
        %2243 = vxpose.xlu0.b32.cont [8/16] 0.0, 128
        %2244 = vxpose.xlu0.b32.cont [9/16] 0.0, 128
        %2245 = vxpose.xlu0.b32.cont [10/16] 0.0, 128
        %2246 = vxpose.xlu0.b32.cont [11/16] 0.0, 128
        %2247 = vxpose.xlu0.b32.cont [12/16] 0.0, 128
        %2248 = vxpose.xlu0.b32.cont [13/16] 0.0, 128
        %2249 = vxpose.xlu0.b32.cont [14/16] 0.0, 128
        %2250 = vxpose.xlu0.b32.cont [15/16] 0.0, 128
        %2251 = vxpose.xlu0.b32.end [16/16] 0.0, 128
        %v2252 = vpop.trf.xlu0
        %v2253 = vpop.trf.xlu0
        %v2254 = vpop.trf.xlu0
        %v2255 = vpop.trf.xlu0
        %v2256 = vpop.trf.xlu0
        %v2257 = vpop.trf.xlu0
        %v2258 = vpop.trf.xlu0
        %v2259 = vpop.trf.xlu0
        %v2260 = vpop.trf.xlu0
        %v2261 = vpop.trf.xlu0
        %v2262 = vpop.trf.xlu0
        %v2263 = vpop.trf.xlu0
        %v2264 = vpop.trf.xlu0
        %v2265 = vpop.trf.xlu0
        %v2266 = vpop.trf.xlu0
        %v2267 = vpop.trf.xlu0
        %2268 = vxpose.xlu0.b32.start [1/16] %v2176, 128
        %2269 = vxpose.xlu0.b32.cont [2/16] 0.0, 128
        %2270 = vxpose.xlu0.b32.cont [3/16] 0.0, 128
        %2271 = vxpose.xlu0.b32.cont [4/16] 0.0, 128
        %2272 = vxpose.xlu0.b32.cont [5/16] 0.0, 128
        %2273 = vxpose.xlu0.b32.cont [6/16] 0.0, 128
        %2274 = vxpose.xlu0.b32.cont [7/16] 0.0, 128
        %2275 = vxpose.xlu0.b32.cont [8/16] 0.0, 128
        %2276 = vxpose.xlu0.b32.cont [9/16] 0.0, 128
        %2277 = vxpose.xlu0.b32.cont [10/16] 0.0, 128
        %2278 = vxpose.xlu0.b32.cont [11/16] 0.0, 128
        %2279 = vxpose.xlu0.b32.cont [12/16] 0.0, 128
        %2280 = vxpose.xlu0.b32.cont [13/16] 0.0, 128
        %2281 = vxpose.xlu0.b32.cont [14/16] 0.0, 128
        %2282 = vxpose.xlu0.b32.cont [15/16] 0.0, 128
        %2283 = vxpose.xlu0.b32.end [16/16] 0.0, 128
        %v2284 = vpop.trf.xlu0
        %v2285 = vpop.trf.xlu0
        %v2286 = vpop.trf.xlu0
        %v2287 = vpop.trf.xlu0
        %v2288 = vpop.trf.xlu0
        %v2289 = vpop.trf.xlu0
        %v2290 = vpop.trf.xlu0
        %v2291 = vpop.trf.xlu0
        %v2292 = vpop.trf.xlu0
        %v2293 = vpop.trf.xlu0
        %v2294 = vpop.trf.xlu0
        %v2295 = vpop.trf.xlu0
        %v2296 = vpop.trf.xlu0
        %v2297 = vpop.trf.xlu0
        %v2298 = vpop.trf.xlu0
        %v2299 = vpop.trf.xlu0
        %2300 = vxpose.xlu0.b32.start [1/16] %v2202, 128
        %2301 = vxpose.xlu0.b32.cont [2/16] 0.0, 128
        %2302 = vxpose.xlu0.b32.cont [3/16] 0.0, 128
        %2303 = vxpose.xlu0.b32.cont [4/16] 0.0, 128
        %2304 = vxpose.xlu0.b32.cont [5/16] 0.0, 128
        %2305 = vxpose.xlu0.b32.cont [6/16] 0.0, 128
        %2306 = vxpose.xlu0.b32.cont [7/16] 0.0, 128
        %2307 = vxpose.xlu0.b32.cont [8/16] 0.0, 128
        %2308 = vxpose.xlu0.b32.cont [9/16] 0.0, 128
        %2309 = vxpose.xlu0.b32.cont [10/16] 0.0, 128
        %2310 = vxpose.xlu0.b32.cont [11/16] 0.0, 128
        %2311 = vxpose.xlu0.b32.cont [12/16] 0.0, 128
        %2312 = vxpose.xlu0.b32.cont [13/16] 0.0, 128
        %2313 = vxpose.xlu0.b32.cont [14/16] 0.0, 128
        %2314 = vxpose.xlu0.b32.cont [15/16] 0.0, 128
        %2315 = vxpose.xlu0.b32.end [16/16] 0.0, 128
        %v2316 = vpop.trf.xlu0
        %v2317 = vpop.trf.xlu0
        %v2318 = vpop.trf.xlu0
        %v2319 = vpop.trf.xlu0
        %v2320 = vpop.trf.xlu0
        %v2321 = vpop.trf.xlu0
        %v2322 = vpop.trf.xlu0
        %v2323 = vpop.trf.xlu0
        %v2324 = vpop.trf.xlu0
        %v2325 = vpop.trf.xlu0
        %v2326 = vpop.trf.xlu0
        %v2327 = vpop.trf.xlu0
        %v2328 = vpop.trf.xlu0
        %v2329 = vpop.trf.xlu0
        %v2330 = vpop.trf.xlu0
        %v2331 = vpop.trf.xlu0
        %v2332 = vrot.slane %v2284, 4
        %v2333 = vsel %vm1276, %v2332, %v2220
        %v2334 = vrot.slane %v2220, 4
        %v2335 = vsel %vm1276, %v2284, %v2334
        %v2337 = vunpack.c.l.s4 1983009808
        %v2338 = vunpack.c.0.s8 %v2337
        %v2339 = vperm.slane %v2333, %v2338
        %v2341 = vunpack.c.l.s4 1983009808
        %v2342 = vunpack.c.0.s8 %v2341
        %v2343 = vperm.slane %v2335, %v2342
        %v2344 = vrot.slane %v2316, 4
        %v2345 = vsel %vm1276, %v2344, %v2252
        %v2346 = vrot.slane %v2252, 4
        %v2347 = vsel %vm1276, %v2316, %v2346
        %v2349 = vunpack.c.l.s4 1983009808
        %v2350 = vunpack.c.0.s8 %v2349
        %v2351 = vperm.slane %v2345, %v2350
        %v2353 = vunpack.c.l.s4 1983009808
        %v2354 = vunpack.c.0.s8 %v2353
        %v2355 = vperm.slane %v2347, %v2354
        %v2356 = vrot.slane %v2351, 4
        %v2357 = vsel %vm1276, %v2356, %v2339
        %v2358 = vrot.slane %v2339, 4
        %v2359 = vsel %vm1276, %v2351, %v2358
        %v2361 = vunpack.c.l.s4 1934713408
        %v2362 = vunpack.c.0.s8 %v2361
        %v2363 = vperm.slane %v2357, %v2362
        %v2365 = vunpack.c.l.s4 1934713408
        %v2366 = vunpack.c.0.s8 %v2365
        %v2367 = vperm.slane %v2359, %v2366
        %v2368 = vrot.slane %v2355, 4
        %v2369 = vsel %vm1276, %v2368, %v2343
        %v2370 = vrot.slane %v2343, 4
        %v2371 = vsel %vm1276, %v2355, %v2370
        %v2373 = vunpack.c.l.s4 1934713408
        %v2374 = vunpack.c.0.s8 %v2373
        %v2375 = vperm.slane %v2369, %v2374
        %v2377 = vunpack.c.l.s4 1934713408
        %v2378 = vunpack.c.0.s8 %v2377
        %v2379 = vperm.slane %v2371, %v2378
        %v2380 = vrot.slane %v2363, 4
        %v2381 = vsel %vm1276, 0.0, %v2380
        %v2382 = vrot.slane %v2367, 4
        %v2383 = vsel %vm1276, 0.0, %v2382
        %v2384 = vrot.slane %v2375, 4
        %v2385 = vsel %vm1276, 0.0, %v2384
        %v2386 = vrot.slane %v2379, 4
        %v2387 = vsel %vm1276, 0.0, %v2386
        %v2388 = vsel %vm1276, %v2382, %v2363
        %v2390 = vunpack.c.l.s4 1983009808
        %v2391 = vunpack.c.0.s8 %v2390
        %v2392 = vperm.slane %v2388, %v2391
        %v2393 = vrot.slane %v2383, 4
        %v2394 = vsel %vm1276, %v2393, %v2381
        %v2396 = vunpack.c.l.s4 1983009808
        %v2397 = vunpack.c.0.s8 %v2396
        %v2398 = vperm.slane %v2394, %v2397
        %v2399 = vsel %vm1276, %v2386, %v2375
        %v2401 = vunpack.c.l.s4 1983009808
        %v2402 = vunpack.c.0.s8 %v2401
        %v2403 = vperm.slane %v2399, %v2402
        %v2404 = vrot.slane %v2387, 4
        %v2405 = vsel %vm1276, %v2404, %v2385
        %v2407 = vunpack.c.l.s4 1983009808
        %v2408 = vunpack.c.0.s8 %v2407
        %v2409 = vperm.slane %v2405, %v2408
        %v2410 = vrot.slane %v2398, 4
        %v2411 = vsel %vm1276, %v2410, %v2392
        %v2412 = vrot.slane %v2392, 4
        %v2413 = vsel %vm1276, %v2398, %v2412
        %v2415 = vunpack.c.l.s4 1934713408
        %v2416 = vunpack.c.0.s8 %v2415
        %v2417 = vperm.slane %v2411, %v2416
        %v2419 = vunpack.c.l.s4 1934713408
        %v2420 = vunpack.c.0.s8 %v2419
        %v2421 = vperm.slane %v2413, %v2420
        %v2422 = vrot.slane %v2409, 4
        %v2423 = vsel %vm1276, %v2422, %v2403
        %v2424 = vrot.slane %v2403, 4
        %v2425 = vsel %vm1276, %v2409, %v2424
        %v2427 = vunpack.c.l.s4 1934713408
        %v2428 = vunpack.c.0.s8 %v2427
        %v2429 = vperm.slane %v2423, %v2428
        %v2431 = vunpack.c.l.s4 1934713408
        %v2432 = vunpack.c.0.s8 %v2431
        %v2433 = vperm.slane %v2425, %v2432
        %v2434 = vrot.slane %v2429, 4
        %v2435 = vsel %vm1276, %v2434, %v2417
        %v2436 = vrot.slane %v2417, 4
        %v2437 = vsel %vm1276, %v2429, %v2436
        %v2438 = vrot.slane %v2433, 4
        %v2439 = vsel %vm1276, %v2438, %v2421
        %v2440 = vrot.slane %v2421, 4
        %v2441 = vsel %vm1276, %v2433, %v2440
        %2443 = vrot.lane.b32.xlu0 %v2437, 8
        %v2444 = vpop.permute.xlu0 %2443
        %2447 = vrot.lane.b32.xlu0 %v2439, 16
        %v2448 = vpop.permute.xlu0 %2447
        %2451 = vrot.lane.b32.xlu0 %v2441, 24
        %v2452 = vpop.permute.xlu0 %2451
        %v2454 = vsel %vm730, %v2435, %v2444
        %v2455 = vsel %vm1399, %v2454, %v2448
        %v2456 = vsel %vm1401, %v2455, %v2452
        %v2457 = vperm.slane %v488, 5
        %v2459 = vsel %vm508, %v2456, 0
        %2461 = vmatpush.msra.mxu0 0.0
        %2462 = vmatpush.msra.mxu0 0.0
        %2463 = vmatpush.msra.mxu0 0.0
        %2464 = vmatpush.msra.mxu0 0.0
        %2465 = vmatpush.msra.mxu0 0.0
        %2466 = vmatpush.msra.mxu0 0.0
        %2467 = vmatpush.msra.mxu0 0.0
        %2468 = vmatpush.msra.mxu0 0.0
        %2469 = vmatpush.msra.mxu0 0.0
        %2470 = vmatpush.msra.mxu0 0.0
        %2471 = vmatpush.msra.mxu0 0.0
        %2472 = vmatpush.msra.mxu0 0.0
        %2473 = vmatpush.msra.mxu0 %v1565
        %2474 = vmatpush.msra.mxu0 %v1564
        %2475 = vmatpush.msra.mxu0 %v1563
        %2476 = vmatpush.msra.mxu0 %v1562
        %2477 = vmatmul.f32.gmra.mxu0 %v2459
        %v2478 = vpop.f32.mrf.mxu0
        %v2479 = vadd.f32 %v2457, %v2478
        %2480 = vdwg.mxu0
        %v2481 = vadd.f32 %v1549, %v2479
        %v2482 = vsel %vm508, %v2481, 0.0
        %2483 = vadd.xlane.f32.xlu0 %v2482
        %v2484 = vpop.xlane.xlu0 %2483
        %v2485 = vmul.f32 %v2484, %v1437
        %v2486 = vsub.f32 %v2481, %v2485
        %v2487 = vmul.f32 %v2486, %v2486
        %v2488 = vsel %vm508, %v2487, 0.0
        %2489 = vadd.xlane.f32.xlu0 %v2488
        %v2490 = vpop.xlane.xlu0 %2489
        %v2491 = vmul.f32 %v2490, %v1437
        %v2492 = vadd.f32 %v2491, 1e-05
        %v2493 = vrsqrt.pop %v2492
        %v2494 = vmul.f32 %v2493, %v2492
        %v2495 = vmul.f32 %v2494, %v2493
        %v2496 = vmul.f32 0.5, %v2495
        %v2497 = vsub.f32 1.5, %v2496
        %v2498 = vmul.f32 %v2493, %v2497
        %vm2499 = vweird.f32 %v2492
        %vm2500 = vweird.f32 %v2493
        %vm2501 = vmor %vm2499, %vm2500
        %v2502 = vsel %vm2501, %v2493, %v2498
        %v2503 = vmul.f32 %v2486, %v2502
        %v2504 = vperm.slane %v488, 6
        %v2505 = vmul.f32 %v2503, %v2504
        %v2506 = vperm.slane %v488, 7
        %v2507 = vadd.f32 %v2505, %v2506
        %v2508 = vld [vmem:[#allocation10] sm:$0xff]
        %v2509 = vld [vmem:[#allocation10 + $0x8] sm:$0xff]
        %v2510 = vld [vmem:[#allocation10 + $0x10] sm:$0xff]
        %v2511 = vld [vmem:[#allocation10 + $0x18] sm:$0xff]
        %v2512 = vperm.slane %v489, 0
        %v2514 = vsel %vm508, %v2507, 0
        %2516 = vmatpush.msra.mxu0 0.0
        %2517 = vmatpush.msra.mxu0 0.0
        %2518 = vmatpush.msra.mxu0 0.0
        %2519 = vmatpush.msra.mxu0 0.0
        %2520 = vmatpush.msra.mxu0 0.0
        %2521 = vmatpush.msra.mxu0 0.0
        %2522 = vmatpush.msra.mxu0 0.0
        %2523 = vmatpush.msra.mxu0 0.0
        %2524 = vmatpush.msra.mxu0 0.0
        %2525 = vmatpush.msra.mxu0 0.0
        %2526 = vmatpush.msra.mxu0 0.0
        %2527 = vmatpush.msra.mxu0 0.0
        %2528 = vmatpush.msra.mxu0 %v2511
        %2529 = vmatpush.msra.mxu0 %v2510
        %2530 = vmatpush.msra.mxu0 %v2509
        %2531 = vmatpush.msra.mxu0 %v2508
        %2532 = vmatmul.f32.gmra.mxu0 %v2514
        %v2533 = vpop.f32.mrf.mxu0
        %v2534 = vadd.f32 %v2512, %v2533
        %2535 = vdwg.mxu0
        %v2536 = vmax.f32 %v2534, 0.0
        %v2537 = vld [vmem:[%s9] sm:$0xff]
        %v2538 = vld [vmem:[%s9 + $0x8] sm:$0xff]
        %v2539 = vld [vmem:[%s9 + $0x10] sm:$0xff]
        %v2540 = vld [vmem:[%s9 + $0x18] sm:$0xff]
        %v2541 = vld [vmem:[%s9 + $0x20] sm:$0xff]
        %v2542 = vld [vmem:[%s9 + $0x28] sm:$0xff]
        %v2543 = vld [vmem:[%s9 + $0x30] sm:$0xff]
        %v2544 = vld [vmem:[%s9 + $0x38] sm:$0xff]
        %v2545 = vperm.slane %v489, 1
        %v2547 = vsel %vm1499, %v2536, 0
        %2549 = vmatpush.msra.mxu0 0.0
        %2550 = vmatpush.msra.mxu0 0.0
        %2551 = vmatpush.msra.mxu0 0.0
        %2552 = vmatpush.msra.mxu0 0.0
        %2553 = vmatpush.msra.mxu0 0.0
        %2554 = vmatpush.msra.mxu0 0.0
        %2555 = vmatpush.msra.mxu0 0.0
        %2556 = vmatpush.msra.mxu0 0.0
        %2557 = vmatpush.msra.mxu0 %v2544
        %2558 = vmatpush.msra.mxu0 %v2543
        %2559 = vmatpush.msra.mxu0 %v2542
        %2560 = vmatpush.msra.mxu0 %v2541
        %2561 = vmatpush.msra.mxu0 %v2540
        %2562 = vmatpush.msra.mxu0 %v2539
        %2563 = vmatpush.msra.mxu0 %v2538
        %2564 = vmatpush.msra.mxu0 %v2537
        %2565 = vmatmul.f32.gmra.mxu0 %v2547
        %v2566 = vpop.f32.mrf.mxu0
        %v2567 = vadd.f32 %v2545, %v2566
        %2568 = vdwg.mxu0
        %v2569 = vadd.f32 %v2507, %v2567
        %v2570 = vsel %vm508, %v2569, 0.0
        %2571 = vadd.xlane.f32.xlu0 %v2570
        %v2572 = vpop.xlane.xlu0 %2571
        %v2573 = vmul.f32 %v2572, %v1437
        %v2574 = vsub.f32 %v2569, %v2573
        %v2575 = vmul.f32 %v2574, %v2574
        %v2576 = vsel %vm508, %v2575, 0.0
        %2577 = vadd.xlane.f32.xlu0 %v2576
        %v2578 = vpop.xlane.xlu0 %2577
        %v2579 = vmul.f32 %v2578, %v1437
        %v2580 = vadd.f32 %v2579, 1e-05
        %v2581 = vrsqrt.pop %v2580
        %v2582 = vmul.f32 %v2581, %v2580
        %v2583 = vmul.f32 %v2582, %v2581
        %v2584 = vmul.f32 0.5, %v2583
        %v2585 = vsub.f32 1.5, %v2584
        %v2586 = vmul.f32 %v2581, %v2585
        %vm2587 = vweird.f32 %v2580
        %vm2588 = vweird.f32 %v2581
        %vm2589 = vmor %vm2587, %vm2588
        %v2590 = vsel %vm2589, %v2581, %v2586
        %v2591 = vmul.f32 %v2574, %v2590
        %v2592 = vperm.slane %v489, 2
        %v2593 = vmul.f32 %v2591, %v2592
        %v2594 = vperm.slane %v489, 3
        %v2595 = vadd.f32 %v2593, %v2594
        %v2596 = vld [vmem:[#allocation11] sm:$0xff]
        %v2597 = vld [vmem:[#allocation11 + $0x8] sm:$0xff]
        %v2598 = vld [vmem:[#allocation11 + $0x10] sm:$0xff]
        %v2599 = vld [vmem:[#allocation11 + $0x18] sm:$0xff]
        %v2600 = vperm.slane %v489, 4
        %v2602 = vsel %vm508, %v2595, 0
        %2604 = vmatpush.msra.mxu0 0.0
        %2605 = vmatpush.msra.mxu0 0.0
        %2606 = vmatpush.msra.mxu0 0.0
        %2607 = vmatpush.msra.mxu0 0.0
        %2608 = vmatpush.msra.mxu0 0.0
        %2609 = vmatpush.msra.mxu0 0.0
        %2610 = vmatpush.msra.mxu0 0.0
        %2611 = vmatpush.msra.mxu0 0.0
        %2612 = vmatpush.msra.mxu0 0.0
        %2613 = vmatpush.msra.mxu0 0.0
        %2614 = vmatpush.msra.mxu0 0.0
        %2615 = vmatpush.msra.mxu0 0.0
        %2616 = vmatpush.msra.mxu0 %v2599
        %2617 = vmatpush.msra.mxu0 %v2598
        %2618 = vmatpush.msra.mxu0 %v2597
        %2619 = vmatpush.msra.mxu0 %v2596
        %2620 = vmatmul.f32.gmra.mxu0 %v2602
        %v2621 = vpop.f32.mrf.mxu0
        %v2622 = vadd.f32 %v2600, %v2621
        %2623 = vdwg.mxu0
        %2624 = vst [vmem:[%s486] sm:$0xff] %v2622
        %s2625 = sand.u32 %s275, 1
        %s2626 = scalar_lea.sflag [#allocation4], %s2625
        %s2627 = sand.u32 %s275, 1
        %s2628 = smul.addr %s2627, 8
        %s2629 = scalar_lea.vmem [#allocation13], %s2628
        // Predicated region
        $region89: #{tpu_custom_call.1} parent=63 // pred_check
          %p2630 = pneg %p285
        $region90: #{tpu_custom_call.1} parent=63 // pred_check_branch
          %2632 = sbr.rel (%p2630) target = $region92
        $region91: #{tpu_custom_call.1} parent=63 // pred_region
          %2634 = vsyncadd %s2626, 0
          %s2635 = smul.addr %s31, 8
          %s2636 = scalar_lea.hbm %s11, %s2635
          %s2638 = sshll.u32 %s2629, 4
          %s2639 = int_to_ptr.vmem [resolvable:$true] %s2638
          %s2640 = sshll.u32 %s2636, 4
          %s2641 = int_to_ptr.hbm [resolvable:$true] %s2640
          %2643 = dma.vmem_to_hbm [thread:$0]  %s2639, 128, %s2641, %s2626
        $region92: #{tpu_custom_call.1} parent=63 // pred_fallthru
          _
      $region64: #{tpu_custom_call.1} parent=5 // pred_fallthru
        _
      %p2644 = scmp.le.s32.totalorder 2, %s26
      // Predicated region
      $region93: #{tpu_custom_call.1} parent=5 // pred_check
        %p2645 = pneg %p2644
      $region94: #{tpu_custom_call.1} parent=5 // pred_check_branch
        %2647 = sbr.rel (%p2645) target = $region96
      $region95: #{tpu_custom_call.1} parent=5 // pred_region
        %s2648 = ssub.s32 %s26, 2
        // Predicated region
        $region97: #{tpu_custom_call.1} parent=95 // pred_check
          %p2649 = pneg %p291
        $region98: #{tpu_custom_call.1} parent=95 // pred_check_branch
          %2651 = sbr.rel (%p2649) target = $region100
        $region99: #{tpu_custom_call.1} parent=95 // pred_region
          %s2652 = sand.u32 %s276, 1
          %s2653 = scalar_lea.sflag [#allocation4], %s2652
          %s2654 = sand.u32 %s276, 1
          %s2655 = smul.addr %s2654, 8
          %s2656 = scalar_lea.vmem [#allocation13], %s2655
          %2658 = dma.done %s2653, 128
        $region100: #{tpu_custom_call.1} parent=95 // pred_fallthru
          _
      $region96: #{tpu_custom_call.1} parent=5 // pred_fallthru
        _
    $region6: #{tpu_custom_call.1} parent=1 // loop_footer
      %s30 = sadd.s32 1, %s26
    $region7: #{tpu_custom_call.1} parent=1 // loop_footer_branch
      %25 = sbr.rel target = $region3
    $region8: #{tpu_custom_call.1} parent=1 // loop_exit
      _
    %2659 = vsyncpa [#allocation3], 1
    %s2660 = scalar_lea.sflag [#allocation3], 1
    %2661 = vsyncpa %s2660, 1
    %2662 = vsyncpa [#allocation6], 1
    %2663 = vsyncpa [#allocation9], 1
    %2664 = vsyncpa [#allocation12], 1
    %2665 = vsyncpa [#allocation4], 1
    %s2666 = scalar_lea.sflag [#allocation4], 1
    %2667 = vsyncpa %s2666, 1

</llo_original>
